<compile_context>
chip_gen: v7x
topology: tpu7x:2x2x1
jax: 0.10.0
libtpu: 0.0.40
codegen_flags: <defaults>
</compile_context>

<pallas_src>
import numpy as np

import jax
import jax.numpy as jnp
from jax.experimental import pallas as pl
from jax.experimental.pallas import tpu as pltpu


# (upsample scale, dilation) of the three dilated encoder branches (l2, l3, l4).
_BRANCHES = ((2, 14), (3, 28), (4, 42))


# ------------------------------ Pallas kernel --------------------------------

def _wt_x_bias_kernel(w_ref, x_ref, b_ref, o_ref):
    """out[0] = w @ x[0] + b   (channel-major conv-as-matmul, full K, one pass)."""
    acc = jnp.dot(w_ref[...], x_ref[0], preferred_element_type=jnp.float32)
    o_ref[0] = (acc + b_ref[...]).astype(o_ref.dtype)


def conv_channels_matmul(w, x, b):
    """Per-batch   out[n] = w @ x[n] + b[:, None].

    w : (N, K)     packed per-output-channel conv weights
    x : (B, K, P)  channel-major activations, P = flattened spatial (lane dim)
    b : (N,)       bias
    -> (B, N, P)

    N is padded to a multiple of 8 (sublane alignment); the lane dim is the
    spatial axis (784), so stores are dense.  K and P are full blocks: one batch
    element (<= 1024 x 784 f32 ~ 3.2 MB) fits VMEM with double buffering, so a
    single MXU pass needs no K-accumulator and no scratch.
    """
    N, K = w.shape
    B, K2, P = x.shape
    assert K == K2, (K, K2)
    n_pad = ((N + 7) // 8) * 8
    if n_pad != N:
        w = jnp.pad(w, ((0, n_pad - N), (0, 0)))
        b = jnp.pad(b, (0, n_pad - N))

    out = pl.pallas_call(
        _wt_x_bias_kernel,
        out_shape=jax.ShapeDtypeStruct((B, n_pad, P), x.dtype),
        grid_spec=pltpu.PrefetchScalarGridSpec(
            num_scalar_prefetch=0,
            grid=(B,),
            in_specs=[
                pl.BlockSpec((n_pad, K), lambda n: (0, 0)),
                pl.BlockSpec((1, K, P), lambda n: (n, 0, 0)),
                pl.BlockSpec((n_pad, 1), lambda n: (0, 0)),
            ],
            out_specs=pl.BlockSpec((1, n_pad, P), lambda n: (n, 0, 0)),
        ),
        compiler_params=pltpu.CompilerParams(
            dimension_semantics=("parallel",)),
    )(w, x, b.reshape(n_pad, 1))

    if n_pad != N:
        out = out[:, :N]
    return out


# -------------------------------- parameters ---------------------------------

def _uniform(key, shape, scale):
    return jax.random.uniform(key, shape, jnp.float32, -scale, scale)


def _init_conv(key, cin, cout, k):
    """PyTorch Conv2d default init; weights stored in PyTorch (Cout, Cin[, k, k])."""
    k1, k2 = jax.random.split(key)
    scale = 1.0 / ((cin * k * k) ** 0.5)
    if k == 1:
        w = _uniform(k1, (cout, cin), scale)
    else:
        w = _uniform(k1, (cout, cin, k, k), scale)
    b = _uniform(k2, (cout,), scale)
    return w, b


def init_deeplab_params(key, num_classes, feature_channels=1024):
    keys = jax.random.split(key, 7)
    C, F = num_classes, feature_channels
    p = {}
    # Encoder(feature_channels, num_classes)
    p['enc_l1_w'], p['enc_l1_b'] = _init_conv(keys[0], F, C, 1)
    p['enc_l2_w'], p['enc_l2_b'] = _init_conv(keys[1], F, C, 3)      # dilation 14
    p['enc_l3_w'], p['enc_l3_b'] = _init_conv(keys[2], F, C, 3)      # dilation 28
    p['enc_l4_w'], p['enc_l4_b'] = _init_conv(keys[3], F, C, 3)      # dilation 42
    p['enc_out_w'], p['enc_out_b'] = _init_conv(keys[4], 4 * C, C, 1)
    # Decoder(feature_channels, num_classes, num_classes)
    p['dec_l1_w'], p['dec_l1_b'] = _init_conv(keys[5], F, C, 1)
    p['dec_l2_w'], p['dec_l2_b'] = _init_conv(keys[6], 2 * C, C, 3)  # padding 1
    return p


def _pack_encoder_weights(p, num_classes, n_rows_padded):
    """Stack dec.l1, the enc.output-folded x1 path, and the 27 enc.output-folded
    dilated-branch taps into one (n_rows_padded, F) matrix + bias vector."""
    C = num_classes
    Wout = p['enc_out_w']                                      # (C, 4C)

    # constant part of `code` once every branch bias is folded through enc.output
    const_b = p['enc_out_b'] + Wout[:, 0:C] @ p['enc_l1_b']
    for t, name in enumerate(('enc_l2', 'enc_l3', 'enc_l4')):
        const_b = const_b + Wout[:, (t + 1) * C:(t + 2) * C] @ p[name + '_b']

    rows = [p['dec_l1_w'],                                     # chans [0,  C): dec.l1
            Wout[:, 0:C] @ p['enc_l1_w']]                      # chans [C, 2C): folded x1
    biases = [p['dec_l1_b'], const_b]
    for t, name in enumerate(('enc_l2', 'enc_l3', 'enc_l4')):
        Wb = p[name + '_w']                                    # (C, F, 3, 3)
        Wblk = Wout[:, (t + 1) * C:(t + 2) * C]                # (C, C)
        for kh in range(3):
            for kw in range(3):
                rows.append(Wblk @ Wb[:, :, kh, kw])           # (C, F) folded tap
                biases.append(jnp.zeros((C,), jnp.float32))

    Wp = jnp.concatenate(rows, axis=0)                         # (29C, F)
    bp = jnp.concatenate(biases, axis=0)
    pad = n_rows_padded - Wp.shape[0]
    assert pad >= 0
    return jnp.pad(Wp, ((0, pad), (0, 0))), jnp.pad(bp, (0, pad))


# ---------------------------------- forward -----------------------------------

def deeplab_forward(features_nchw, params):
    """features_nchw: (B, F, 28, 28) stride-8 backbone features (NCHW).
    Returns sigmoid logits (B, num_classes, 224, 224), NCHW."""
    p = params
    C = p['enc_l1_w'].shape[0]
    B, F, H, W = features_nchw.shape
    assert H == 28 and W == 28, "Encoder dilation geometry requires 28x28 features"
    P = H * W
    x = features_nchw.reshape(B, F, P)                         # channel-major, free reshape

    # ---- stage 1: one lane-dense Pallas matmul covers every F-channel conv ----
    n_rows = 29 * C                                            # dec.l1 + folded x1 + 27 taps
    n_pad = max(128, ((n_rows + 127) // 128) * 128)
    Wp, bp = _pack_encoder_weights(p, C, n_pad)
    y = conv_channels_matmul(Wp, x, bp).reshape(B, n_pad, H, W)

    low_level28 = y[:, 0:C]                                    # == dec.l1(features)

    # encoder `code`: folded x1 path + gathered per-tap dilated-branch projections.
    # Nearest-upsample by s followed by a no-pad dilated conv reads source pixel
    # (i + kh*d) // s, so the taps are 28-length constant-index gathers on C-wide maps.
    taps = [(s, d, kh, kw) for (s, d) in _BRANCHES
            for kh in range(3) for kw in range(3)]
    row_idx = np.asarray([[(i + kh * d) // s for i in range(H)]
                          for (s, d, kh, kw) in taps], dtype=np.int32)       # (27, H)
    col_idx = np.asarray([[(j + kw * d) // s for j in range(W)]
                          for (s, d, kh, kw) in taps], dtype=np.int32)       # (27, W)
    y_taps = y[:, 2 * C:2 * C + 27 * C].reshape(B, 27, C, H, W)
    g = jnp.take_along_axis(y_taps, row_idx[None, :, None, :, None], axis=3)
    g = jnp.take_along_axis(g, col_idx[None, :, None, None, :], axis=4)
    code = y[:, C:2 * C] + g.sum(axis=1)                       # == enc.output(cat(x1..x4))

    # ---- decoder: l2 (3x3, pad 1) on the x4-upsampled concat, done at 28x28 ----
    cat28 = jnp.concatenate([low_level28, code], axis=1)       # (B, 2C, 28, 28)
    W2 = jnp.concatenate([p['dec_l2_w'][:, :, kh, kw]
                          for kh in range(3) for kw in range(3)], axis=0)    # (9C, 2C)
    proj = conv_channels_matmul(W2, cat28.reshape(B, 2 * C, P),
                                jnp.zeros((9 * C,), jnp.float32))
    proj = proj.reshape(B, 9, C, H, W)
    proj = jnp.pad(proj, ((0, 0), (0, 0), (0, 0), (1, 1), (1, 1)))  # zero halo = conv pad 1

    Ho, Wo = 4 * H, 4 * W                                      # 112 x 112
    row2 = np.asarray([[(i + kh - 1) // 4 + 1 for i in range(Ho)]
                       for kh in range(3) for kw in range(3)], dtype=np.int32)  # (9, Ho)
    col2 = np.asarray([[(j + kw - 1) // 4 + 1 for j in range(Wo)]
                       for kh in range(3) for kw in range(3)], dtype=np.int32)  # (9, Wo)
    g = jnp.take_along_axis(proj, row2[None, :, None, :, None], axis=3)      # (B,9,C,112,30)
    g = jnp.take_along_axis(g, col2[None, :, None, None, :], axis=4)         # (B,9,C,112,112)
    out = p['dec_l2_b'][None, :, None, None] + g.sum(axis=1)   # (B, C, 112, 112)

    # sigmoid commutes with nearest upsample -> apply at 112x112, then x2 repeat.
    out = jax.nn.sigmoid(out)
    out = jnp.repeat(jnp.repeat(out, 2, axis=2), 2, axis=3)    # (B, C, 224, 224) NCHW
    return out


# ------------------------------------ main -------------------------------------

if __name__ == "__main__":
    key = jax.random.PRNGKey(0)
    k_feat, k_par = jax.random.split(key)

    num_classes = 4
    feature_channels = 1024            # fixed by the reference module (resnet50 stage-3)
    B, H, W = 1, 28, 28                # 28x28 forced by the encoder dilation geometry
                                       # (2H-28 == 3H-56 == 4H-84 == H)

    features = jax.random.normal(
        k_feat, (B, feature_channels, H, W), jnp.float32)
    params = init_deeplab_params(k_par, num_classes, feature_channels)

    fwd = jax.jit(deeplab_forward)
    out = fwd(features, params)
    jax.block_until_ready(out)

    assert out.shape == (B, num_classes, 8 * H, 8 * W), out.shape
    assert bool(jnp.all(jnp.isfinite(out))), "non-finite output"
    print("KERNEL_OK")
</pallas_src>

<mosaic_0001>
module attributes {stable_mosaic.version = 11 : i64} {
  func.func @_wt_x_bias_kernel(%arg0: i32, %arg1: memref<128x1024xf32, #tpu.memory_space<vmem>>, %arg2: memref<1x1024x784xf32, #tpu.memory_space<vmem>>, %arg3: memref<128x1xf32, #tpu.memory_space<vmem>>, %arg4: memref<1x128x784xf32, #tpu.memory_space<vmem>>) attributes {dimension_semantics = [#tpu.dimension_semantics<parallel>], iteration_bounds = array<i64: 1>, scalar_prefetch = 0 : i64, scratch_operands = 0 : i64, tpu.core_type = #tpu.core_type<tc>, window_params = [{pipeline_mode = #tpu.pipeline_mode<synchronous>, transform_indices = @transform_0, window_bounds = array<i64: 128, 1024>}, {transform_indices = @transform_1, window_bounds = array<i64: 1, 1024, 784>}, {pipeline_mode = #tpu.pipeline_mode<synchronous>, transform_indices = @transform_2, window_bounds = array<i64: 128, 1>}, {transform_indices = @transform_3, window_bounds = array<i64: 1, 128, 784>}]} {
    %c0 = arith.constant 0 : index
    %c0_0 = arith.constant 0 : index
    %0 = vector.load %arg1[%c0, %c0_0] : memref<128x1024xf32, #tpu.memory_space<vmem>>, vector<128x1024xf32>
    %c0_1 = arith.constant 0 : index
    %c0_2 = arith.constant 0 : index
    %c0_3 = arith.constant 0 : index
    %1 = vector.load %arg2[%c0_1, %c0_2, %c0_3] : memref<1x1024x784xf32, #tpu.memory_space<vmem>>, vector<1x1024x784xf32>
    %2 = vector.shape_cast %1 : vector<1x1024x784xf32> to vector<1024x784xf32>
    %cst = arith.constant dense<0.000000e+00> : vector<128x784xf32>
    %3 = tpu.matmul %0, %2, %cst {dimension_numbers = #tpu.dot_dimension_numbers<[1], [0], [0], [1], [0, 0, 1, 1], [], []>} : vector<128x1024xf32>, vector<1024x784xf32>, vector<128x784xf32> -> vector<128x784xf32>
    %c0_4 = arith.constant 0 : index
    %c0_5 = arith.constant 0 : index
    %4 = vector.load %arg3[%c0_4, %c0_5] : memref<128x1xf32, #tpu.memory_space<vmem>>, vector<128x1xf32>
    %5 = vector.broadcast %4 : vector<128x1xf32> to vector<128x784xf32>
    %6 = arith.addf %3, %5 : vector<128x784xf32>
    %c0_6 = arith.constant 0 : index
    %c0_7 = arith.constant 0 : index
    %c0_8 = arith.constant 0 : index
    %7 = vector.load %arg4[%c0_6, %c0_7, %c0_8] : memref<1x128x784xf32, #tpu.memory_space<vmem>>, vector<1x128x784xf32>
    %8 = vector.shape_cast %7 : vector<1x128x784xf32> to vector<128x784xf32>
    %9 = vector.shape_cast %6 : vector<128x784xf32> to vector<1x128x784xf32>
    tpu.vector_store %arg4[%c0_6, %c0_7, %c0_8], %9 {strides = array<i32>} : memref<1x128x784xf32, #tpu.memory_space<vmem>>, vector<1x128x784xf32>,
    return
  }
  func.func @transform_0(%arg0: i32) -> (i32, i32) {
    %c0_i32 = arith.constant 0 : i32
    %c0_i32_0 = arith.constant 0 : i32
    %c0_i32_1 = arith.constant 0 : i32
    return %c0_i32, %c0_i32_0 : i32, i32
  }
  func.func @transform_1(%arg0: i32) -> (i32, i32, i32) {
    %c0_i32 = arith.constant 0 : i32
    %c0_i32_0 = arith.constant 0 : i32
    %c0_i32_1 = arith.constant 0 : i32
    return %arg0, %c0_i32, %c0_i32_0 : i32, i32, i32
  }
  func.func @transform_2(%arg0: i32) -> (i32, i32) {
    %c0_i32 = arith.constant 0 : i32
    %c0_i32_0 = arith.constant 0 : i32
    %c0_i32_1 = arith.constant 0 : i32
    return %c0_i32, %c0_i32_0 : i32, i32
  }
  func.func @transform_3(%arg0: i32) -> (i32, i32, i32) {
    %c0_i32 = arith.constant 0 : i32
    %c0_i32_0 = arith.constant 0 : i32
    %c0_i32_1 = arith.constant 0 : i32
    return %arg0, %c0_i32, %c0_i32_0 : i32, i32, i32
  }
}

module attributes {stable_mosaic.version = 11 : i64} {
  func.func @_wt_x_bias_kernel(%arg0: i32, %arg1: memref<40x8xf32, #tpu.memory_space<vmem>>, %arg2: memref<1x8x784xf32, #tpu.memory_space<vmem>>, %arg3: memref<40x1xf32, #tpu.memory_space<vmem>>, %arg4: memref<1x40x784xf32, #tpu.memory_space<vmem>>) attributes {dimension_semantics = [#tpu.dimension_semantics<parallel>], iteration_bounds = array<i64: 1>, scalar_prefetch = 0 : i64, scratch_operands = 0 : i64, tpu.core_type = #tpu.core_type<tc>, window_params = [{pipeline_mode = #tpu.pipeline_mode<synchronous>, transform_indices = @transform_0, window_bounds = array<i64: 40, 8>}, {transform_indices = @transform_1, window_bounds = array<i64: 1, 8, 784>}, {pipeline_mode = #tpu.pipeline_mode<synchronous>, transform_indices = @transform_2, window_bounds = array<i64: 40, 1>}, {transform_indices = @transform_3, window_bounds = array<i64: 1, 40, 784>}]} {
    %c0 = arith.constant 0 : index
    %c0_0 = arith.constant 0 : index
    %0 = vector.load %arg1[%c0, %c0_0] : memref<40x8xf32, #tpu.memory_space<vmem>>, vector<40x8xf32>
    %c0_1 = arith.constant 0 : index
    %c0_2 = arith.constant 0 : index
    %c0_3 = arith.constant 0 : index
    %1 = vector.load %arg2[%c0_1, %c0_2, %c0_3] : memref<1x8x784xf32, #tpu.memory_space<vmem>>, vector<1x8x784xf32>
    %2 = vector.shape_cast %1 : vector<1x8x784xf32> to vector<8x784xf32>
    %cst = arith.constant dense<0.000000e+00> : vector<40x784xf32>
    %3 = tpu.matmul %0, %2, %cst {dimension_numbers = #tpu.dot_dimension_numbers<[1], [0], [0], [1], [0, 0, 1, 1], [], []>} : vector<40x8xf32>, vector<8x784xf32>, vector<40x784xf32> -> vector<40x784xf32>
    %c0_4 = arith.constant 0 : index
    %c0_5 = arith.constant 0 : index
    %4 = vector.load %arg3[%c0_4, %c0_5] : memref<40x1xf32, #tpu.memory_space<vmem>>, vector<40x1xf32>
    %5 = vector.broadcast %4 : vector<40x1xf32> to vector<40x784xf32>
    %6 = arith.addf %3, %5 : vector<40x784xf32>
    %c0_6 = arith.constant 0 : index
    %c0_7 = arith.constant 0 : index
    %c0_8 = arith.constant 0 : index
    %7 = vector.load %arg4[%c0_6, %c0_7, %c0_8] : memref<1x40x784xf32, #tpu.memory_space<vmem>>, vector<1x40x784xf32>
    %8 = vector.shape_cast %7 : vector<1x40x784xf32> to vector<40x784xf32>
    %9 = vector.shape_cast %6 : vector<40x784xf32> to vector<1x40x784xf32>
    tpu.vector_store %arg4[%c0_6, %c0_7, %c0_8], %9 {strides = array<i32>} : memref<1x40x784xf32, #tpu.memory_space<vmem>>, vector<1x40x784xf32>,
    return
  }
  func.func @transform_0(%arg0: i32) -> (i32, i32) {
    %c0_i32 = arith.constant 0 : i32
    %c0_i32_0 = arith.constant 0 : i32
    %c0_i32_1 = arith.constant 0 : i32
    return %c0_i32, %c0_i32_0 : i32, i32
  }
  func.func @transform_1(%arg0: i32) -> (i32, i32, i32) {
    %c0_i32 = arith.constant 0 : i32
    %c0_i32_0 = arith.constant 0 : i32
    %c0_i32_1 = arith.constant 0 : i32
    return %arg0, %c0_i32, %c0_i32_0 : i32, i32, i32
  }
  func.func @transform_2(%arg0: i32) -> (i32, i32) {
    %c0_i32 = arith.constant 0 : i32
    %c0_i32_0 = arith.constant 0 : i32
    %c0_i32_1 = arith.constant 0 : i32
    return %c0_i32, %c0_i32_0 : i32, i32
  }
  func.func @transform_3(%arg0: i32) -> (i32, i32, i32) {
    %c0_i32 = arith.constant 0 : i32
    %c0_i32_0 = arith.constant 0 : i32
    %c0_i32_1 = arith.constant 0 : i32
    return %arg0, %c0_i32, %c0_i32_0 : i32, i32, i32
  }
}

</mosaic_0001>

<llo_original>
// kernel: deeplab_forward.2
$region0: #{deeplab_forward.2}
  #allocation0 [shape = 'u32[]', space=smem, size = 0x4, offset = 0x4, fixed_abs, tag = 'smem constant byte address 0x4 - core index']
  #allocation1 [shape = 'u32[144,128]{1,0:T(1,128)}', space=vmem, size = 0x12000, scoped, tag = 'internal scratch']
  %s0 = inlined_call_operand.vmem [shape: f32[128,1024], index: 0, kind: input, shape index: {}]
  %s1 = inlined_call_operand.vmem [shape: f32[1,1024,784], index: 1, kind: input, shape index: {}]
  %s2 = inlined_call_operand.vmem [shape: f32[128,1], index: 2, kind: input, shape index: {}]
  %s3 = inlined_call_operand.vmem [shape: f32[1,128,784], index: 3, kind: output, shape index: {}]
  %s4 = sld [smem:[#allocation0]]
  $region22: #{deeplab_forward.2} parent=0
    _
  %s6 = ssub.s32 1, %s4
  %s7 = scalar_select 0, %s6, %s4
  // Predicated region
  $region2: #{deeplab_forward.2} parent=0 // pred_check
    _
  $region3: #{deeplab_forward.2} parent=0 // pred_check_branch
    %9 = sbr.rel (0) target = $region5
  $region4: #{deeplab_forward.2} parent=0 // pred_region
    _
  $region5: #{deeplab_forward.2} parent=0 // pred_fallthru
    _
  // Predicated region
  $region6: #{deeplab_forward.2} parent=0 // pred_check
    _
  $region7: #{deeplab_forward.2} parent=0 // pred_check_branch
    %11 = sbr.rel (0) target = $region9
  $region8: #{deeplab_forward.2} parent=0 // pred_region
    _
  $region9: #{deeplab_forward.2} parent=0 // pred_fallthru
    _
  // Predicated region
  $region10: #{deeplab_forward.2} parent=0 // pred_check
    _
  $region11: #{deeplab_forward.2} parent=0 // pred_check_branch
    %13 = sbr.rel (0) target = $region13
  $region12: #{deeplab_forward.2} parent=0 // pred_region
    _
  $region13: #{deeplab_forward.2} parent=0 // pred_fallthru
    _
  %v14 = vld [vmem:[%s0] sm:$0xff]
  %v15 = vld [vmem:[%s0 + $0x8] sm:$0xff]
  %v16 = vld [vmem:[%s0 + $0x10] sm:$0xff]
  %v17 = vld [vmem:[%s0 + $0x18] sm:$0xff]
  %v18 = vld [vmem:[%s0 + $0x20] sm:$0xff]
  %v19 = vld [vmem:[%s0 + $0x28] sm:$0xff]
  %v20 = vld [vmem:[%s0 + $0x30] sm:$0xff]
  %v21 = vld [vmem:[%s0 + $0x38] sm:$0xff]
  %v22 = vld [vmem:[%s0 + $0x40] sm:$0xff]
  %v23 = vld [vmem:[%s0 + $0x48] sm:$0xff]
  %v24 = vld [vmem:[%s0 + $0x50] sm:$0xff]
  %v25 = vld [vmem:[%s0 + $0x58] sm:$0xff]
  %v26 = vld [vmem:[%s0 + $0x60] sm:$0xff]
  %v27 = vld [vmem:[%s0 + $0x68] sm:$0xff]
  %v28 = vld [vmem:[%s0 + $0x70] sm:$0xff]
  %v29 = vld [vmem:[%s0 + $0x78] sm:$0xff]
  %v30 = vld [vmem:[%s0 + $0x80] sm:$0xff]
  %v31 = vld [vmem:[%s0 + $0x88] sm:$0xff]
  %v32 = vld [vmem:[%s0 + $0x90] sm:$0xff]
  %v33 = vld [vmem:[%s0 + $0x98] sm:$0xff]
  %v34 = vld [vmem:[%s0 + $0xa0] sm:$0xff]
  %v35 = vld [vmem:[%s0 + $0xa8] sm:$0xff]
  %v36 = vld [vmem:[%s0 + $0xb0] sm:$0xff]
  %v37 = vld [vmem:[%s0 + $0xb8] sm:$0xff]
  %v38 = vld [vmem:[%s0 + $0xc0] sm:$0xff]
  %v39 = vld [vmem:[%s0 + $0xc8] sm:$0xff]
  %v40 = vld [vmem:[%s0 + $0xd0] sm:$0xff]
  %v41 = vld [vmem:[%s0 + $0xd8] sm:$0xff]
  %v42 = vld [vmem:[%s0 + $0xe0] sm:$0xff]
  %v43 = vld [vmem:[%s0 + $0xe8] sm:$0xff]
  %v44 = vld [vmem:[%s0 + $0xf0] sm:$0xff]
  %v45 = vld [vmem:[%s0 + $0xf8] sm:$0xff]
  %v46 = vld [vmem:[%s0 + $0x100] sm:$0xff]
  %v47 = vld [vmem:[%s0 + $0x108] sm:$0xff]
  %v48 = vld [vmem:[%s0 + $0x110] sm:$0xff]
  %v49 = vld [vmem:[%s0 + $0x118] sm:$0xff]
  %v50 = vld [vmem:[%s0 + $0x120] sm:$0xff]
  %v51 = vld [vmem:[%s0 + $0x128] sm:$0xff]
  %v52 = vld [vmem:[%s0 + $0x130] sm:$0xff]
  %v53 = vld [vmem:[%s0 + $0x138] sm:$0xff]
  %v54 = vld [vmem:[%s0 + $0x140] sm:$0xff]
  %v55 = vld [vmem:[%s0 + $0x148] sm:$0xff]
  %v56 = vld [vmem:[%s0 + $0x150] sm:$0xff]
  %v57 = vld [vmem:[%s0 + $0x158] sm:$0xff]
  %v58 = vld [vmem:[%s0 + $0x160] sm:$0xff]
  %v59 = vld [vmem:[%s0 + $0x168] sm:$0xff]
  %v60 = vld [vmem:[%s0 + $0x170] sm:$0xff]
  %v61 = vld [vmem:[%s0 + $0x178] sm:$0xff]
  %v62 = vld [vmem:[%s0 + $0x180] sm:$0xff]
  %v63 = vld [vmem:[%s0 + $0x188] sm:$0xff]
  %v64 = vld [vmem:[%s0 + $0x190] sm:$0xff]
  %v65 = vld [vmem:[%s0 + $0x198] sm:$0xff]
  %v66 = vld [vmem:[%s0 + $0x1a0] sm:$0xff]
  %v67 = vld [vmem:[%s0 + $0x1a8] sm:$0xff]
  %v68 = vld [vmem:[%s0 + $0x1b0] sm:$0xff]
  %v69 = vld [vmem:[%s0 + $0x1b8] sm:$0xff]
  %v70 = vld [vmem:[%s0 + $0x1c0] sm:$0xff]
  %v71 = vld [vmem:[%s0 + $0x1c8] sm:$0xff]
  %v72 = vld [vmem:[%s0 + $0x1d0] sm:$0xff]
  %v73 = vld [vmem:[%s0 + $0x1d8] sm:$0xff]
  %v74 = vld [vmem:[%s0 + $0x1e0] sm:$0xff]
  %v75 = vld [vmem:[%s0 + $0x1e8] sm:$0xff]
  %v76 = vld [vmem:[%s0 + $0x1f0] sm:$0xff]
  %v77 = vld [vmem:[%s0 + $0x1f8] sm:$0xff]
  %v78 = vld [vmem:[%s0 + $0x200] sm:$0xff]
  %v79 = vld [vmem:[%s0 + $0x208] sm:$0xff]
  %v80 = vld [vmem:[%s0 + $0x210] sm:$0xff]
  %v81 = vld [vmem:[%s0 + $0x218] sm:$0xff]
  %v82 = vld [vmem:[%s0 + $0x220] sm:$0xff]
  %v83 = vld [vmem:[%s0 + $0x228] sm:$0xff]
  %v84 = vld [vmem:[%s0 + $0x230] sm:$0xff]
  %v85 = vld [vmem:[%s0 + $0x238] sm:$0xff]
  %v86 = vld [vmem:[%s0 + $0x240] sm:$0xff]
  %v87 = vld [vmem:[%s0 + $0x248] sm:$0xff]
  %v88 = vld [vmem:[%s0 + $0x250] sm:$0xff]
  %v89 = vld [vmem:[%s0 + $0x258] sm:$0xff]
  %v90 = vld [vmem:[%s0 + $0x260] sm:$0xff]
  %v91 = vld [vmem:[%s0 + $0x268] sm:$0xff]
  %v92 = vld [vmem:[%s0 + $0x270] sm:$0xff]
  %v93 = vld [vmem:[%s0 + $0x278] sm:$0xff]
  %v94 = vld [vmem:[%s0 + $0x280] sm:$0xff]
  %v95 = vld [vmem:[%s0 + $0x288] sm:$0xff]
  %v96 = vld [vmem:[%s0 + $0x290] sm:$0xff]
  %v97 = vld [vmem:[%s0 + $0x298] sm:$0xff]
  %v98 = vld [vmem:[%s0 + $0x2a0] sm:$0xff]
  %v99 = vld [vmem:[%s0 + $0x2a8] sm:$0xff]
  %v100 = vld [vmem:[%s0 + $0x2b0] sm:$0xff]
  %v101 = vld [vmem:[%s0 + $0x2b8] sm:$0xff]
  %v102 = vld [vmem:[%s0 + $0x2c0] sm:$0xff]
  %v103 = vld [vmem:[%s0 + $0x2c8] sm:$0xff]
  %v104 = vld [vmem:[%s0 + $0x2d0] sm:$0xff]
  %v105 = vld [vmem:[%s0 + $0x2d8] sm:$0xff]
  %v106 = vld [vmem:[%s0 + $0x2e0] sm:$0xff]
  %v107 = vld [vmem:[%s0 + $0x2e8] sm:$0xff]
  %v108 = vld [vmem:[%s0 + $0x2f0] sm:$0xff]
  %v109 = vld [vmem:[%s0 + $0x2f8] sm:$0xff]
  %v110 = vld [vmem:[%s0 + $0x300] sm:$0xff]
  %v111 = vld [vmem:[%s0 + $0x308] sm:$0xff]
  %v112 = vld [vmem:[%s0 + $0x310] sm:$0xff]
  %v113 = vld [vmem:[%s0 + $0x318] sm:$0xff]
  %v114 = vld [vmem:[%s0 + $0x320] sm:$0xff]
  %v115 = vld [vmem:[%s0 + $0x328] sm:$0xff]
  %v116 = vld [vmem:[%s0 + $0x330] sm:$0xff]
  %v117 = vld [vmem:[%s0 + $0x338] sm:$0xff]
  %v118 = vld [vmem:[%s0 + $0x340] sm:$0xff]
  %v119 = vld [vmem:[%s0 + $0x348] sm:$0xff]
  %v120 = vld [vmem:[%s0 + $0x350] sm:$0xff]
  %v121 = vld [vmem:[%s0 + $0x358] sm:$0xff]
  %v122 = vld [vmem:[%s0 + $0x360] sm:$0xff]
  %v123 = vld [vmem:[%s0 + $0x368] sm:$0xff]
  %v124 = vld [vmem:[%s0 + $0x370] sm:$0xff]
  %v125 = vld [vmem:[%s0 + $0x378] sm:$0xff]
  %v126 = vld [vmem:[%s0 + $0x380] sm:$0xff]
  %v127 = vld [vmem:[%s0 + $0x388] sm:$0xff]
  %v128 = vld [vmem:[%s0 + $0x390] sm:$0xff]
  %v129 = vld [vmem:[%s0 + $0x398] sm:$0xff]
  %v130 = vld [vmem:[%s0 + $0x3a0] sm:$0xff]
  %v131 = vld [vmem:[%s0 + $0x3a8] sm:$0xff]
  %v132 = vld [vmem:[%s0 + $0x3b0] sm:$0xff]
  %v133 = vld [vmem:[%s0 + $0x3b8] sm:$0xff]
  %v134 = vld [vmem:[%s0 + $0x3c0] sm:$0xff]
  %v135 = vld [vmem:[%s0 + $0x3c8] sm:$0xff]
  %v136 = vld [vmem:[%s0 + $0x3d0] sm:$0xff]
  %v137 = vld [vmem:[%s0 + $0x3d8] sm:$0xff]
  %v138 = vld [vmem:[%s0 + $0x3e0] sm:$0xff]
  %v139 = vld [vmem:[%s0 + $0x3e8] sm:$0xff]
  %v140 = vld [vmem:[%s0 + $0x3f0] sm:$0xff]
  %v141 = vld [vmem:[%s0 + $0x3f8] sm:$0xff]
  %v142 = vld [vmem:[%s1] sm:$0xff]
  %v143 = vld [vmem:[%s1 + $0x8] sm:$0xff]
  %v144 = vld [vmem:[%s1 + $0x10] sm:$0xff]
  %v145 = vld [vmem:[%s1 + $0x18] sm:$0xff]
  %v146 = vld [vmem:[%s1 + $0x20] sm:$0xff]
  %v147 = vld [vmem:[%s1 + $0x28] sm:$0xff]
  %v148 = vld [vmem:[%s1 + $0x30] sm:$0xff]
  %v149 = vld [vmem:[%s1 + $0x38] sm:$0xff]
  %v150 = vld [vmem:[%s1 + $0x40] sm:$0xff]
  %v151 = vld [vmem:[%s1 + $0x48] sm:$0xff]
  %v152 = vld [vmem:[%s1 + $0x50] sm:$0xff]
  %v153 = vld [vmem:[%s1 + $0x58] sm:$0xff]
  %v154 = vld [vmem:[%s1 + $0x60] sm:$0xff]
  %v155 = vld [vmem:[%s1 + $0x68] sm:$0xff]
  %v156 = vld [vmem:[%s1 + $0x70] sm:$0xff]
  %v157 = vld [vmem:[%s1 + $0x78] sm:$0xff]
  %v158 = vld [vmem:[%s1 + $0x80] sm:$0xff]
  %v159 = vld [vmem:[%s1 + $0x88] sm:$0xff]
  %v160 = vld [vmem:[%s1 + $0x90] sm:$0xff]
  %v161 = vld [vmem:[%s1 + $0x98] sm:$0xff]
  %v162 = vld [vmem:[%s1 + $0xa0] sm:$0xff]
  %v163 = vld [vmem:[%s1 + $0xa8] sm:$0xff]
  %v164 = vld [vmem:[%s1 + $0xb0] sm:$0xff]
  %v165 = vld [vmem:[%s1 + $0xb8] sm:$0xff]
  %v166 = vld [vmem:[%s1 + $0xc0] sm:$0xff]
  %v167 = vld [vmem:[%s1 + $0xc8] sm:$0xff]
  %v168 = vld [vmem:[%s1 + $0xd0] sm:$0xff]
  %v169 = vld [vmem:[%s1 + $0xd8] sm:$0xff]
  %v170 = vld [vmem:[%s1 + $0xe0] sm:$0xff]
  %v171 = vld [vmem:[%s1 + $0xe8] sm:$0xff]
  %v172 = vld [vmem:[%s1 + $0xf0] sm:$0xff]
  %v173 = vld [vmem:[%s1 + $0xf8] sm:$0xff]
  %v174 = vld [vmem:[%s1 + $0x100] sm:$0xff]
  %v175 = vld [vmem:[%s1 + $0x108] sm:$0xff]
  %v176 = vld [vmem:[%s1 + $0x110] sm:$0xff]
  %v177 = vld [vmem:[%s1 + $0x118] sm:$0xff]
  %v178 = vld [vmem:[%s1 + $0x120] sm:$0xff]
  %v179 = vld [vmem:[%s1 + $0x128] sm:$0xff]
  %v180 = vld [vmem:[%s1 + $0x130] sm:$0xff]
  %v181 = vld [vmem:[%s1 + $0x138] sm:$0xff]
  %v182 = vld [vmem:[%s1 + $0x140] sm:$0xff]
  %v183 = vld [vmem:[%s1 + $0x148] sm:$0xff]
  %v184 = vld [vmem:[%s1 + $0x150] sm:$0xff]
  %v185 = vld [vmem:[%s1 + $0x158] sm:$0xff]
  %v186 = vld [vmem:[%s1 + $0x160] sm:$0xff]
  %v187 = vld [vmem:[%s1 + $0x168] sm:$0xff]
  %v188 = vld [vmem:[%s1 + $0x170] sm:$0xff]
  %v189 = vld [vmem:[%s1 + $0x178] sm:$0xff]
  %v190 = vld [vmem:[%s1 + $0x180] sm:$0xff]
  %v191 = vld [vmem:[%s1 + $0x188] sm:$0xff]
  %v192 = vld [vmem:[%s1 + $0x190] sm:$0xff]
  %v193 = vld [vmem:[%s1 + $0x198] sm:$0xff]
  %v194 = vld [vmem:[%s1 + $0x1a0] sm:$0xff]
  %v195 = vld [vmem:[%s1 + $0x1a8] sm:$0xff]
  %v196 = vld [vmem:[%s1 + $0x1b0] sm:$0xff]
  %v197 = vld [vmem:[%s1 + $0x1b8] sm:$0xff]
  %v198 = vld [vmem:[%s1 + $0x1c0] sm:$0xff]
  %v199 = vld [vmem:[%s1 + $0x1c8] sm:$0xff]
  %v200 = vld [vmem:[%s1 + $0x1d0] sm:$0xff]
  %v201 = vld [vmem:[%s1 + $0x1d8] sm:$0xff]
  %v202 = vld [vmem:[%s1 + $0x1e0] sm:$0xff]
  %v203 = vld [vmem:[%s1 + $0x1e8] sm:$0xff]
  %v204 = vld [vmem:[%s1 + $0x1f0] sm:$0xff]
  %v205 = vld [vmem:[%s1 + $0x1f8] sm:$0xff]
  %v206 = vld [vmem:[%s1 + $0x200] sm:$0xff]
  %v207 = vld [vmem:[%s1 + $0x208] sm:$0xff]
  %v208 = vld [vmem:[%s1 + $0x210] sm:$0xff]
  %v209 = vld [vmem:[%s1 + $0x218] sm:$0xff]
  %v210 = vld [vmem:[%s1 + $0x220] sm:$0xff]
  %v211 = vld [vmem:[%s1 + $0x228] sm:$0xff]
  %v212 = vld [vmem:[%s1 + $0x230] sm:$0xff]
  %v213 = vld [vmem:[%s1 + $0x238] sm:$0xff]
  %v214 = vld [vmem:[%s1 + $0x240] sm:$0xff]
  %v215 = vld [vmem:[%s1 + $0x248] sm:$0xff]
  %v216 = vld [vmem:[%s1 + $0x250] sm:$0xff]
  %v217 = vld [vmem:[%s1 + $0x258] sm:$0xff]
  %v218 = vld [vmem:[%s1 + $0x260] sm:$0xff]
  %v219 = vld [vmem:[%s1 + $0x268] sm:$0xff]
  %v220 = vld [vmem:[%s1 + $0x270] sm:$0xff]
  %v221 = vld [vmem:[%s1 + $0x278] sm:$0xff]
  %v222 = vld [vmem:[%s1 + $0x280] sm:$0xff]
  %v223 = vld [vmem:[%s1 + $0x288] sm:$0xff]
  %v224 = vld [vmem:[%s1 + $0x290] sm:$0xff]
  %v225 = vld [vmem:[%s1 + $0x298] sm:$0xff]
  %v226 = vld [vmem:[%s1 + $0x2a0] sm:$0xff]
  %v227 = vld [vmem:[%s1 + $0x2a8] sm:$0xff]
  %v228 = vld [vmem:[%s1 + $0x2b0] sm:$0xff]
  %v229 = vld [vmem:[%s1 + $0x2b8] sm:$0xff]
  %v230 = vld [vmem:[%s1 + $0x2c0] sm:$0xff]
  %v231 = vld [vmem:[%s1 + $0x2c8] sm:$0xff]
  %v232 = vld [vmem:[%s1 + $0x2d0] sm:$0xff]
  %v233 = vld [vmem:[%s1 + $0x2d8] sm:$0xff]
  %v234 = vld [vmem:[%s1 + $0x2e0] sm:$0xff]
  %v235 = vld [vmem:[%s1 + $0x2e8] sm:$0xff]
  %v236 = vld [vmem:[%s1 + $0x2f0] sm:$0xff]
  %v237 = vld [vmem:[%s1 + $0x2f8] sm:$0xff]
  %v238 = vld [vmem:[%s1 + $0x300] sm:$0xff]
  %v239 = vld [vmem:[%s1 + $0x308] sm:$0xff]
  %v240 = vld [vmem:[%s1 + $0x310] sm:$0xff]
  %v241 = vld [vmem:[%s1 + $0x318] sm:$0xff]
  %v242 = vld [vmem:[%s1 + $0x320] sm:$0xff]
  %v243 = vld [vmem:[%s1 + $0x328] sm:$0xff]
  %v244 = vld [vmem:[%s1 + $0x330] sm:$0xff]
  %v245 = vld [vmem:[%s1 + $0x338] sm:$0xff]
  %v246 = vld [vmem:[%s1 + $0x340] sm:$0xff]
  %v247 = vld [vmem:[%s1 + $0x348] sm:$0xff]
  %v248 = vld [vmem:[%s1 + $0x350] sm:$0xff]
  %v249 = vld [vmem:[%s1 + $0x358] sm:$0xff]
  %v250 = vld [vmem:[%s1 + $0x360] sm:$0xff]
  %v251 = vld [vmem:[%s1 + $0x368] sm:$0xff]
  %v252 = vld [vmem:[%s1 + $0x370] sm:$0xff]
  %v253 = vld [vmem:[%s1 + $0x378] sm:$0xff]
  %v254 = vld [vmem:[%s1 + $0x380] sm:$0xff]
  %v255 = vld [vmem:[%s1 + $0x388] sm:$0xff]
  %v256 = vld [vmem:[%s1 + $0x390] sm:$0xff]
  %v257 = vld [vmem:[%s1 + $0x398] sm:$0xff]
  %v258 = vld [vmem:[%s1 + $0x3a0] sm:$0xff]
  %v259 = vld [vmem:[%s1 + $0x3a8] sm:$0xff]
  %v260 = vld [vmem:[%s1 + $0x3b0] sm:$0xff]
  %v261 = vld [vmem:[%s1 + $0x3b8] sm:$0xff]
  %v262 = vld [vmem:[%s1 + $0x3c0] sm:$0xff]
  %v263 = vld [vmem:[%s1 + $0x3c8] sm:$0xff]
  %v264 = vld [vmem:[%s1 + $0x3d0] sm:$0xff]
  %v265 = vld [vmem:[%s1 + $0x3d8] sm:$0xff]
  %v266 = vld [vmem:[%s1 + $0x3e0] sm:$0xff]
  %v267 = vld [vmem:[%s1 + $0x3e8] sm:$0xff]
  %v268 = vld [vmem:[%s1 + $0x3f0] sm:$0xff]
  %v269 = vld [vmem:[%s1 + $0x3f8] sm:$0xff]
  %v270 = vld [vmem:[%s1 + $0x400] sm:$0xff]
  %v271 = vld [vmem:[%s1 + $0x408] sm:$0xff]
  %v272 = vld [vmem:[%s1 + $0x410] sm:$0xff]
  %v273 = vld [vmem:[%s1 + $0x418] sm:$0xff]
  %v274 = vld [vmem:[%s1 + $0x420] sm:$0xff]
  %v275 = vld [vmem:[%s1 + $0x428] sm:$0xff]
  %v276 = vld [vmem:[%s1 + $0x430] sm:$0xff]
  %v277 = vld [vmem:[%s1 + $0x438] sm:$0xff]
  %v278 = vld [vmem:[%s1 + $0x440] sm:$0xff]
  %v279 = vld [vmem:[%s1 + $0x448] sm:$0xff]
  %v280 = vld [vmem:[%s1 + $0x450] sm:$0xff]
  %v281 = vld [vmem:[%s1 + $0x458] sm:$0xff]
  %v282 = vld [vmem:[%s1 + $0x460] sm:$0xff]
  %v283 = vld [vmem:[%s1 + $0x468] sm:$0xff]
  %v284 = vld [vmem:[%s1 + $0x470] sm:$0xff]
  %v285 = vld [vmem:[%s1 + $0x478] sm:$0xff]
  %v286 = vld [vmem:[%s1 + $0x480] sm:$0xff]
  %v287 = vld [vmem:[%s1 + $0x488] sm:$0xff]
  %v288 = vld [vmem:[%s1 + $0x490] sm:$0xff]
  %v289 = vld [vmem:[%s1 + $0x498] sm:$0xff]
  %v290 = vld [vmem:[%s1 + $0x4a0] sm:$0xff]
  %v291 = vld [vmem:[%s1 + $0x4a8] sm:$0xff]
  %v292 = vld [vmem:[%s1 + $0x4b0] sm:$0xff]
  %v293 = vld [vmem:[%s1 + $0x4b8] sm:$0xff]
  %v294 = vld [vmem:[%s1 + $0x4c0] sm:$0xff]
  %v295 = vld [vmem:[%s1 + $0x4c8] sm:$0xff]
  %v296 = vld [vmem:[%s1 + $0x4d0] sm:$0xff]
  %v297 = vld [vmem:[%s1 + $0x4d8] sm:$0xff]
  %v298 = vld [vmem:[%s1 + $0x4e0] sm:$0xff]
  %v299 = vld [vmem:[%s1 + $0x4e8] sm:$0xff]
  %v300 = vld [vmem:[%s1 + $0x4f0] sm:$0xff]
  %v301 = vld [vmem:[%s1 + $0x4f8] sm:$0xff]
  %v302 = vld [vmem:[%s1 + $0x500] sm:$0xff]
  %v303 = vld [vmem:[%s1 + $0x508] sm:$0xff]
  %v304 = vld [vmem:[%s1 + $0x510] sm:$0xff]
  %v305 = vld [vmem:[%s1 + $0x518] sm:$0xff]
  %v306 = vld [vmem:[%s1 + $0x520] sm:$0xff]
  %v307 = vld [vmem:[%s1 + $0x528] sm:$0xff]
  %v308 = vld [vmem:[%s1 + $0x530] sm:$0xff]
  %v309 = vld [vmem:[%s1 + $0x538] sm:$0xff]
  %v310 = vld [vmem:[%s1 + $0x540] sm:$0xff]
  %v311 = vld [vmem:[%s1 + $0x548] sm:$0xff]
  %v312 = vld [vmem:[%s1 + $0x550] sm:$0xff]
  %v313 = vld [vmem:[%s1 + $0x558] sm:$0xff]
  %v314 = vld [vmem:[%s1 + $0x560] sm:$0xff]
  %v315 = vld [vmem:[%s1 + $0x568] sm:$0xff]
  %v316 = vld [vmem:[%s1 + $0x570] sm:$0xff]
  %v317 = vld [vmem:[%s1 + $0x578] sm:$0xff]
  %v318 = vld [vmem:[%s1 + $0x580] sm:$0xff]
  %v319 = vld [vmem:[%s1 + $0x588] sm:$0xff]
  %v320 = vld [vmem:[%s1 + $0x590] sm:$0xff]
  %v321 = vld [vmem:[%s1 + $0x598] sm:$0xff]
  %v322 = vld [vmem:[%s1 + $0x5a0] sm:$0xff]
  %v323 = vld [vmem:[%s1 + $0x5a8] sm:$0xff]
  %v324 = vld [vmem:[%s1 + $0x5b0] sm:$0xff]
  %v325 = vld [vmem:[%s1 + $0x5b8] sm:$0xff]
  %v326 = vld [vmem:[%s1 + $0x5c0] sm:$0xff]
  %v327 = vld [vmem:[%s1 + $0x5c8] sm:$0xff]
  %v328 = vld [vmem:[%s1 + $0x5d0] sm:$0xff]
  %v329 = vld [vmem:[%s1 + $0x5d8] sm:$0xff]
  %v330 = vld [vmem:[%s1 + $0x5e0] sm:$0xff]
  %v331 = vld [vmem:[%s1 + $0x5e8] sm:$0xff]
  %v332 = vld [vmem:[%s1 + $0x5f0] sm:$0xff]
  %v333 = vld [vmem:[%s1 + $0x5f8] sm:$0xff]
  %v334 = vld [vmem:[%s1 + $0x600] sm:$0xff]
  %v335 = vld [vmem:[%s1 + $0x608] sm:$0xff]
  %v336 = vld [vmem:[%s1 + $0x610] sm:$0xff]
  %v337 = vld [vmem:[%s1 + $0x618] sm:$0xff]
  %v338 = vld [vmem:[%s1 + $0x620] sm:$0xff]
  %v339 = vld [vmem:[%s1 + $0x628] sm:$0xff]
  %v340 = vld [vmem:[%s1 + $0x630] sm:$0xff]
  %v341 = vld [vmem:[%s1 + $0x638] sm:$0xff]
  %v342 = vld [vmem:[%s1 + $0x640] sm:$0xff]
  %v343 = vld [vmem:[%s1 + $0x648] sm:$0xff]
  %v344 = vld [vmem:[%s1 + $0x650] sm:$0xff]
  %v345 = vld [vmem:[%s1 + $0x658] sm:$0xff]
  %v346 = vld [vmem:[%s1 + $0x660] sm:$0xff]
  %v347 = vld [vmem:[%s1 + $0x668] sm:$0xff]
  %v348 = vld [vmem:[%s1 + $0x670] sm:$0xff]
  %v349 = vld [vmem:[%s1 + $0x678] sm:$0xff]
  %v350 = vld [vmem:[%s1 + $0x680] sm:$0xff]
  %v351 = vld [vmem:[%s1 + $0x688] sm:$0xff]
  %v352 = vld [vmem:[%s1 + $0x690] sm:$0xff]
  %v353 = vld [vmem:[%s1 + $0x698] sm:$0xff]
  %v354 = vld [vmem:[%s1 + $0x6a0] sm:$0xff]
  %v355 = vld [vmem:[%s1 + $0x6a8] sm:$0xff]
  %v356 = vld [vmem:[%s1 + $0x6b0] sm:$0xff]
  %v357 = vld [vmem:[%s1 + $0x6b8] sm:$0xff]
  %v358 = vld [vmem:[%s1 + $0x6c0] sm:$0xff]
  %v359 = vld [vmem:[%s1 + $0x6c8] sm:$0xff]
  %v360 = vld [vmem:[%s1 + $0x6d0] sm:$0xff]
  %v361 = vld [vmem:[%s1 + $0x6d8] sm:$0xff]
  %v362 = vld [vmem:[%s1 + $0x6e0] sm:$0xff]
  %v363 = vld [vmem:[%s1 + $0x6e8] sm:$0xff]
  %v364 = vld [vmem:[%s1 + $0x6f0] sm:$0xff]
  %v365 = vld [vmem:[%s1 + $0x6f8] sm:$0xff]
  %v366 = vld [vmem:[%s1 + $0x700] sm:$0xff]
  %v367 = vld [vmem:[%s1 + $0x708] sm:$0xff]
  %v368 = vld [vmem:[%s1 + $0x710] sm:$0xff]
  %v369 = vld [vmem:[%s1 + $0x718] sm:$0xff]
  %v370 = vld [vmem:[%s1 + $0x720] sm:$0xff]
  %v371 = vld [vmem:[%s1 + $0x728] sm:$0xff]
  %v372 = vld [vmem:[%s1 + $0x730] sm:$0xff]
  %v373 = vld [vmem:[%s1 + $0x738] sm:$0xff]
  %v374 = vld [vmem:[%s1 + $0x740] sm:$0xff]
  %v375 = vld [vmem:[%s1 + $0x748] sm:$0xff]
  %v376 = vld [vmem:[%s1 + $0x750] sm:$0xff]
  %v377 = vld [vmem:[%s1 + $0x758] sm:$0xff]
  %v378 = vld [vmem:[%s1 + $0x760] sm:$0xff]
  %v379 = vld [vmem:[%s1 + $0x768] sm:$0xff]
  %v380 = vld [vmem:[%s1 + $0x770] sm:$0xff]
  %v381 = vld [vmem:[%s1 + $0x778] sm:$0xff]
  %v382 = vld [vmem:[%s1 + $0x780] sm:$0xff]
  %v383 = vld [vmem:[%s1 + $0x788] sm:$0xff]
  %v384 = vld [vmem:[%s1 + $0x790] sm:$0xff]
  %v385 = vld [vmem:[%s1 + $0x798] sm:$0xff]
  %v386 = vld [vmem:[%s1 + $0x7a0] sm:$0xff]
  %v387 = vld [vmem:[%s1 + $0x7a8] sm:$0xff]
  %v388 = vld [vmem:[%s1 + $0x7b0] sm:$0xff]
  %v389 = vld [vmem:[%s1 + $0x7b8] sm:$0xff]
  %v390 = vld [vmem:[%s1 + $0x7c0] sm:$0xff]
  %v391 = vld [vmem:[%s1 + $0x7c8] sm:$0xff]
  %v392 = vld [vmem:[%s1 + $0x7d0] sm:$0xff]
  %v393 = vld [vmem:[%s1 + $0x7d8] sm:$0xff]
  %v394 = vld [vmem:[%s1 + $0x7e0] sm:$0xff]
  %v395 = vld [vmem:[%s1 + $0x7e8] sm:$0xff]
  %v396 = vld [vmem:[%s1 + $0x7f0] sm:$0xff]
  %v397 = vld [vmem:[%s1 + $0x7f8] sm:$0xff]
  %v398 = vld [vmem:[%s1 + $0x800] sm:$0xff]
  %v399 = vld [vmem:[%s1 + $0x808] sm:$0xff]
  %v400 = vld [vmem:[%s1 + $0x810] sm:$0xff]
  %v401 = vld [vmem:[%s1 + $0x818] sm:$0xff]
  %v402 = vld [vmem:[%s1 + $0x820] sm:$0xff]
  %v403 = vld [vmem:[%s1 + $0x828] sm:$0xff]
  %v404 = vld [vmem:[%s1 + $0x830] sm:$0xff]
  %v405 = vld [vmem:[%s1 + $0x838] sm:$0xff]
  %v406 = vld [vmem:[%s1 + $0x840] sm:$0xff]
  %v407 = vld [vmem:[%s1 + $0x848] sm:$0xff]
  %v408 = vld [vmem:[%s1 + $0x850] sm:$0xff]
  %v409 = vld [vmem:[%s1 + $0x858] sm:$0xff]
  %v410 = vld [vmem:[%s1 + $0x860] sm:$0xff]
  %v411 = vld [vmem:[%s1 + $0x868] sm:$0xff]
  %v412 = vld [vmem:[%s1 + $0x870] sm:$0xff]
  %v413 = vld [vmem:[%s1 + $0x878] sm:$0xff]
  %v414 = vld [vmem:[%s1 + $0x880] sm:$0xff]
  %v415 = vld [vmem:[%s1 + $0x888] sm:$0xff]
  %v416 = vld [vmem:[%s1 + $0x890] sm:$0xff]
  %v417 = vld [vmem:[%s1 + $0x898] sm:$0xff]
  %v418 = vld [vmem:[%s1 + $0x8a0] sm:$0xff]
  %v419 = vld [vmem:[%s1 + $0x8a8] sm:$0xff]
  %v420 = vld [vmem:[%s1 + $0x8b0] sm:$0xff]
  %v421 = vld [vmem:[%s1 + $0x8b8] sm:$0xff]
  %v422 = vld [vmem:[%s1 + $0x8c0] sm:$0xff]
  %v423 = vld [vmem:[%s1 + $0x8c8] sm:$0xff]
  %v424 = vld [vmem:[%s1 + $0x8d0] sm:$0xff]
  %v425 = vld [vmem:[%s1 + $0x8d8] sm:$0xff]
  %v426 = vld [vmem:[%s1 + $0x8e0] sm:$0xff]
  %v427 = vld [vmem:[%s1 + $0x8e8] sm:$0xff]
  %v428 = vld [vmem:[%s1 + $0x8f0] sm:$0xff]
  %v429 = vld [vmem:[%s1 + $0x8f8] sm:$0xff]
  %v430 = vld [vmem:[%s1 + $0x900] sm:$0xff]
  %v431 = vld [vmem:[%s1 + $0x908] sm:$0xff]
  %v432 = vld [vmem:[%s1 + $0x910] sm:$0xff]
  %v433 = vld [vmem:[%s1 + $0x918] sm:$0xff]
  %v434 = vld [vmem:[%s1 + $0x920] sm:$0xff]
  %v435 = vld [vmem:[%s1 + $0x928] sm:$0xff]
  %v436 = vld [vmem:[%s1 + $0x930] sm:$0xff]
  %v437 = vld [vmem:[%s1 + $0x938] sm:$0xff]
  %v438 = vld [vmem:[%s1 + $0x940] sm:$0xff]
  %v439 = vld [vmem:[%s1 + $0x948] sm:$0xff]
  %v440 = vld [vmem:[%s1 + $0x950] sm:$0xff]
  %v441 = vld [vmem:[%s1 + $0x958] sm:$0xff]
  %v442 = vld [vmem:[%s1 + $0x960] sm:$0xff]
  %v443 = vld [vmem:[%s1 + $0x968] sm:$0xff]
  %v444 = vld [vmem:[%s1 + $0x970] sm:$0xff]
  %v445 = vld [vmem:[%s1 + $0x978] sm:$0xff]
  %v446 = vld [vmem:[%s1 + $0x980] sm:$0xff]
  %v447 = vld [vmem:[%s1 + $0x988] sm:$0xff]
  %v448 = vld [vmem:[%s1 + $0x990] sm:$0xff]
  %v449 = vld [vmem:[%s1 + $0x998] sm:$0xff]
  %v450 = vld [vmem:[%s1 + $0x9a0] sm:$0xff]
  %v451 = vld [vmem:[%s1 + $0x9a8] sm:$0xff]
  %v452 = vld [vmem:[%s1 + $0x9b0] sm:$0xff]
  %v453 = vld [vmem:[%s1 + $0x9b8] sm:$0xff]
  %v454 = vld [vmem:[%s1 + $0x9c0] sm:$0xff]
  %v455 = vld [vmem:[%s1 + $0x9c8] sm:$0xff]
  %v456 = vld [vmem:[%s1 + $0x9d0] sm:$0xff]
  %v457 = vld [vmem:[%s1 + $0x9d8] sm:$0xff]
  %v458 = vld [vmem:[%s1 + $0x9e0] sm:$0xff]
  %v459 = vld [vmem:[%s1 + $0x9e8] sm:$0xff]
  %v460 = vld [vmem:[%s1 + $0x9f0] sm:$0xff]
  %v461 = vld [vmem:[%s1 + $0x9f8] sm:$0xff]
  %v462 = vld [vmem:[%s1 + $0xa00] sm:$0xff]
  %v463 = vld [vmem:[%s1 + $0xa08] sm:$0xff]
  %v464 = vld [vmem:[%s1 + $0xa10] sm:$0xff]
  %v465 = vld [vmem:[%s1 + $0xa18] sm:$0xff]
  %v466 = vld [vmem:[%s1 + $0xa20] sm:$0xff]
  %v467 = vld [vmem:[%s1 + $0xa28] sm:$0xff]
  %v468 = vld [vmem:[%s1 + $0xa30] sm:$0xff]
  %v469 = vld [vmem:[%s1 + $0xa38] sm:$0xff]
  %v470 = vld [vmem:[%s1 + $0xa40] sm:$0xff]
  %v471 = vld [vmem:[%s1 + $0xa48] sm:$0xff]
  %v472 = vld [vmem:[%s1 + $0xa50] sm:$0xff]
  %v473 = vld [vmem:[%s1 + $0xa58] sm:$0xff]
  %v474 = vld [vmem:[%s1 + $0xa60] sm:$0xff]
  %v475 = vld [vmem:[%s1 + $0xa68] sm:$0xff]
  %v476 = vld [vmem:[%s1 + $0xa70] sm:$0xff]
  %v477 = vld [vmem:[%s1 + $0xa78] sm:$0xff]
  %v478 = vld [vmem:[%s1 + $0xa80] sm:$0xff]
  %v479 = vld [vmem:[%s1 + $0xa88] sm:$0xff]
  %v480 = vld [vmem:[%s1 + $0xa90] sm:$0xff]
  %v481 = vld [vmem:[%s1 + $0xa98] sm:$0xff]
  %v482 = vld [vmem:[%s1 + $0xaa0] sm:$0xff]
  %v483 = vld [vmem:[%s1 + $0xaa8] sm:$0xff]
  %v484 = vld [vmem:[%s1 + $0xab0] sm:$0xff]
  %v485 = vld [vmem:[%s1 + $0xab8] sm:$0xff]
  %v486 = vld [vmem:[%s1 + $0xac0] sm:$0xff]
  %v487 = vld [vmem:[%s1 + $0xac8] sm:$0xff]
  %v488 = vld [vmem:[%s1 + $0xad0] sm:$0xff]
  %v489 = vld [vmem:[%s1 + $0xad8] sm:$0xff]
  %v490 = vld [vmem:[%s1 + $0xae0] sm:$0xff]
  %v491 = vld [vmem:[%s1 + $0xae8] sm:$0xff]
  %v492 = vld [vmem:[%s1 + $0xaf0] sm:$0xff]
  %v493 = vld [vmem:[%s1 + $0xaf8] sm:$0xff]
  %v494 = vld [vmem:[%s1 + $0xb00] sm:$0xff]
  %v495 = vld [vmem:[%s1 + $0xb08] sm:$0xff]
  %v496 = vld [vmem:[%s1 + $0xb10] sm:$0xff]
  %v497 = vld [vmem:[%s1 + $0xb18] sm:$0xff]
  %v498 = vld [vmem:[%s1 + $0xb20] sm:$0xff]
  %v499 = vld [vmem:[%s1 + $0xb28] sm:$0xff]
  %v500 = vld [vmem:[%s1 + $0xb30] sm:$0xff]
  %v501 = vld [vmem:[%s1 + $0xb38] sm:$0xff]
  %v502 = vld [vmem:[%s1 + $0xb40] sm:$0xff]
  %v503 = vld [vmem:[%s1 + $0xb48] sm:$0xff]
  %v504 = vld [vmem:[%s1 + $0xb50] sm:$0xff]
  %v505 = vld [vmem:[%s1 + $0xb58] sm:$0xff]
  %v506 = vld [vmem:[%s1 + $0xb60] sm:$0xff]
  %v507 = vld [vmem:[%s1 + $0xb68] sm:$0xff]
  %v508 = vld [vmem:[%s1 + $0xb70] sm:$0xff]
  %v509 = vld [vmem:[%s1 + $0xb78] sm:$0xff]
  %v510 = vld [vmem:[%s1 + $0xb80] sm:$0xff]
  %v511 = vld [vmem:[%s1 + $0xb88] sm:$0xff]
  %v512 = vld [vmem:[%s1 + $0xb90] sm:$0xff]
  %v513 = vld [vmem:[%s1 + $0xb98] sm:$0xff]
  %v514 = vld [vmem:[%s1 + $0xba0] sm:$0xff]
  %v515 = vld [vmem:[%s1 + $0xba8] sm:$0xff]
  %v516 = vld [vmem:[%s1 + $0xbb0] sm:$0xff]
  %v517 = vld [vmem:[%s1 + $0xbb8] sm:$0xff]
  %v518 = vld [vmem:[%s1 + $0xbc0] sm:$0xff]
  %v519 = vld [vmem:[%s1 + $0xbc8] sm:$0xff]
  %v520 = vld [vmem:[%s1 + $0xbd0] sm:$0xff]
  %v521 = vld [vmem:[%s1 + $0xbd8] sm:$0xff]
  %v522 = vld [vmem:[%s1 + $0xbe0] sm:$0xff]
  %v523 = vld [vmem:[%s1 + $0xbe8] sm:$0xff]
  %v524 = vld [vmem:[%s1 + $0xbf0] sm:$0xff]
  %v525 = vld [vmem:[%s1 + $0xbf8] sm:$0xff]
  %v526 = vld [vmem:[%s1 + $0xc00] sm:$0xff]
  %v527 = vld [vmem:[%s1 + $0xc08] sm:$0xff]
  %v528 = vld [vmem:[%s1 + $0xc10] sm:$0xff]
  %v529 = vld [vmem:[%s1 + $0xc18] sm:$0xff]
  %v530 = vld [vmem:[%s1 + $0xc20] sm:$0xff]
  %v531 = vld [vmem:[%s1 + $0xc28] sm:$0xff]
  %v532 = vld [vmem:[%s1 + $0xc30] sm:$0xff]
  %v533 = vld [vmem:[%s1 + $0xc38] sm:$0xff]
  %v534 = vld [vmem:[%s1 + $0xc40] sm:$0xff]
  %v535 = vld [vmem:[%s1 + $0xc48] sm:$0xff]
  %v536 = vld [vmem:[%s1 + $0xc50] sm:$0xff]
  %v537 = vld [vmem:[%s1 + $0xc58] sm:$0xff]
  %v538 = vld [vmem:[%s1 + $0xc60] sm:$0xff]
  %v539 = vld [vmem:[%s1 + $0xc68] sm:$0xff]
  %v540 = vld [vmem:[%s1 + $0xc70] sm:$0xff]
  %v541 = vld [vmem:[%s1 + $0xc78] sm:$0xff]
  %v542 = vld [vmem:[%s1 + $0xc80] sm:$0xff]
  %v543 = vld [vmem:[%s1 + $0xc88] sm:$0xff]
  %v544 = vld [vmem:[%s1 + $0xc90] sm:$0xff]
  %v545 = vld [vmem:[%s1 + $0xc98] sm:$0xff]
  %v546 = vld [vmem:[%s1 + $0xca0] sm:$0xff]
  %v547 = vld [vmem:[%s1 + $0xca8] sm:$0xff]
  %v548 = vld [vmem:[%s1 + $0xcb0] sm:$0xff]
  %v549 = vld [vmem:[%s1 + $0xcb8] sm:$0xff]
  %v550 = vld [vmem:[%s1 + $0xcc0] sm:$0xff]
  %v551 = vld [vmem:[%s1 + $0xcc8] sm:$0xff]
  %v552 = vld [vmem:[%s1 + $0xcd0] sm:$0xff]
  %v553 = vld [vmem:[%s1 + $0xcd8] sm:$0xff]
  %v554 = vld [vmem:[%s1 + $0xce0] sm:$0xff]
  %v555 = vld [vmem:[%s1 + $0xce8] sm:$0xff]
  %v556 = vld [vmem:[%s1 + $0xcf0] sm:$0xff]
  %v557 = vld [vmem:[%s1 + $0xcf8] sm:$0xff]
  %v558 = vld [vmem:[%s1 + $0xd00] sm:$0xff]
  %v559 = vld [vmem:[%s1 + $0xd08] sm:$0xff]
  %v560 = vld [vmem:[%s1 + $0xd10] sm:$0xff]
  %v561 = vld [vmem:[%s1 + $0xd18] sm:$0xff]
  %v562 = vld [vmem:[%s1 + $0xd20] sm:$0xff]
  %v563 = vld [vmem:[%s1 + $0xd28] sm:$0xff]
  %v564 = vld [vmem:[%s1 + $0xd30] sm:$0xff]
  %v565 = vld [vmem:[%s1 + $0xd38] sm:$0xff]
  %v566 = vld [vmem:[%s1 + $0xd40] sm:$0xff]
  %v567 = vld [vmem:[%s1 + $0xd48] sm:$0xff]
  %v568 = vld [vmem:[%s1 + $0xd50] sm:$0xff]
  %v569 = vld [vmem:[%s1 + $0xd58] sm:$0xff]
  %v570 = vld [vmem:[%s1 + $0xd60] sm:$0xff]
  %v571 = vld [vmem:[%s1 + $0xd68] sm:$0xff]
  %v572 = vld [vmem:[%s1 + $0xd70] sm:$0xff]
  %v573 = vld [vmem:[%s1 + $0xd78] sm:$0xff]
  %v574 = vld [vmem:[%s1 + $0xd80] sm:$0xff]
  %v575 = vld [vmem:[%s1 + $0xd88] sm:$0xff]
  %v576 = vld [vmem:[%s1 + $0xd90] sm:$0xff]
  %v577 = vld [vmem:[%s1 + $0xd98] sm:$0xff]
  %v578 = vld [vmem:[%s1 + $0xda0] sm:$0xff]
  %v579 = vld [vmem:[%s1 + $0xda8] sm:$0xff]
  %v580 = vld [vmem:[%s1 + $0xdb0] sm:$0xff]
  %v581 = vld [vmem:[%s1 + $0xdb8] sm:$0xff]
  %v582 = vld [vmem:[%s1 + $0xdc0] sm:$0xff]
  %v583 = vld [vmem:[%s1 + $0xdc8] sm:$0xff]
  %v584 = vld [vmem:[%s1 + $0xdd0] sm:$0xff]
  %v585 = vld [vmem:[%s1 + $0xdd8] sm:$0xff]
  %v586 = vld [vmem:[%s1 + $0xde0] sm:$0xff]
  %v587 = vld [vmem:[%s1 + $0xde8] sm:$0xff]
  %v588 = vld [vmem:[%s1 + $0xdf0] sm:$0xff]
  %v589 = vld [vmem:[%s1 + $0xdf8] sm:$0xff]
  %v590 = vld [vmem:[%s1 + $0xe00] sm:$0xff]
  %v591 = vld [vmem:[%s1 + $0xe08] sm:$0xff]
  %v592 = vld [vmem:[%s1 + $0xe10] sm:$0xff]
  %v593 = vld [vmem:[%s1 + $0xe18] sm:$0xff]
  %v594 = vld [vmem:[%s1 + $0xe20] sm:$0xff]
  %v595 = vld [vmem:[%s1 + $0xe28] sm:$0xff]
  %v596 = vld [vmem:[%s1 + $0xe30] sm:$0xff]
  %v597 = vld [vmem:[%s1 + $0xe38] sm:$0xff]
  %v598 = vld [vmem:[%s1 + $0xe40] sm:$0xff]
  %v599 = vld [vmem:[%s1 + $0xe48] sm:$0xff]
  %v600 = vld [vmem:[%s1 + $0xe50] sm:$0xff]
  %v601 = vld [vmem:[%s1 + $0xe58] sm:$0xff]
  %v602 = vld [vmem:[%s1 + $0xe60] sm:$0xff]
  %v603 = vld [vmem:[%s1 + $0xe68] sm:$0xff]
  %v604 = vld [vmem:[%s1 + $0xe70] sm:$0xff]
  %v605 = vld [vmem:[%s1 + $0xe78] sm:$0xff]
  %v606 = vld [vmem:[%s1 + $0xe80] sm:$0xff]
  %v607 = vld [vmem:[%s1 + $0xe88] sm:$0xff]
  %v608 = vld [vmem:[%s1 + $0xe90] sm:$0xff]
  %v609 = vld [vmem:[%s1 + $0xe98] sm:$0xff]
  %v610 = vld [vmem:[%s1 + $0xea0] sm:$0xff]
  %v611 = vld [vmem:[%s1 + $0xea8] sm:$0xff]
  %v612 = vld [vmem:[%s1 + $0xeb0] sm:$0xff]
  %v613 = vld [vmem:[%s1 + $0xeb8] sm:$0xff]
  %v614 = vld [vmem:[%s1 + $0xec0] sm:$0xff]
  %v615 = vld [vmem:[%s1 + $0xec8] sm:$0xff]
  %v616 = vld [vmem:[%s1 + $0xed0] sm:$0xff]
  %v617 = vld [vmem:[%s1 + $0xed8] sm:$0xff]
  %v618 = vld [vmem:[%s1 + $0xee0] sm:$0xff]
  %v619 = vld [vmem:[%s1 + $0xee8] sm:$0xff]
  %v620 = vld [vmem:[%s1 + $0xef0] sm:$0xff]
  %v621 = vld [vmem:[%s1 + $0xef8] sm:$0xff]
  %v622 = vld [vmem:[%s1 + $0xf00] sm:$0xff]
  %v623 = vld [vmem:[%s1 + $0xf08] sm:$0xff]
  %v624 = vld [vmem:[%s1 + $0xf10] sm:$0xff]
  %v625 = vld [vmem:[%s1 + $0xf18] sm:$0xff]
  %v626 = vld [vmem:[%s1 + $0xf20] sm:$0xff]
  %v627 = vld [vmem:[%s1 + $0xf28] sm:$0xff]
  %v628 = vld [vmem:[%s1 + $0xf30] sm:$0xff]
  %v629 = vld [vmem:[%s1 + $0xf38] sm:$0xff]
  %v630 = vld [vmem:[%s1 + $0xf40] sm:$0xff]
  %v631 = vld [vmem:[%s1 + $0xf48] sm:$0xff]
  %v632 = vld [vmem:[%s1 + $0xf50] sm:$0xff]
  %v633 = vld [vmem:[%s1 + $0xf58] sm:$0xff]
  %v634 = vld [vmem:[%s1 + $0xf60] sm:$0xff]
  %v635 = vld [vmem:[%s1 + $0xf68] sm:$0xff]
  %v636 = vld [vmem:[%s1 + $0xf70] sm:$0xff]
  %v637 = vld [vmem:[%s1 + $0xf78] sm:$0xff]
  %v638 = vld [vmem:[%s1 + $0xf80] sm:$0xff]
  %v639 = vld [vmem:[%s1 + $0xf88] sm:$0xff]
  %v640 = vld [vmem:[%s1 + $0xf90] sm:$0xff]
  %v641 = vld [vmem:[%s1 + $0xf98] sm:$0xff]
  %v642 = vld [vmem:[%s1 + $0xfa0] sm:$0xff]
  %v643 = vld [vmem:[%s1 + $0xfa8] sm:$0xff]
  %v644 = vld [vmem:[%s1 + $0xfb0] sm:$0xff]
  %v645 = vld [vmem:[%s1 + $0xfb8] sm:$0xff]
  %v646 = vld [vmem:[%s1 + $0xfc0] sm:$0xff]
  %v647 = vld [vmem:[%s1 + $0xfc8] sm:$0xff]
  %v648 = vld [vmem:[%s1 + $0xfd0] sm:$0xff]
  %v649 = vld [vmem:[%s1 + $0xfd8] sm:$0xff]
  %v650 = vld [vmem:[%s1 + $0xfe0] sm:$0xff]
  %v651 = vld [vmem:[%s1 + $0xfe8] sm:$0xff]
  %v652 = vld [vmem:[%s1 + $0xff0] sm:$0xff]
  %v653 = vld [vmem:[%s1 + $0xff8] sm:$0xff]
  %v654 = vld [vmem:[%s1 + $0x1000] sm:$0xff]
  %v655 = vld [vmem:[%s1 + $0x1008] sm:$0xff]
  %v656 = vld [vmem:[%s1 + $0x1010] sm:$0xff]
  %v657 = vld [vmem:[%s1 + $0x1018] sm:$0xff]
  %v658 = vld [vmem:[%s1 + $0x1020] sm:$0xff]
  %v659 = vld [vmem:[%s1 + $0x1028] sm:$0xff]
  %v660 = vld [vmem:[%s1 + $0x1030] sm:$0xff]
  %v661 = vld [vmem:[%s1 + $0x1038] sm:$0xff]
  %v662 = vld [vmem:[%s1 + $0x1040] sm:$0xff]
  %v663 = vld [vmem:[%s1 + $0x1048] sm:$0xff]
  %v664 = vld [vmem:[%s1 + $0x1050] sm:$0xff]
  %v665 = vld [vmem:[%s1 + $0x1058] sm:$0xff]
  %v666 = vld [vmem:[%s1 + $0x1060] sm:$0xff]
  %v667 = vld [vmem:[%s1 + $0x1068] sm:$0xff]
  %v668 = vld [vmem:[%s1 + $0x1070] sm:$0xff]
  %v669 = vld [vmem:[%s1 + $0x1078] sm:$0xff]
  %v670 = vld [vmem:[%s1 + $0x1080] sm:$0xff]
  %v671 = vld [vmem:[%s1 + $0x1088] sm:$0xff]
  %v672 = vld [vmem:[%s1 + $0x1090] sm:$0xff]
  %v673 = vld [vmem:[%s1 + $0x1098] sm:$0xff]
  %v674 = vld [vmem:[%s1 + $0x10a0] sm:$0xff]
  %v675 = vld [vmem:[%s1 + $0x10a8] sm:$0xff]
  %v676 = vld [vmem:[%s1 + $0x10b0] sm:$0xff]
  %v677 = vld [vmem:[%s1 + $0x10b8] sm:$0xff]
  %v678 = vld [vmem:[%s1 + $0x10c0] sm:$0xff]
  %v679 = vld [vmem:[%s1 + $0x10c8] sm:$0xff]
  %v680 = vld [vmem:[%s1 + $0x10d0] sm:$0xff]
  %v681 = vld [vmem:[%s1 + $0x10d8] sm:$0xff]
  %v682 = vld [vmem:[%s1 + $0x10e0] sm:$0xff]
  %v683 = vld [vmem:[%s1 + $0x10e8] sm:$0xff]
  %v684 = vld [vmem:[%s1 + $0x10f0] sm:$0xff]
  %v685 = vld [vmem:[%s1 + $0x10f8] sm:$0xff]
  %v686 = vld [vmem:[%s1 + $0x1100] sm:$0xff]
  %v687 = vld [vmem:[%s1 + $0x1108] sm:$0xff]
  %v688 = vld [vmem:[%s1 + $0x1110] sm:$0xff]
  %v689 = vld [vmem:[%s1 + $0x1118] sm:$0xff]
  %v690 = vld [vmem:[%s1 + $0x1120] sm:$0xff]
  %v691 = vld [vmem:[%s1 + $0x1128] sm:$0xff]
  %v692 = vld [vmem:[%s1 + $0x1130] sm:$0xff]
  %v693 = vld [vmem:[%s1 + $0x1138] sm:$0xff]
  %v694 = vld [vmem:[%s1 + $0x1140] sm:$0xff]
  %v695 = vld [vmem:[%s1 + $0x1148] sm:$0xff]
  %v696 = vld [vmem:[%s1 + $0x1150] sm:$0xff]
  %v697 = vld [vmem:[%s1 + $0x1158] sm:$0xff]
  %v698 = vld [vmem:[%s1 + $0x1160] sm:$0xff]
  %v699 = vld [vmem:[%s1 + $0x1168] sm:$0xff]
  %v700 = vld [vmem:[%s1 + $0x1170] sm:$0xff]
  %v701 = vld [vmem:[%s1 + $0x1178] sm:$0xff]
  %v702 = vld [vmem:[%s1 + $0x1180] sm:$0xff]
  %v703 = vld [vmem:[%s1 + $0x1188] sm:$0xff]
  %v704 = vld [vmem:[%s1 + $0x1190] sm:$0xff]
  %v705 = vld [vmem:[%s1 + $0x1198] sm:$0xff]
  %v706 = vld [vmem:[%s1 + $0x11a0] sm:$0xff]
  %v707 = vld [vmem:[%s1 + $0x11a8] sm:$0xff]
  %v708 = vld [vmem:[%s1 + $0x11b0] sm:$0xff]
  %v709 = vld [vmem:[%s1 + $0x11b8] sm:$0xff]
  %v710 = vld [vmem:[%s1 + $0x11c0] sm:$0xff]
  %v711 = vld [vmem:[%s1 + $0x11c8] sm:$0xff]
  %v712 = vld [vmem:[%s1 + $0x11d0] sm:$0xff]
  %v713 = vld [vmem:[%s1 + $0x11d8] sm:$0xff]
  %v714 = vld [vmem:[%s1 + $0x11e0] sm:$0xff]
  %v715 = vld [vmem:[%s1 + $0x11e8] sm:$0xff]
  %v716 = vld [vmem:[%s1 + $0x11f0] sm:$0xff]
  %v717 = vld [vmem:[%s1 + $0x11f8] sm:$0xff]
  %v718 = vld [vmem:[%s1 + $0x1200] sm:$0xff]
  %v719 = vld [vmem:[%s1 + $0x1208] sm:$0xff]
  %v720 = vld [vmem:[%s1 + $0x1210] sm:$0xff]
  %v721 = vld [vmem:[%s1 + $0x1218] sm:$0xff]
  %v722 = vld [vmem:[%s1 + $0x1220] sm:$0xff]
  %v723 = vld [vmem:[%s1 + $0x1228] sm:$0xff]
  %v724 = vld [vmem:[%s1 + $0x1230] sm:$0xff]
  %v725 = vld [vmem:[%s1 + $0x1238] sm:$0xff]
  %v726 = vld [vmem:[%s1 + $0x1240] sm:$0xff]
  %v727 = vld [vmem:[%s1 + $0x1248] sm:$0xff]
  %v728 = vld [vmem:[%s1 + $0x1250] sm:$0xff]
  %v729 = vld [vmem:[%s1 + $0x1258] sm:$0xff]
  %v730 = vld [vmem:[%s1 + $0x1260] sm:$0xff]
  %v731 = vld [vmem:[%s1 + $0x1268] sm:$0xff]
  %v732 = vld [vmem:[%s1 + $0x1270] sm:$0xff]
  %v733 = vld [vmem:[%s1 + $0x1278] sm:$0xff]
  %v734 = vld [vmem:[%s1 + $0x1280] sm:$0xff]
  %v735 = vld [vmem:[%s1 + $0x1288] sm:$0xff]
  %v736 = vld [vmem:[%s1 + $0x1290] sm:$0xff]
  %v737 = vld [vmem:[%s1 + $0x1298] sm:$0xff]
  %v738 = vld [vmem:[%s1 + $0x12a0] sm:$0xff]
  %v739 = vld [vmem:[%s1 + $0x12a8] sm:$0xff]
  %v740 = vld [vmem:[%s1 + $0x12b0] sm:$0xff]
  %v741 = vld [vmem:[%s1 + $0x12b8] sm:$0xff]
  %v742 = vld [vmem:[%s1 + $0x12c0] sm:$0xff]
  %v743 = vld [vmem:[%s1 + $0x12c8] sm:$0xff]
  %v744 = vld [vmem:[%s1 + $0x12d0] sm:$0xff]
  %v745 = vld [vmem:[%s1 + $0x12d8] sm:$0xff]
  %v746 = vld [vmem:[%s1 + $0x12e0] sm:$0xff]
  %v747 = vld [vmem:[%s1 + $0x12e8] sm:$0xff]
  %v748 = vld [vmem:[%s1 + $0x12f0] sm:$0xff]
  %v749 = vld [vmem:[%s1 + $0x12f8] sm:$0xff]
  %v750 = vld [vmem:[%s1 + $0x1300] sm:$0xff]
  %v751 = vld [vmem:[%s1 + $0x1308] sm:$0xff]
  %v752 = vld [vmem:[%s1 + $0x1310] sm:$0xff]
  %v753 = vld [vmem:[%s1 + $0x1318] sm:$0xff]
  %v754 = vld [vmem:[%s1 + $0x1320] sm:$0xff]
  %v755 = vld [vmem:[%s1 + $0x1328] sm:$0xff]
  %v756 = vld [vmem:[%s1 + $0x1330] sm:$0xff]
  %v757 = vld [vmem:[%s1 + $0x1338] sm:$0xff]
  %v758 = vld [vmem:[%s1 + $0x1340] sm:$0xff]
  %v759 = vld [vmem:[%s1 + $0x1348] sm:$0xff]
  %v760 = vld [vmem:[%s1 + $0x1350] sm:$0xff]
  %v761 = vld [vmem:[%s1 + $0x1358] sm:$0xff]
  %v762 = vld [vmem:[%s1 + $0x1360] sm:$0xff]
  %v763 = vld [vmem:[%s1 + $0x1368] sm:$0xff]
  %v764 = vld [vmem:[%s1 + $0x1370] sm:$0xff]
  %v765 = vld [vmem:[%s1 + $0x1378] sm:$0xff]
  %v766 = vld [vmem:[%s1 + $0x1380] sm:$0xff]
  %v767 = vld [vmem:[%s1 + $0x1388] sm:$0xff]
  %v768 = vld [vmem:[%s1 + $0x1390] sm:$0xff]
  %v769 = vld [vmem:[%s1 + $0x1398] sm:$0xff]
  %v770 = vld [vmem:[%s1 + $0x13a0] sm:$0xff]
  %v771 = vld [vmem:[%s1 + $0x13a8] sm:$0xff]
  %v772 = vld [vmem:[%s1 + $0x13b0] sm:$0xff]
  %v773 = vld [vmem:[%s1 + $0x13b8] sm:$0xff]
  %v774 = vld [vmem:[%s1 + $0x13c0] sm:$0xff]
  %v775 = vld [vmem:[%s1 + $0x13c8] sm:$0xff]
  %v776 = vld [vmem:[%s1 + $0x13d0] sm:$0xff]
  %v777 = vld [vmem:[%s1 + $0x13d8] sm:$0xff]
  %v778 = vld [vmem:[%s1 + $0x13e0] sm:$0xff]
  %v779 = vld [vmem:[%s1 + $0x13e8] sm:$0xff]
  %v780 = vld [vmem:[%s1 + $0x13f0] sm:$0xff]
  %v781 = vld [vmem:[%s1 + $0x13f8] sm:$0xff]
  %v782 = vld [vmem:[%s1 + $0x1400] sm:$0xff]
  %v783 = vld [vmem:[%s1 + $0x1408] sm:$0xff]
  %v784 = vld [vmem:[%s1 + $0x1410] sm:$0xff]
  %v785 = vld [vmem:[%s1 + $0x1418] sm:$0xff]
  %v786 = vld [vmem:[%s1 + $0x1420] sm:$0xff]
  %v787 = vld [vmem:[%s1 + $0x1428] sm:$0xff]
  %v788 = vld [vmem:[%s1 + $0x1430] sm:$0xff]
  %v789 = vld [vmem:[%s1 + $0x1438] sm:$0xff]
  %v790 = vld [vmem:[%s1 + $0x1440] sm:$0xff]
  %v791 = vld [vmem:[%s1 + $0x1448] sm:$0xff]
  %v792 = vld [vmem:[%s1 + $0x1450] sm:$0xff]
  %v793 = vld [vmem:[%s1 + $0x1458] sm:$0xff]
  %v794 = vld [vmem:[%s1 + $0x1460] sm:$0xff]
  %v795 = vld [vmem:[%s1 + $0x1468] sm:$0xff]
  %v796 = vld [vmem:[%s1 + $0x1470] sm:$0xff]
  %v797 = vld [vmem:[%s1 + $0x1478] sm:$0xff]
  %v798 = vld [vmem:[%s1 + $0x1480] sm:$0xff]
  %v799 = vld [vmem:[%s1 + $0x1488] sm:$0xff]
  %v800 = vld [vmem:[%s1 + $0x1490] sm:$0xff]
  %v801 = vld [vmem:[%s1 + $0x1498] sm:$0xff]
  %v802 = vld [vmem:[%s1 + $0x14a0] sm:$0xff]
  %v803 = vld [vmem:[%s1 + $0x14a8] sm:$0xff]
  %v804 = vld [vmem:[%s1 + $0x14b0] sm:$0xff]
  %v805 = vld [vmem:[%s1 + $0x14b8] sm:$0xff]
  %v806 = vld [vmem:[%s1 + $0x14c0] sm:$0xff]
  %v807 = vld [vmem:[%s1 + $0x14c8] sm:$0xff]
  %v808 = vld [vmem:[%s1 + $0x14d0] sm:$0xff]
  %v809 = vld [vmem:[%s1 + $0x14d8] sm:$0xff]
  %v810 = vld [vmem:[%s1 + $0x14e0] sm:$0xff]
  %v811 = vld [vmem:[%s1 + $0x14e8] sm:$0xff]
  %v812 = vld [vmem:[%s1 + $0x14f0] sm:$0xff]
  %v813 = vld [vmem:[%s1 + $0x14f8] sm:$0xff]
  %v814 = vld [vmem:[%s1 + $0x1500] sm:$0xff]
  %v815 = vld [vmem:[%s1 + $0x1508] sm:$0xff]
  %v816 = vld [vmem:[%s1 + $0x1510] sm:$0xff]
  %v817 = vld [vmem:[%s1 + $0x1518] sm:$0xff]
  %v818 = vld [vmem:[%s1 + $0x1520] sm:$0xff]
  %v819 = vld [vmem:[%s1 + $0x1528] sm:$0xff]
  %v820 = vld [vmem:[%s1 + $0x1530] sm:$0xff]
  %v821 = vld [vmem:[%s1 + $0x1538] sm:$0xff]
  %v822 = vld [vmem:[%s1 + $0x1540] sm:$0xff]
  %v823 = vld [vmem:[%s1 + $0x1548] sm:$0xff]
  %v824 = vld [vmem:[%s1 + $0x1550] sm:$0xff]
  %v825 = vld [vmem:[%s1 + $0x1558] sm:$0xff]
  %v826 = vld [vmem:[%s1 + $0x1560] sm:$0xff]
  %v827 = vld [vmem:[%s1 + $0x1568] sm:$0xff]
  %v828 = vld [vmem:[%s1 + $0x1570] sm:$0xff]
  %v829 = vld [vmem:[%s1 + $0x1578] sm:$0xff]
  %v830 = vld [vmem:[%s1 + $0x1580] sm:$0xff]
  %v831 = vld [vmem:[%s1 + $0x1588] sm:$0xff]
  %v832 = vld [vmem:[%s1 + $0x1590] sm:$0xff]
  %v833 = vld [vmem:[%s1 + $0x1598] sm:$0xff]
  %v834 = vld [vmem:[%s1 + $0x15a0] sm:$0xff]
  %v835 = vld [vmem:[%s1 + $0x15a8] sm:$0xff]
  %v836 = vld [vmem:[%s1 + $0x15b0] sm:$0xff]
  %v837 = vld [vmem:[%s1 + $0x15b8] sm:$0xff]
  %v838 = vld [vmem:[%s1 + $0x15c0] sm:$0xff]
  %v839 = vld [vmem:[%s1 + $0x15c8] sm:$0xff]
  %v840 = vld [vmem:[%s1 + $0x15d0] sm:$0xff]
  %v841 = vld [vmem:[%s1 + $0x15d8] sm:$0xff]
  %v842 = vld [vmem:[%s1 + $0x15e0] sm:$0xff]
  %v843 = vld [vmem:[%s1 + $0x15e8] sm:$0xff]
  %v844 = vld [vmem:[%s1 + $0x15f0] sm:$0xff]
  %v845 = vld [vmem:[%s1 + $0x15f8] sm:$0xff]
  %v846 = vld [vmem:[%s1 + $0x1600] sm:$0xff]
  %v847 = vld [vmem:[%s1 + $0x1608] sm:$0xff]
  %v848 = vld [vmem:[%s1 + $0x1610] sm:$0xff]
  %v849 = vld [vmem:[%s1 + $0x1618] sm:$0xff]
  %v850 = vld [vmem:[%s1 + $0x1620] sm:$0xff]
  %v851 = vld [vmem:[%s1 + $0x1628] sm:$0xff]
  %v852 = vld [vmem:[%s1 + $0x1630] sm:$0xff]
  %v853 = vld [vmem:[%s1 + $0x1638] sm:$0xff]
  %v854 = vld [vmem:[%s1 + $0x1640] sm:$0xff]
  %v855 = vld [vmem:[%s1 + $0x1648] sm:$0xff]
  %v856 = vld [vmem:[%s1 + $0x1650] sm:$0xff]
  %v857 = vld [vmem:[%s1 + $0x1658] sm:$0xff]
  %v858 = vld [vmem:[%s1 + $0x1660] sm:$0xff]
  %v859 = vld [vmem:[%s1 + $0x1668] sm:$0xff]
  %v860 = vld [vmem:[%s1 + $0x1670] sm:$0xff]
  %v861 = vld [vmem:[%s1 + $0x1678] sm:$0xff]
  %v862 = vld [vmem:[%s1 + $0x1680] sm:$0xff]
  %v863 = vld [vmem:[%s1 + $0x1688] sm:$0xff]
  %v864 = vld [vmem:[%s1 + $0x1690] sm:$0xff]
  %v865 = vld [vmem:[%s1 + $0x1698] sm:$0xff]
  %v866 = vld [vmem:[%s1 + $0x16a0] sm:$0xff]
  %v867 = vld [vmem:[%s1 + $0x16a8] sm:$0xff]
  %v868 = vld [vmem:[%s1 + $0x16b0] sm:$0xff]
  %v869 = vld [vmem:[%s1 + $0x16b8] sm:$0xff]
  %v870 = vld [vmem:[%s1 + $0x16c0] sm:$0xff]
  %v871 = vld [vmem:[%s1 + $0x16c8] sm:$0xff]
  %v872 = vld [vmem:[%s1 + $0x16d0] sm:$0xff]
  %v873 = vld [vmem:[%s1 + $0x16d8] sm:$0xff]
  %v874 = vld [vmem:[%s1 + $0x16e0] sm:$0xff]
  %v875 = vld [vmem:[%s1 + $0x16e8] sm:$0xff]
  %v876 = vld [vmem:[%s1 + $0x16f0] sm:$0xff]
  %v877 = vld [vmem:[%s1 + $0x16f8] sm:$0xff]
  %v878 = vld [vmem:[%s1 + $0x1700] sm:$0xff]
  %v879 = vld [vmem:[%s1 + $0x1708] sm:$0xff]
  %v880 = vld [vmem:[%s1 + $0x1710] sm:$0xff]
  %v881 = vld [vmem:[%s1 + $0x1718] sm:$0xff]
  %v882 = vld [vmem:[%s1 + $0x1720] sm:$0xff]
  %v883 = vld [vmem:[%s1 + $0x1728] sm:$0xff]
  %v884 = vld [vmem:[%s1 + $0x1730] sm:$0xff]
  %v885 = vld [vmem:[%s1 + $0x1738] sm:$0xff]
  %v886 = vld [vmem:[%s1 + $0x1740] sm:$0xff]
  %v887 = vld [vmem:[%s1 + $0x1748] sm:$0xff]
  %v888 = vld [vmem:[%s1 + $0x1750] sm:$0xff]
  %v889 = vld [vmem:[%s1 + $0x1758] sm:$0xff]
  %v890 = vld [vmem:[%s1 + $0x1760] sm:$0xff]
  %v891 = vld [vmem:[%s1 + $0x1768] sm:$0xff]
  %v892 = vld [vmem:[%s1 + $0x1770] sm:$0xff]
  %v893 = vld [vmem:[%s1 + $0x1778] sm:$0xff]
  %v894 = vld [vmem:[%s1 + $0x1780] sm:$0xff]
  %v895 = vld [vmem:[%s1 + $0x1788] sm:$0xff]
  %v896 = vld [vmem:[%s1 + $0x1790] sm:$0xff]
  %v897 = vld [vmem:[%s1 + $0x1798] sm:$0xff]
  %v898 = vld [vmem:[%s1 + $0x17a0] sm:$0xff]
  %v899 = vld [vmem:[%s1 + $0x17a8] sm:$0xff]
  %v900 = vld [vmem:[%s1 + $0x17b0] sm:$0xff]
  %v901 = vld [vmem:[%s1 + $0x17b8] sm:$0xff]
  %v902 = vld [vmem:[%s1 + $0x17c0] sm:$0xff]
  %v903 = vld [vmem:[%s1 + $0x17c8] sm:$0xff]
  %v904 = vld [vmem:[%s1 + $0x17d0] sm:$0xff]
  %v905 = vld [vmem:[%s1 + $0x17d8] sm:$0xff]
  %v906 = vld [vmem:[%s1 + $0x17e0] sm:$0xff]
  %v907 = vld [vmem:[%s1 + $0x17e8] sm:$0xff]
  %v908 = vld [vmem:[%s1 + $0x17f0] sm:$0xff]
  %v909 = vld [vmem:[%s1 + $0x17f8] sm:$0xff]
  %v910 = vld [vmem:[%s1 + $0x1800] sm:$0xff]
  %v911 = vld [vmem:[%s1 + $0x1808] sm:$0xff]
  %v912 = vld [vmem:[%s1 + $0x1810] sm:$0xff]
  %v913 = vld [vmem:[%s1 + $0x1818] sm:$0xff]
  %v914 = vld [vmem:[%s1 + $0x1820] sm:$0xff]
  %v915 = vld [vmem:[%s1 + $0x1828] sm:$0xff]
  %v916 = vld [vmem:[%s1 + $0x1830] sm:$0xff]
  %v917 = vld [vmem:[%s1 + $0x1838] sm:$0xff]
  %v918 = vld [vmem:[%s1 + $0x1840] sm:$0xff]
  %v919 = vld [vmem:[%s1 + $0x1848] sm:$0xff]
  %v920 = vld [vmem:[%s1 + $0x1850] sm:$0xff]
  %v921 = vld [vmem:[%s1 + $0x1858] sm:$0xff]
  %v922 = vld [vmem:[%s1 + $0x1860] sm:$0xff]
  %v923 = vld [vmem:[%s1 + $0x1868] sm:$0xff]
  %v924 = vld [vmem:[%s1 + $0x1870] sm:$0xff]
  %v925 = vld [vmem:[%s1 + $0x1878] sm:$0xff]
  %v926 = vld [vmem:[%s1 + $0x1880] sm:$0xff]
  %v927 = vld [vmem:[%s1 + $0x1888] sm:$0xff]
  %v928 = vld [vmem:[%s1 + $0x1890] sm:$0xff]
  %v929 = vld [vmem:[%s1 + $0x1898] sm:$0xff]
  %v930 = vld [vmem:[%s1 + $0x18a0] sm:$0xff]
  %v931 = vld [vmem:[%s1 + $0x18a8] sm:$0xff]
  %v932 = vld [vmem:[%s1 + $0x18b0] sm:$0xff]
  %v933 = vld [vmem:[%s1 + $0x18b8] sm:$0xff]
  %v934 = vld [vmem:[%s1 + $0x18c0] sm:$0xff]
  %v935 = vld [vmem:[%s1 + $0x18c8] sm:$0xff]
  %v936 = vld [vmem:[%s1 + $0x18d0] sm:$0xff]
  %v937 = vld [vmem:[%s1 + $0x18d8] sm:$0xff]
  %v938 = vld [vmem:[%s1 + $0x18e0] sm:$0xff]
  %v939 = vld [vmem:[%s1 + $0x18e8] sm:$0xff]
  %v940 = vld [vmem:[%s1 + $0x18f0] sm:$0xff]
  %v941 = vld [vmem:[%s1 + $0x18f8] sm:$0xff]
  %v942 = vld [vmem:[%s1 + $0x1900] sm:$0xff]
  %v943 = vld [vmem:[%s1 + $0x1908] sm:$0xff]
  %v944 = vld [vmem:[%s1 + $0x1910] sm:$0xff]
  %v945 = vld [vmem:[%s1 + $0x1918] sm:$0xff]
  %v946 = vld [vmem:[%s1 + $0x1920] sm:$0xff]
  %v947 = vld [vmem:[%s1 + $0x1928] sm:$0xff]
  %v948 = vld [vmem:[%s1 + $0x1930] sm:$0xff]
  %v949 = vld [vmem:[%s1 + $0x1938] sm:$0xff]
  %v950 = vld [vmem:[%s1 + $0x1940] sm:$0xff]
  %v951 = vld [vmem:[%s1 + $0x1948] sm:$0xff]
  %v952 = vld [vmem:[%s1 + $0x1950] sm:$0xff]
  %v953 = vld [vmem:[%s1 + $0x1958] sm:$0xff]
  %v954 = vld [vmem:[%s1 + $0x1960] sm:$0xff]
  %v955 = vld [vmem:[%s1 + $0x1968] sm:$0xff]
  %v956 = vld [vmem:[%s1 + $0x1970] sm:$0xff]
  %v957 = vld [vmem:[%s1 + $0x1978] sm:$0xff]
  %v958 = vld [vmem:[%s1 + $0x1980] sm:$0xff]
  %v959 = vld [vmem:[%s1 + $0x1988] sm:$0xff]
  %v960 = vld [vmem:[%s1 + $0x1990] sm:$0xff]
  %v961 = vld [vmem:[%s1 + $0x1998] sm:$0xff]
  %v962 = vld [vmem:[%s1 + $0x19a0] sm:$0xff]
  %v963 = vld [vmem:[%s1 + $0x19a8] sm:$0xff]
  %v964 = vld [vmem:[%s1 + $0x19b0] sm:$0xff]
  %v965 = vld [vmem:[%s1 + $0x19b8] sm:$0xff]
  %v966 = vld [vmem:[%s1 + $0x19c0] sm:$0xff]
  %v967 = vld [vmem:[%s1 + $0x19c8] sm:$0xff]
  %v968 = vld [vmem:[%s1 + $0x19d0] sm:$0xff]
  %v969 = vld [vmem:[%s1 + $0x19d8] sm:$0xff]
  %v970 = vld [vmem:[%s1 + $0x19e0] sm:$0xff]
  %v971 = vld [vmem:[%s1 + $0x19e8] sm:$0xff]
  %v972 = vld [vmem:[%s1 + $0x19f0] sm:$0xff]
  %v973 = vld [vmem:[%s1 + $0x19f8] sm:$0xff]
  %v974 = vld [vmem:[%s1 + $0x1a00] sm:$0xff]
  %v975 = vld [vmem:[%s1 + $0x1a08] sm:$0xff]
  %v976 = vld [vmem:[%s1 + $0x1a10] sm:$0xff]
  %v977 = vld [vmem:[%s1 + $0x1a18] sm:$0xff]
  %v978 = vld [vmem:[%s1 + $0x1a20] sm:$0xff]
  %v979 = vld [vmem:[%s1 + $0x1a28] sm:$0xff]
  %v980 = vld [vmem:[%s1 + $0x1a30] sm:$0xff]
  %v981 = vld [vmem:[%s1 + $0x1a38] sm:$0xff]
  %v982 = vld [vmem:[%s1 + $0x1a40] sm:$0xff]
  %v983 = vld [vmem:[%s1 + $0x1a48] sm:$0xff]
  %v984 = vld [vmem:[%s1 + $0x1a50] sm:$0xff]
  %v985 = vld [vmem:[%s1 + $0x1a58] sm:$0xff]
  %v986 = vld [vmem:[%s1 + $0x1a60] sm:$0xff]
  %v987 = vld [vmem:[%s1 + $0x1a68] sm:$0xff]
  %v988 = vld [vmem:[%s1 + $0x1a70] sm:$0xff]
  %v989 = vld [vmem:[%s1 + $0x1a78] sm:$0xff]
  %v990 = vld [vmem:[%s1 + $0x1a80] sm:$0xff]
  %v991 = vld [vmem:[%s1 + $0x1a88] sm:$0xff]
  %v992 = vld [vmem:[%s1 + $0x1a90] sm:$0xff]
  %v993 = vld [vmem:[%s1 + $0x1a98] sm:$0xff]
  %v994 = vld [vmem:[%s1 + $0x1aa0] sm:$0xff]
  %v995 = vld [vmem:[%s1 + $0x1aa8] sm:$0xff]
  %v996 = vld [vmem:[%s1 + $0x1ab0] sm:$0xff]
  %v997 = vld [vmem:[%s1 + $0x1ab8] sm:$0xff]
  %v998 = vld [vmem:[%s1 + $0x1ac0] sm:$0xff]
  %v999 = vld [vmem:[%s1 + $0x1ac8] sm:$0xff]
  %v1000 = vld [vmem:[%s1 + $0x1ad0] sm:$0xff]
  %v1001 = vld [vmem:[%s1 + $0x1ad8] sm:$0xff]
  %v1002 = vld [vmem:[%s1 + $0x1ae0] sm:$0xff]
  %v1003 = vld [vmem:[%s1 + $0x1ae8] sm:$0xff]
  %v1004 = vld [vmem:[%s1 + $0x1af0] sm:$0xff]
  %v1005 = vld [vmem:[%s1 + $0x1af8] sm:$0xff]
  %v1006 = vld [vmem:[%s1 + $0x1b00] sm:$0xff]
  %v1007 = vld [vmem:[%s1 + $0x1b08] sm:$0xff]
  %v1008 = vld [vmem:[%s1 + $0x1b10] sm:$0xff]
  %v1009 = vld [vmem:[%s1 + $0x1b18] sm:$0xff]
  %v1010 = vld [vmem:[%s1 + $0x1b20] sm:$0xff]
  %v1011 = vld [vmem:[%s1 + $0x1b28] sm:$0xff]
  %v1012 = vld [vmem:[%s1 + $0x1b30] sm:$0xff]
  %v1013 = vld [vmem:[%s1 + $0x1b38] sm:$0xff]
  %v1014 = vld [vmem:[%s1 + $0x1b40] sm:$0xff]
  %v1015 = vld [vmem:[%s1 + $0x1b48] sm:$0xff]
  %v1016 = vld [vmem:[%s1 + $0x1b50] sm:$0xff]
  %v1017 = vld [vmem:[%s1 + $0x1b58] sm:$0xff]
  %v1018 = vld [vmem:[%s1 + $0x1b60] sm:$0xff]
  %v1019 = vld [vmem:[%s1 + $0x1b68] sm:$0xff]
  %v1020 = vld [vmem:[%s1 + $0x1b70] sm:$0xff]
  %v1021 = vld [vmem:[%s1 + $0x1b78] sm:$0xff]
  %v1022 = vld [vmem:[%s1 + $0x1b80] sm:$0xff]
  %v1023 = vld [vmem:[%s1 + $0x1b88] sm:$0xff]
  %v1024 = vld [vmem:[%s1 + $0x1b90] sm:$0xff]
  %v1025 = vld [vmem:[%s1 + $0x1b98] sm:$0xff]
  %v1026 = vld [vmem:[%s1 + $0x1ba0] sm:$0xff]
  %v1027 = vld [vmem:[%s1 + $0x1ba8] sm:$0xff]
  %v1028 = vld [vmem:[%s1 + $0x1bb0] sm:$0xff]
  %v1029 = vld [vmem:[%s1 + $0x1bb8] sm:$0xff]
  %v1030 = vld [vmem:[%s1 + $0x1bc0] sm:$0xff]
  %v1031 = vld [vmem:[%s1 + $0x1bc8] sm:$0xff]
  %v1032 = vld [vmem:[%s1 + $0x1bd0] sm:$0xff]
  %v1033 = vld [vmem:[%s1 + $0x1bd8] sm:$0xff]
  %v1034 = vld [vmem:[%s1 + $0x1be0] sm:$0xff]
  %v1035 = vld [vmem:[%s1 + $0x1be8] sm:$0xff]
  %v1036 = vld [vmem:[%s1 + $0x1bf0] sm:$0xff]
  %v1037 = vld [vmem:[%s1 + $0x1bf8] sm:$0xff]
  %v1038 = vld [vmem:[%s2] sm:$0xff]
  %v1039 = vld [vmem:[%s2 + $0x8] sm:$0xff]
  %v1040 = vld [vmem:[%s2 + $0x10] sm:$0xff]
  %v1041 = vld [vmem:[%s2 + $0x18] sm:$0xff]
  %v1042 = vld [vmem:[%s2 + $0x20] sm:$0xff]
  %v1043 = vld [vmem:[%s2 + $0x28] sm:$0xff]
  %v1044 = vld [vmem:[%s2 + $0x30] sm:$0xff]
  %v1045 = vld [vmem:[%s2 + $0x38] sm:$0xff]
  %v1046 = vld [vmem:[%s2 + $0x40] sm:$0xff]
  %v1047 = vld [vmem:[%s2 + $0x48] sm:$0xff]
  %v1048 = vld [vmem:[%s2 + $0x50] sm:$0xff]
  %v1049 = vld [vmem:[%s2 + $0x58] sm:$0xff]
  %v1050 = vld [vmem:[%s2 + $0x60] sm:$0xff]
  %v1051 = vld [vmem:[%s2 + $0x68] sm:$0xff]
  %v1052 = vld [vmem:[%s2 + $0x70] sm:$0xff]
  %v1053 = vld [vmem:[%s2 + $0x78] sm:$0xff]
  %1055 = vset.pattern.permute.xlu0 0
  %1056 = vperm.xlu0 %1055, %v1038
  %v1057 = vpop.permute.xlu0 %1056
  %1060 = vset.pattern.permute.xlu0 0
  %1061 = vperm.xlu0 %1060, %v1039
  %v1062 = vpop.permute.xlu0 %1061
  %1065 = vset.pattern.permute.xlu0 0
  %1066 = vperm.xlu0 %1065, %v1040
  %v1067 = vpop.permute.xlu0 %1066
  %1070 = vset.pattern.permute.xlu0 0
  %1071 = vperm.xlu0 %1070, %v1041
  %v1072 = vpop.permute.xlu0 %1071
  %1075 = vset.pattern.permute.xlu0 0
  %1076 = vperm.xlu0 %1075, %v1042
  %v1077 = vpop.permute.xlu0 %1076
  %1080 = vset.pattern.permute.xlu0 0
  %1081 = vperm.xlu0 %1080, %v1043
  %v1082 = vpop.permute.xlu0 %1081
  %1085 = vset.pattern.permute.xlu0 0
  %1086 = vperm.xlu0 %1085, %v1044
  %v1087 = vpop.permute.xlu0 %1086
  %1090 = vset.pattern.permute.xlu0 0
  %1091 = vperm.xlu0 %1090, %v1045
  %v1092 = vpop.permute.xlu0 %1091
  %1095 = vset.pattern.permute.xlu0 0
  %1096 = vperm.xlu0 %1095, %v1046
  %v1097 = vpop.permute.xlu0 %1096
  %1100 = vset.pattern.permute.xlu0 0
  %1101 = vperm.xlu0 %1100, %v1047
  %v1102 = vpop.permute.xlu0 %1101
  %1105 = vset.pattern.permute.xlu0 0
  %1106 = vperm.xlu0 %1105, %v1048
  %v1107 = vpop.permute.xlu0 %1106
  %1110 = vset.pattern.permute.xlu0 0
  %1111 = vperm.xlu0 %1110, %v1049
  %v1112 = vpop.permute.xlu0 %1111
  %1115 = vset.pattern.permute.xlu0 0
  %1116 = vperm.xlu0 %1115, %v1050
  %v1117 = vpop.permute.xlu0 %1116
  %1120 = vset.pattern.permute.xlu0 0
  %1121 = vperm.xlu0 %1120, %v1051
  %v1122 = vpop.permute.xlu0 %1121
  %1125 = vset.pattern.permute.xlu0 0
  %1126 = vperm.xlu0 %1125, %v1052
  %v1127 = vpop.permute.xlu0 %1126
  %1130 = vset.pattern.permute.xlu0 0
  %1131 = vperm.xlu0 %1130, %v1053
  %v1132 = vpop.permute.xlu0 %1131
  %1134 = vmatprep.subr.mxu0 %v143
  %1135 = vmatpush1.msra.mxu0 %v142
  %1136 = vmatprep.subr.mxu0 %v150
  %1137 = vmatpush1.msra.mxu0 %v149
  %1138 = vmatprep.subr.mxu0 %v157
  %1139 = vmatpush1.msra.mxu0 %v156
  %1140 = vmatprep.subr.mxu0 %v164
  %1141 = vmatpush1.msra.mxu0 %v163
  %1142 = vmatprep.subr.mxu0 %v171
  %1143 = vmatpush1.msra.mxu0 %v170
  %1144 = vmatprep.subr.mxu0 %v178
  %1145 = vmatpush1.msra.mxu0 %v177
  %1146 = vmatprep.subr.mxu0 %v185
  %1147 = vmatpush1.msra.mxu0 %v184
  %1148 = vmatprep.subr.mxu0 %v192
  %1149 = vmatpush1.msra.mxu0 %v191
  %1150 = vmatprep.subr.mxu0 %v199
  %1151 = vmatpush1.msra.mxu0 %v198
  %1152 = vmatprep.subr.mxu0 %v206
  %1153 = vmatpush1.msra.mxu0 %v205
  %1154 = vmatprep.subr.mxu0 %v213
  %1155 = vmatpush1.msra.mxu0 %v212
  %1156 = vmatprep.subr.mxu0 %v220
  %1157 = vmatpush1.msra.mxu0 %v219
  %1158 = vmatprep.subr.mxu0 %v227
  %1159 = vmatpush1.msra.mxu0 %v226
  %1160 = vmatprep.subr.mxu0 %v234
  %1161 = vmatpush1.msra.mxu0 %v233
  %1162 = vmatprep.subr.mxu0 %v241
  %1163 = vmatpush1.msra.mxu0 %v240
  %1164 = vmatprep.subr.mxu0 %v248
  %1165 = vmatpush1.msra.mxu0 %v247
  %1166 = vmatprep.subr.mxu0 %v255
  %1167 = vmatpush1.msra.mxu0 %v254
  %1168 = vmatprep.subr.mxu0 %v262
  %1169 = vmatpush1.msra.mxu0 %v261
  %1170 = vmatprep.subr.mxu0 %v269
  %1171 = vmatpush1.msra.mxu0 %v268
  %1172 = vmatprep.subr.mxu0 %v276
  %1173 = vmatpush1.msra.mxu0 %v275
  %1174 = vmatprep.subr.mxu0 %v283
  %1175 = vmatpush1.msra.mxu0 %v282
  %1176 = vmatprep.subr.mxu0 %v290
  %1177 = vmatpush1.msra.mxu0 %v289
  %1178 = vmatprep.subr.mxu0 %v297
  %1179 = vmatpush1.msra.mxu0 %v296
  %1180 = vmatprep.subr.mxu0 %v304
  %1181 = vmatpush1.msra.mxu0 %v303
  %1182 = vmatprep.subr.mxu0 %v311
  %1183 = vmatpush1.msra.mxu0 %v310
  %1184 = vmatprep.subr.mxu0 %v318
  %1185 = vmatpush1.msra.mxu0 %v317
  %1186 = vmatprep.subr.mxu0 %v325
  %1187 = vmatpush1.msra.mxu0 %v324
  %1188 = vmatprep.subr.mxu0 %v332
  %1189 = vmatpush1.msra.mxu0 %v331
  %1190 = vmatprep.subr.mxu0 %v339
  %1191 = vmatpush1.msra.mxu0 %v338
  %1192 = vmatprep.subr.mxu0 %v346
  %1193 = vmatpush1.msra.mxu0 %v345
  %1194 = vmatprep.subr.mxu0 %v353
  %1195 = vmatpush1.msra.mxu0 %v352
  %1196 = vmatprep.subr.mxu0 %v360
  %1197 = vmatpush1.msra.mxu0 %v359
  %1198 = vmatprep.mubr.f32.mxu0 %v15
  %1199 = vmatmul.mubr.f32.gmra.mrb[0].mxu0 %v14
  %v1200 = vpop.f32.mrb[0].mxu0
  %v1201 = vadd.f32 %v1057, %v1200
  %v1202 = vpop.f32.mrb[0].mxu0
  %v1203 = vadd.f32 %v1057, %v1202
  %1204 = vmatprep.mubr.f32.mxu0 %v23
  %1205 = vmatmul.mubr.f32.gmra.mrb[0].mxu0 %v22
  %v1206 = vpop.f32.mrb[0].mxu0
  %v1207 = vadd.f32 %v1062, %v1206
  %v1208 = vpop.f32.mrb[0].mxu0
  %v1209 = vadd.f32 %v1062, %v1208
  %1210 = vmatprep.mubr.f32.mxu0 %v31
  %1211 = vmatmul.mubr.f32.gmra.mrb[0].mxu0 %v30
  %v1212 = vpop.f32.mrb[0].mxu0
  %v1213 = vadd.f32 %v1067, %v1212
  %v1214 = vpop.f32.mrb[0].mxu0
  %v1215 = vadd.f32 %v1067, %v1214
  %1216 = vmatprep.mubr.f32.mxu0 %v39
  %1217 = vmatmul.mubr.f32.gmra.mrb[0].mxu0 %v38
  %v1218 = vpop.f32.mrb[0].mxu0
  %v1219 = vadd.f32 %v1072, %v1218
  %v1220 = vpop.f32.mrb[0].mxu0
  %v1221 = vadd.f32 %v1072, %v1220
  %1222 = vmatprep.mubr.f32.mxu0 %v47
  %1223 = vmatmul.mubr.f32.gmra.mrb[0].mxu0 %v46
  %v1224 = vpop.f32.mrb[0].mxu0
  %v1225 = vadd.f32 %v1077, %v1224
  %v1226 = vpop.f32.mrb[0].mxu0
  %v1227 = vadd.f32 %v1077, %v1226
  %1228 = vmatprep.mubr.f32.mxu0 %v55
  %1229 = vmatmul.mubr.f32.gmra.mrb[0].mxu0 %v54
  %v1230 = vpop.f32.mrb[0].mxu0
  %v1231 = vadd.f32 %v1082, %v1230
  %v1232 = vpop.f32.mrb[0].mxu0
  %v1233 = vadd.f32 %v1082, %v1232
  %1234 = vmatprep.mubr.f32.mxu0 %v63
  %1235 = vmatmul.mubr.f32.gmra.mrb[0].mxu0 %v62
  %v1236 = vpop.f32.mrb[0].mxu0
  %v1237 = vadd.f32 %v1087, %v1236
  %v1238 = vpop.f32.mrb[0].mxu0
  %v1239 = vadd.f32 %v1087, %v1238
  %1240 = vmatprep.mubr.f32.mxu0 %v71
  %1241 = vmatmul.mubr.f32.gmra.mrb[0].mxu0 %v70
  %v1242 = vpop.f32.mrb[0].mxu0
  %v1243 = vadd.f32 %v1092, %v1242
  %v1244 = vpop.f32.mrb[0].mxu0
  %v1245 = vadd.f32 %v1092, %v1244
  %1246 = vmatprep.mubr.f32.mxu0 %v79
  %1247 = vmatmul.mubr.f32.gmra.mrb[0].mxu0 %v78
  %v1248 = vpop.f32.mrb[0].mxu0
  %v1249 = vadd.f32 %v1097, %v1248
  %v1250 = vpop.f32.mrb[0].mxu0
  %v1251 = vadd.f32 %v1097, %v1250
  %1252 = vmatprep.mubr.f32.mxu0 %v87
  %1253 = vmatmul.mubr.f32.gmra.mrb[0].mxu0 %v86
  %v1254 = vpop.f32.mrb[0].mxu0
  %v1255 = vadd.f32 %v1102, %v1254
  %v1256 = vpop.f32.mrb[0].mxu0
  %v1257 = vadd.f32 %v1102, %v1256
  %1258 = vmatprep.mubr.f32.mxu0 %v95
  %1259 = vmatmul.mubr.f32.gmra.mrb[0].mxu0 %v94
  %v1260 = vpop.f32.mrb[0].mxu0
  %v1261 = vadd.f32 %v1107, %v1260
  %v1262 = vpop.f32.mrb[0].mxu0
  %v1263 = vadd.f32 %v1107, %v1262
  %1264 = vmatprep.mubr.f32.mxu0 %v103
  %1265 = vmatmul.mubr.f32.gmra.mrb[0].mxu0 %v102
  %v1266 = vpop.f32.mrb[0].mxu0
  %v1267 = vadd.f32 %v1112, %v1266
  %v1268 = vpop.f32.mrb[0].mxu0
  %v1269 = vadd.f32 %v1112, %v1268
  %1270 = vmatprep.mubr.f32.mxu0 %v111
  %1271 = vmatmul.mubr.f32.gmra.mrb[0].mxu0 %v110
  %v1272 = vpop.f32.mrb[0].mxu0
  %v1273 = vadd.f32 %v1117, %v1272
  %v1274 = vpop.f32.mrb[0].mxu0
  %v1275 = vadd.f32 %v1117, %v1274
  %1276 = vmatprep.mubr.f32.mxu0 %v119
  %1277 = vmatmul.mubr.f32.gmra.mrb[0].mxu0 %v118
  %v1278 = vpop.f32.mrb[0].mxu0
  %v1279 = vadd.f32 %v1122, %v1278
  %v1280 = vpop.f32.mrb[0].mxu0
  %v1281 = vadd.f32 %v1122, %v1280
  %1282 = vmatprep.mubr.f32.mxu0 %v127
  %1283 = vmatmul.mubr.f32.gmra.mrb[0].mxu0 %v126
  %v1284 = vpop.f32.mrb[0].mxu0
  %v1285 = vadd.f32 %v1127, %v1284
  %v1286 = vpop.f32.mrb[0].mxu0
  %v1287 = vadd.f32 %v1127, %v1286
  %1288 = vmatprep.mubr.f32.mxu0 %v135
  %1289 = vmatmul.mubr.f32.gmra.mrb[0].mxu0 %v134
  %v1290 = vpop.f32.mrb[0].mxu0
  %v1291 = vadd.f32 %v1132, %v1290
  %v1292 = vpop.f32.mrb[0].mxu0
  %v1293 = vadd.f32 %v1132, %v1292
  %1294 = vdwg.mxu0
  %1295 = vmatprep.subr.mxu0 %v367
  %1296 = vmatpush1.msra.mxu0 %v366
  %1297 = vmatprep.subr.mxu0 %v374
  %1298 = vmatpush1.msra.mxu0 %v373
  %1299 = vmatprep.subr.mxu0 %v381
  %1300 = vmatpush1.msra.mxu0 %v380
  %1301 = vmatprep.subr.mxu0 %v388
  %1302 = vmatpush1.msra.mxu0 %v387
  %1303 = vmatprep.subr.mxu0 %v395
  %1304 = vmatpush1.msra.mxu0 %v394
  %1305 = vmatprep.subr.mxu0 %v402
  %1306 = vmatpush1.msra.mxu0 %v401
  %1307 = vmatprep.subr.mxu0 %v409
  %1308 = vmatpush1.msra.mxu0 %v408
  %1309 = vmatprep.subr.mxu0 %v416
  %1310 = vmatpush1.msra.mxu0 %v415
  %1311 = vmatprep.subr.mxu0 %v423
  %1312 = vmatpush1.msra.mxu0 %v422
  %1313 = vmatprep.subr.mxu0 %v430
  %1314 = vmatpush1.msra.mxu0 %v429
  %1315 = vmatprep.subr.mxu0 %v437
  %1316 = vmatpush1.msra.mxu0 %v436
  %1317 = vmatprep.subr.mxu0 %v444
  %1318 = vmatpush1.msra.mxu0 %v443
  %1319 = vmatprep.subr.mxu0 %v451
  %1320 = vmatpush1.msra.mxu0 %v450
  %1321 = vmatprep.subr.mxu0 %v458
  %1322 = vmatpush1.msra.mxu0 %v457
  %1323 = vmatprep.subr.mxu0 %v465
  %1324 = vmatpush1.msra.mxu0 %v464
  %1325 = vmatprep.subr.mxu0 %v472
  %1326 = vmatpush1.msra.mxu0 %v471
  %1327 = vmatprep.subr.mxu0 %v479
  %1328 = vmatpush1.msra.mxu0 %v478
  %1329 = vmatprep.subr.mxu0 %v486
  %1330 = vmatpush1.msra.mxu0 %v485
  %1331 = vmatprep.subr.mxu0 %v493
  %1332 = vmatpush1.msra.mxu0 %v492
  %1333 = vmatprep.subr.mxu0 %v500
  %1334 = vmatpush1.msra.mxu0 %v499
  %1335 = vmatprep.subr.mxu0 %v507
  %1336 = vmatpush1.msra.mxu0 %v506
  %1337 = vmatprep.subr.mxu0 %v514
  %1338 = vmatpush1.msra.mxu0 %v513
  %1339 = vmatprep.subr.mxu0 %v521
  %1340 = vmatpush1.msra.mxu0 %v520
  %1341 = vmatprep.subr.mxu0 %v528
  %1342 = vmatpush1.msra.mxu0 %v527
  %1343 = vmatprep.subr.mxu0 %v535
  %1344 = vmatpush1.msra.mxu0 %v534
  %1345 = vmatprep.subr.mxu0 %v542
  %1346 = vmatpush1.msra.mxu0 %v541
  %1347 = vmatprep.subr.mxu0 %v549
  %1348 = vmatpush1.msra.mxu0 %v548
  %1349 = vmatprep.subr.mxu0 %v556
  %1350 = vmatpush1.msra.mxu0 %v555
  %1351 = vmatprep.subr.mxu0 %v563
  %1352 = vmatpush1.msra.mxu0 %v562
  %1353 = vmatprep.subr.mxu0 %v570
  %1354 = vmatpush1.msra.mxu0 %v569
  %1355 = vmatprep.subr.mxu0 %v577
  %1356 = vmatpush1.msra.mxu0 %v576
  %1357 = vmatprep.subr.mxu0 %v584
  %1358 = vmatpush1.msra.mxu0 %v583
  %1359 = vmatprep.mubr.f32.mxu0 %v17
  %1360 = vmatmul.mubr.f32.gmra.mrb[0].mxu0 %v16
  %v1361 = vpop.f32.mrb[0].mxu0
  %v1362 = vadd.f32 %v1201, %v1361
  %v1363 = vpop.f32.mrb[0].mxu0
  %v1364 = vadd.f32 %v1203, %v1363
  %1365 = vmatprep.mubr.f32.mxu0 %v25
  %1366 = vmatmul.mubr.f32.gmra.mrb[0].mxu0 %v24
  %v1367 = vpop.f32.mrb[0].mxu0
  %v1368 = vadd.f32 %v1207, %v1367
  %v1369 = vpop.f32.mrb[0].mxu0
  %v1370 = vadd.f32 %v1209, %v1369
  %1371 = vmatprep.mubr.f32.mxu0 %v33
  %1372 = vmatmul.mubr.f32.gmra.mrb[0].mxu0 %v32
  %v1373 = vpop.f32.mrb[0].mxu0
  %v1374 = vadd.f32 %v1213, %v1373
  %v1375 = vpop.f32.mrb[0].mxu0
  %v1376 = vadd.f32 %v1215, %v1375
  %1377 = vmatprep.mubr.f32.mxu0 %v41
  %1378 = vmatmul.mubr.f32.gmra.mrb[0].mxu0 %v40
  %v1379 = vpop.f32.mrb[0].mxu0
  %v1380 = vadd.f32 %v1219, %v1379
  %v1381 = vpop.f32.mrb[0].mxu0
  %v1382 = vadd.f32 %v1221, %v1381
  %1383 = vmatprep.mubr.f32.mxu0 %v49
  %1384 = vmatmul.mubr.f32.gmra.mrb[0].mxu0 %v48
  %v1385 = vpop.f32.mrb[0].mxu0
  %v1386 = vadd.f32 %v1225, %v1385
  %v1387 = vpop.f32.mrb[0].mxu0
  %v1388 = vadd.f32 %v1227, %v1387
  %1389 = vmatprep.mubr.f32.mxu0 %v57
  %1390 = vmatmul.mubr.f32.gmra.mrb[0].mxu0 %v56
  %v1391 = vpop.f32.mrb[0].mxu0
  %v1392 = vadd.f32 %v1231, %v1391
  %v1393 = vpop.f32.mrb[0].mxu0
  %v1394 = vadd.f32 %v1233, %v1393
  %1395 = vmatprep.mubr.f32.mxu0 %v65
  %1396 = vmatmul.mubr.f32.gmra.mrb[0].mxu0 %v64
  %v1397 = vpop.f32.mrb[0].mxu0
  %v1398 = vadd.f32 %v1237, %v1397
  %v1399 = vpop.f32.mrb[0].mxu0
  %v1400 = vadd.f32 %v1239, %v1399
  %1401 = vmatprep.mubr.f32.mxu0 %v73
  %1402 = vmatmul.mubr.f32.gmra.mrb[0].mxu0 %v72
  %v1403 = vpop.f32.mrb[0].mxu0
  %v1404 = vadd.f32 %v1243, %v1403
  %v1405 = vpop.f32.mrb[0].mxu0
  %v1406 = vadd.f32 %v1245, %v1405
  %1407 = vmatprep.mubr.f32.mxu0 %v81
  %1408 = vmatmul.mubr.f32.gmra.mrb[0].mxu0 %v80
  %v1409 = vpop.f32.mrb[0].mxu0
  %v1410 = vadd.f32 %v1249, %v1409
  %v1411 = vpop.f32.mrb[0].mxu0
  %v1412 = vadd.f32 %v1251, %v1411
  %1413 = vmatprep.mubr.f32.mxu0 %v89
  %1414 = vmatmul.mubr.f32.gmra.mrb[0].mxu0 %v88
  %v1415 = vpop.f32.mrb[0].mxu0
  %v1416 = vadd.f32 %v1255, %v1415
  %v1417 = vpop.f32.mrb[0].mxu0
  %v1418 = vadd.f32 %v1257, %v1417
  %1419 = vmatprep.mubr.f32.mxu0 %v97
  %1420 = vmatmul.mubr.f32.gmra.mrb[0].mxu0 %v96
  %v1421 = vpop.f32.mrb[0].mxu0
  %v1422 = vadd.f32 %v1261, %v1421
  %v1423 = vpop.f32.mrb[0].mxu0
  %v1424 = vadd.f32 %v1263, %v1423
  %1425 = vmatprep.mubr.f32.mxu0 %v105
  %1426 = vmatmul.mubr.f32.gmra.mrb[0].mxu0 %v104
  %v1427 = vpop.f32.mrb[0].mxu0
  %v1428 = vadd.f32 %v1267, %v1427
  %v1429 = vpop.f32.mrb[0].mxu0
  %v1430 = vadd.f32 %v1269, %v1429
  %1431 = vmatprep.mubr.f32.mxu0 %v113
  %1432 = vmatmul.mubr.f32.gmra.mrb[0].mxu0 %v112
  %v1433 = vpop.f32.mrb[0].mxu0
  %v1434 = vadd.f32 %v1273, %v1433
  %v1435 = vpop.f32.mrb[0].mxu0
  %v1436 = vadd.f32 %v1275, %v1435
  %1437 = vmatprep.mubr.f32.mxu0 %v121
  %1438 = vmatmul.mubr.f32.gmra.mrb[0].mxu0 %v120
  %v1439 = vpop.f32.mrb[0].mxu0
  %v1440 = vadd.f32 %v1279, %v1439
  %v1441 = vpop.f32.mrb[0].mxu0
  %v1442 = vadd.f32 %v1281, %v1441
  %1443 = vmatprep.mubr.f32.mxu0 %v129
  %1444 = vmatmul.mubr.f32.gmra.mrb[0].mxu0 %v128
  %v1445 = vpop.f32.mrb[0].mxu0
  %v1446 = vadd.f32 %v1285, %v1445
  %v1447 = vpop.f32.mrb[0].mxu0
  %v1448 = vadd.f32 %v1287, %v1447
  %1449 = vmatprep.mubr.f32.mxu0 %v137
  %1450 = vmatmul.mubr.f32.gmra.mrb[0].mxu0 %v136
  %v1451 = vpop.f32.mrb[0].mxu0
  %v1452 = vadd.f32 %v1291, %v1451
  %v1453 = vpop.f32.mrb[0].mxu0
  %v1454 = vadd.f32 %v1293, %v1453
  %1455 = vdwg.mxu0
  %1456 = vmatprep.subr.mxu0 %v591
  %1457 = vmatpush1.msra.mxu0 %v590
  %1458 = vmatprep.subr.mxu0 %v598
  %1459 = vmatpush1.msra.mxu0 %v597
  %1460 = vmatprep.subr.mxu0 %v605
  %1461 = vmatpush1.msra.mxu0 %v604
  %1462 = vmatprep.subr.mxu0 %v612
  %1463 = vmatpush1.msra.mxu0 %v611
  %1464 = vmatprep.subr.mxu0 %v619
  %1465 = vmatpush1.msra.mxu0 %v618
  %1466 = vmatprep.subr.mxu0 %v626
  %1467 = vmatpush1.msra.mxu0 %v625
  %1468 = vmatprep.subr.mxu0 %v633
  %1469 = vmatpush1.msra.mxu0 %v632
  %1470 = vmatprep.subr.mxu0 %v640
  %1471 = vmatpush1.msra.mxu0 %v639
  %1472 = vmatprep.subr.mxu0 %v647
  %1473 = vmatpush1.msra.mxu0 %v646
  %1474 = vmatprep.subr.mxu0 %v654
  %1475 = vmatpush1.msra.mxu0 %v653
  %1476 = vmatprep.subr.mxu0 %v661
  %1477 = vmatpush1.msra.mxu0 %v660
  %1478 = vmatprep.subr.mxu0 %v668
  %1479 = vmatpush1.msra.mxu0 %v667
  %1480 = vmatprep.subr.mxu0 %v675
  %1481 = vmatpush1.msra.mxu0 %v674
  %1482 = vmatprep.subr.mxu0 %v682
  %1483 = vmatpush1.msra.mxu0 %v681
  %1484 = vmatprep.subr.mxu0 %v689
  %1485 = vmatpush1.msra.mxu0 %v688
  %1486 = vmatprep.subr.mxu0 %v696
  %1487 = vmatpush1.msra.mxu0 %v695
  %1488 = vmatprep.subr.mxu0 %v703
  %1489 = vmatpush1.msra.mxu0 %v702
  %1490 = vmatprep.subr.mxu0 %v710
  %1491 = vmatpush1.msra.mxu0 %v709
  %1492 = vmatprep.subr.mxu0 %v717
  %1493 = vmatpush1.msra.mxu0 %v716
  %1494 = vmatprep.subr.mxu0 %v724
  %1495 = vmatpush1.msra.mxu0 %v723
  %1496 = vmatprep.subr.mxu0 %v731
  %1497 = vmatpush1.msra.mxu0 %v730
  %1498 = vmatprep.subr.mxu0 %v738
  %1499 = vmatpush1.msra.mxu0 %v737
  %1500 = vmatprep.subr.mxu0 %v745
  %1501 = vmatpush1.msra.mxu0 %v744
  %1502 = vmatprep.subr.mxu0 %v752
  %1503 = vmatpush1.msra.mxu0 %v751
  %1504 = vmatprep.subr.mxu0 %v759
  %1505 = vmatpush1.msra.mxu0 %v758
  %1506 = vmatprep.subr.mxu0 %v766
  %1507 = vmatpush1.msra.mxu0 %v765
  %1508 = vmatprep.subr.mxu0 %v773
  %1509 = vmatpush1.msra.mxu0 %v772
  %1510 = vmatprep.subr.mxu0 %v780
  %1511 = vmatpush1.msra.mxu0 %v779
  %1512 = vmatprep.subr.mxu0 %v787
  %1513 = vmatpush1.msra.mxu0 %v786
  %1514 = vmatprep.subr.mxu0 %v794
  %1515 = vmatpush1.msra.mxu0 %v793
  %1516 = vmatprep.subr.mxu0 %v801
  %1517 = vmatpush1.msra.mxu0 %v800
  %1518 = vmatprep.subr.mxu0 %v808
  %1519 = vmatpush1.msra.mxu0 %v807
  %1520 = vmatprep.mubr.f32.mxu0 %v19
  %1521 = vmatmul.mubr.f32.gmra.mrb[0].mxu0 %v18
  %v1522 = vpop.f32.mrb[0].mxu0
  %v1523 = vadd.f32 %v1362, %v1522
  %v1524 = vpop.f32.mrb[0].mxu0
  %v1525 = vadd.f32 %v1364, %v1524
  %1526 = vmatprep.mubr.f32.mxu0 %v27
  %1527 = vmatmul.mubr.f32.gmra.mrb[0].mxu0 %v26
  %v1528 = vpop.f32.mrb[0].mxu0
  %v1529 = vadd.f32 %v1368, %v1528
  %v1530 = vpop.f32.mrb[0].mxu0
  %v1531 = vadd.f32 %v1370, %v1530
  %1532 = vmatprep.mubr.f32.mxu0 %v35
  %1533 = vmatmul.mubr.f32.gmra.mrb[0].mxu0 %v34
  %v1534 = vpop.f32.mrb[0].mxu0
  %v1535 = vadd.f32 %v1374, %v1534
  %v1536 = vpop.f32.mrb[0].mxu0
  %v1537 = vadd.f32 %v1376, %v1536
  %1538 = vmatprep.mubr.f32.mxu0 %v43
  %1539 = vmatmul.mubr.f32.gmra.mrb[0].mxu0 %v42
  %v1540 = vpop.f32.mrb[0].mxu0
  %v1541 = vadd.f32 %v1380, %v1540
  %v1542 = vpop.f32.mrb[0].mxu0
  %v1543 = vadd.f32 %v1382, %v1542
  %1544 = vmatprep.mubr.f32.mxu0 %v51
  %1545 = vmatmul.mubr.f32.gmra.mrb[0].mxu0 %v50
  %v1546 = vpop.f32.mrb[0].mxu0
  %v1547 = vadd.f32 %v1386, %v1546
  %v1548 = vpop.f32.mrb[0].mxu0
  %v1549 = vadd.f32 %v1388, %v1548
  %1550 = vmatprep.mubr.f32.mxu0 %v59
  %1551 = vmatmul.mubr.f32.gmra.mrb[0].mxu0 %v58
  %v1552 = vpop.f32.mrb[0].mxu0
  %v1553 = vadd.f32 %v1392, %v1552
  %v1554 = vpop.f32.mrb[0].mxu0
  %v1555 = vadd.f32 %v1394, %v1554
  %1556 = vmatprep.mubr.f32.mxu0 %v67
  %1557 = vmatmul.mubr.f32.gmra.mrb[0].mxu0 %v66
  %v1558 = vpop.f32.mrb[0].mxu0
  %v1559 = vadd.f32 %v1398, %v1558
  %v1560 = vpop.f32.mrb[0].mxu0
  %v1561 = vadd.f32 %v1400, %v1560
  %1562 = vmatprep.mubr.f32.mxu0 %v75
  %1563 = vmatmul.mubr.f32.gmra.mrb[0].mxu0 %v74
  %v1564 = vpop.f32.mrb[0].mxu0
  %v1565 = vadd.f32 %v1404, %v1564
  %v1566 = vpop.f32.mrb[0].mxu0
  %v1567 = vadd.f32 %v1406, %v1566
  %1568 = vmatprep.mubr.f32.mxu0 %v83
  %1569 = vmatmul.mubr.f32.gmra.mrb[0].mxu0 %v82
  %v1570 = vpop.f32.mrb[0].mxu0
  %v1571 = vadd.f32 %v1410, %v1570
  %v1572 = vpop.f32.mrb[0].mxu0
  %v1573 = vadd.f32 %v1412, %v1572
  %1574 = vmatprep.mubr.f32.mxu0 %v91
  %1575 = vmatmul.mubr.f32.gmra.mrb[0].mxu0 %v90
  %v1576 = vpop.f32.mrb[0].mxu0
  %v1577 = vadd.f32 %v1416, %v1576
  %v1578 = vpop.f32.mrb[0].mxu0
  %v1579 = vadd.f32 %v1418, %v1578
  %1580 = vmatprep.mubr.f32.mxu0 %v99
  %1581 = vmatmul.mubr.f32.gmra.mrb[0].mxu0 %v98
  %v1582 = vpop.f32.mrb[0].mxu0
  %v1583 = vadd.f32 %v1422, %v1582
  %v1584 = vpop.f32.mrb[0].mxu0
  %v1585 = vadd.f32 %v1424, %v1584
  %1586 = vmatprep.mubr.f32.mxu0 %v107
  %1587 = vmatmul.mubr.f32.gmra.mrb[0].mxu0 %v106
  %v1588 = vpop.f32.mrb[0].mxu0
  %v1589 = vadd.f32 %v1428, %v1588
  %v1590 = vpop.f32.mrb[0].mxu0
  %v1591 = vadd.f32 %v1430, %v1590
  %1592 = vmatprep.mubr.f32.mxu0 %v115
  %1593 = vmatmul.mubr.f32.gmra.mrb[0].mxu0 %v114
  %v1594 = vpop.f32.mrb[0].mxu0
  %v1595 = vadd.f32 %v1434, %v1594
  %v1596 = vpop.f32.mrb[0].mxu0
  %v1597 = vadd.f32 %v1436, %v1596
  %1598 = vmatprep.mubr.f32.mxu0 %v123
  %1599 = vmatmul.mubr.f32.gmra.mrb[0].mxu0 %v122
  %v1600 = vpop.f32.mrb[0].mxu0
  %v1601 = vadd.f32 %v1440, %v1600
  %v1602 = vpop.f32.mrb[0].mxu0
  %v1603 = vadd.f32 %v1442, %v1602
  %1604 = vmatprep.mubr.f32.mxu0 %v131
  %1605 = vmatmul.mubr.f32.gmra.mrb[0].mxu0 %v130
  %v1606 = vpop.f32.mrb[0].mxu0
  %v1607 = vadd.f32 %v1446, %v1606
  %v1608 = vpop.f32.mrb[0].mxu0
  %v1609 = vadd.f32 %v1448, %v1608
  %1610 = vmatprep.mubr.f32.mxu0 %v139
  %1611 = vmatmul.mubr.f32.gmra.mrb[0].mxu0 %v138
  %v1612 = vpop.f32.mrb[0].mxu0
  %v1613 = vadd.f32 %v1452, %v1612
  %v1614 = vpop.f32.mrb[0].mxu0
  %v1615 = vadd.f32 %v1454, %v1614
  %1616 = vdwg.mxu0
  %1617 = vmatprep.subr.mxu0 %v815
  %1618 = vmatpush1.msra.mxu0 %v814
  %1619 = vmatprep.subr.mxu0 %v822
  %1620 = vmatpush1.msra.mxu0 %v821
  %1621 = vmatprep.subr.mxu0 %v829
  %1622 = vmatpush1.msra.mxu0 %v828
  %1623 = vmatprep.subr.mxu0 %v836
  %1624 = vmatpush1.msra.mxu0 %v835
  %1625 = vmatprep.subr.mxu0 %v843
  %1626 = vmatpush1.msra.mxu0 %v842
  %1627 = vmatprep.subr.mxu0 %v850
  %1628 = vmatpush1.msra.mxu0 %v849
  %1629 = vmatprep.subr.mxu0 %v857
  %1630 = vmatpush1.msra.mxu0 %v856
  %1631 = vmatprep.subr.mxu0 %v864
  %1632 = vmatpush1.msra.mxu0 %v863
  %1633 = vmatprep.subr.mxu0 %v871
  %1634 = vmatpush1.msra.mxu0 %v870
  %1635 = vmatprep.subr.mxu0 %v878
  %1636 = vmatpush1.msra.mxu0 %v877
  %1637 = vmatprep.subr.mxu0 %v885
  %1638 = vmatpush1.msra.mxu0 %v884
  %1639 = vmatprep.subr.mxu0 %v892
  %1640 = vmatpush1.msra.mxu0 %v891
  %1641 = vmatprep.subr.mxu0 %v899
  %1642 = vmatpush1.msra.mxu0 %v898
  %1643 = vmatprep.subr.mxu0 %v906
  %1644 = vmatpush1.msra.mxu0 %v905
  %1645 = vmatprep.subr.mxu0 %v913
  %1646 = vmatpush1.msra.mxu0 %v912
  %1647 = vmatprep.subr.mxu0 %v920
  %1648 = vmatpush1.msra.mxu0 %v919
  %1649 = vmatprep.subr.mxu0 %v927
  %1650 = vmatpush1.msra.mxu0 %v926
  %1651 = vmatprep.subr.mxu0 %v934
  %1652 = vmatpush1.msra.mxu0 %v933
  %1653 = vmatprep.subr.mxu0 %v941
  %1654 = vmatpush1.msra.mxu0 %v940
  %1655 = vmatprep.subr.mxu0 %v948
  %1656 = vmatpush1.msra.mxu0 %v947
  %1657 = vmatprep.subr.mxu0 %v955
  %1658 = vmatpush1.msra.mxu0 %v954
  %1659 = vmatprep.subr.mxu0 %v962
  %1660 = vmatpush1.msra.mxu0 %v961
  %1661 = vmatprep.subr.mxu0 %v969
  %1662 = vmatpush1.msra.mxu0 %v968
  %1663 = vmatprep.subr.mxu0 %v976
  %1664 = vmatpush1.msra.mxu0 %v975
  %1665 = vmatprep.subr.mxu0 %v983
  %1666 = vmatpush1.msra.mxu0 %v982
  %1667 = vmatprep.subr.mxu0 %v990
  %1668 = vmatpush1.msra.mxu0 %v989
  %1669 = vmatprep.subr.mxu0 %v997
  %1670 = vmatpush1.msra.mxu0 %v996
  %1671 = vmatprep.subr.mxu0 %v1004
  %1672 = vmatpush1.msra.mxu0 %v1003
  %1673 = vmatprep.subr.mxu0 %v1011
  %1674 = vmatpush1.msra.mxu0 %v1010
  %1675 = vmatprep.subr.mxu0 %v1018
  %1676 = vmatpush1.msra.mxu0 %v1017
  %1677 = vmatprep.subr.mxu0 %v1025
  %1678 = vmatpush1.msra.mxu0 %v1024
  %1679 = vmatprep.subr.mxu0 %v1032
  %1680 = vmatpush1.msra.mxu0 %v1031
  %1681 = vmatprep.mubr.f32.mxu0 %v21
  %1682 = vmatmul.mubr.f32.gmra.mrb[0].mxu0 %v20
  %v1683 = vpop.f32.mrb[0].mxu0
  %v1684 = vadd.f32 %v1523, %v1683
  %v1685 = vpop.f32.mrb[0].mxu0
  %v1686 = vadd.f32 %v1525, %v1685
  %1687 = vmatprep.mubr.f32.mxu0 %v29
  %1688 = vmatmul.mubr.f32.gmra.mrb[0].mxu0 %v28
  %v1689 = vpop.f32.mrb[0].mxu0
  %v1690 = vadd.f32 %v1529, %v1689
  %v1691 = vpop.f32.mrb[0].mxu0
  %v1692 = vadd.f32 %v1531, %v1691
  %1693 = vmatprep.mubr.f32.mxu0 %v37
  %1694 = vmatmul.mubr.f32.gmra.mrb[0].mxu0 %v36
  %v1695 = vpop.f32.mrb[0].mxu0
  %v1696 = vadd.f32 %v1535, %v1695
  %v1697 = vpop.f32.mrb[0].mxu0
  %v1698 = vadd.f32 %v1537, %v1697
  %1699 = vmatprep.mubr.f32.mxu0 %v45
  %1700 = vmatmul.mubr.f32.gmra.mrb[0].mxu0 %v44
  %v1701 = vpop.f32.mrb[0].mxu0
  %v1702 = vadd.f32 %v1541, %v1701
  %v1703 = vpop.f32.mrb[0].mxu0
  %v1704 = vadd.f32 %v1543, %v1703
  %1705 = vmatprep.mubr.f32.mxu0 %v53
  %1706 = vmatmul.mubr.f32.gmra.mrb[0].mxu0 %v52
  %v1707 = vpop.f32.mrb[0].mxu0
  %v1708 = vadd.f32 %v1547, %v1707
  %v1709 = vpop.f32.mrb[0].mxu0
  %v1710 = vadd.f32 %v1549, %v1709
  %1711 = vmatprep.mubr.f32.mxu0 %v61
  %1712 = vmatmul.mubr.f32.gmra.mrb[0].mxu0 %v60
  %v1713 = vpop.f32.mrb[0].mxu0
  %v1714 = vadd.f32 %v1553, %v1713
  %v1715 = vpop.f32.mrb[0].mxu0
  %v1716 = vadd.f32 %v1555, %v1715
  %1717 = vmatprep.mubr.f32.mxu0 %v69
  %1718 = vmatmul.mubr.f32.gmra.mrb[0].mxu0 %v68
  %v1719 = vpop.f32.mrb[0].mxu0
  %v1720 = vadd.f32 %v1559, %v1719
  %v1721 = vpop.f32.mrb[0].mxu0
  %v1722 = vadd.f32 %v1561, %v1721
  %1723 = vmatprep.mubr.f32.mxu0 %v77
  %1724 = vmatmul.mubr.f32.gmra.mrb[0].mxu0 %v76
  %v1725 = vpop.f32.mrb[0].mxu0
  %v1726 = vadd.f32 %v1565, %v1725
  %v1727 = vpop.f32.mrb[0].mxu0
  %v1728 = vadd.f32 %v1567, %v1727
  %1729 = vmatprep.mubr.f32.mxu0 %v85
  %1730 = vmatmul.mubr.f32.gmra.mrb[0].mxu0 %v84
  %v1731 = vpop.f32.mrb[0].mxu0
  %v1732 = vadd.f32 %v1571, %v1731
  %v1733 = vpop.f32.mrb[0].mxu0
  %v1734 = vadd.f32 %v1573, %v1733
  %1735 = vmatprep.mubr.f32.mxu0 %v93
  %1736 = vmatmul.mubr.f32.gmra.mrb[0].mxu0 %v92
  %v1737 = vpop.f32.mrb[0].mxu0
  %v1738 = vadd.f32 %v1577, %v1737
  %v1739 = vpop.f32.mrb[0].mxu0
  %v1740 = vadd.f32 %v1579, %v1739
  %1741 = vmatprep.mubr.f32.mxu0 %v101
  %1742 = vmatmul.mubr.f32.gmra.mrb[0].mxu0 %v100
  %v1743 = vpop.f32.mrb[0].mxu0
  %v1744 = vadd.f32 %v1583, %v1743
  %v1745 = vpop.f32.mrb[0].mxu0
  %v1746 = vadd.f32 %v1585, %v1745
  %1747 = vmatprep.mubr.f32.mxu0 %v109
  %1748 = vmatmul.mubr.f32.gmra.mrb[0].mxu0 %v108
  %v1749 = vpop.f32.mrb[0].mxu0
  %v1750 = vadd.f32 %v1589, %v1749
  %v1751 = vpop.f32.mrb[0].mxu0
  %v1752 = vadd.f32 %v1591, %v1751
  %1753 = vmatprep.mubr.f32.mxu0 %v117
  %1754 = vmatmul.mubr.f32.gmra.mrb[0].mxu0 %v116
  %v1755 = vpop.f32.mrb[0].mxu0
  %v1756 = vadd.f32 %v1595, %v1755
  %v1757 = vpop.f32.mrb[0].mxu0
  %v1758 = vadd.f32 %v1597, %v1757
  %1759 = vmatprep.mubr.f32.mxu0 %v125
  %1760 = vmatmul.mubr.f32.gmra.mrb[0].mxu0 %v124
  %v1761 = vpop.f32.mrb[0].mxu0
  %v1762 = vadd.f32 %v1601, %v1761
  %v1763 = vpop.f32.mrb[0].mxu0
  %v1764 = vadd.f32 %v1603, %v1763
  %1765 = vmatprep.mubr.f32.mxu0 %v133
  %1766 = vmatmul.mubr.f32.gmra.mrb[0].mxu0 %v132
  %v1767 = vpop.f32.mrb[0].mxu0
  %v1768 = vadd.f32 %v1607, %v1767
  %v1769 = vpop.f32.mrb[0].mxu0
  %v1770 = vadd.f32 %v1609, %v1769
  %1771 = vmatprep.mubr.f32.mxu0 %v141
  %1772 = vmatmul.mubr.f32.gmra.mrb[0].mxu0 %v140
  %v1773 = vpop.f32.mrb[0].mxu0
  %v1774 = vadd.f32 %v1613, %v1773
  %v1775 = vpop.f32.mrb[0].mxu0
  %v1776 = vadd.f32 %v1615, %v1775
  %1777 = vdwg.mxu0
  %1778 = vmatprep.subr.mxu0 %v145
  %1779 = vmatpush1.msra.mxu0 %v144
  %1780 = vmatprep.subr.mxu0 %v152
  %1781 = vmatpush1.msra.mxu0 %v151
  %1782 = vmatprep.subr.mxu0 %v159
  %1783 = vmatpush1.msra.mxu0 %v158
  %1784 = vmatprep.subr.mxu0 %v166
  %1785 = vmatpush1.msra.mxu0 %v165
  %1786 = vmatprep.subr.mxu0 %v173
  %1787 = vmatpush1.msra.mxu0 %v172
  %1788 = vmatprep.subr.mxu0 %v180
  %1789 = vmatpush1.msra.mxu0 %v179
  %1790 = vmatprep.subr.mxu0 %v187
  %1791 = vmatpush1.msra.mxu0 %v186
  %1792 = vmatprep.subr.mxu0 %v194
  %1793 = vmatpush1.msra.mxu0 %v193
  %1794 = vmatprep.subr.mxu0 %v201
  %1795 = vmatpush1.msra.mxu0 %v200
  %1796 = vmatprep.subr.mxu0 %v208
  %1797 = vmatpush1.msra.mxu0 %v207
  %1798 = vmatprep.subr.mxu0 %v215
  %1799 = vmatpush1.msra.mxu0 %v214
  %1800 = vmatprep.subr.mxu0 %v222
  %1801 = vmatpush1.msra.mxu0 %v221
  %1802 = vmatprep.subr.mxu0 %v229
  %1803 = vmatpush1.msra.mxu0 %v228
  %1804 = vmatprep.subr.mxu0 %v236
  %1805 = vmatpush1.msra.mxu0 %v235
  %1806 = vmatprep.subr.mxu0 %v243
  %1807 = vmatpush1.msra.mxu0 %v242
  %1808 = vmatprep.subr.mxu0 %v250
  %1809 = vmatpush1.msra.mxu0 %v249
  %1810 = vmatprep.subr.mxu0 %v257
  %1811 = vmatpush1.msra.mxu0 %v256
  %1812 = vmatprep.subr.mxu0 %v264
  %1813 = vmatpush1.msra.mxu0 %v263
  %1814 = vmatprep.subr.mxu0 %v271
  %1815 = vmatpush1.msra.mxu0 %v270
  %1816 = vmatprep.subr.mxu0 %v278
  %1817 = vmatpush1.msra.mxu0 %v277
  %1818 = vmatprep.subr.mxu0 %v285
  %1819 = vmatpush1.msra.mxu0 %v284
  %1820 = vmatprep.subr.mxu0 %v292
  %1821 = vmatpush1.msra.mxu0 %v291
  %1822 = vmatprep.subr.mxu0 %v299
  %1823 = vmatpush1.msra.mxu0 %v298
  %1824 = vmatprep.subr.mxu0 %v306
  %1825 = vmatpush1.msra.mxu0 %v305
  %1826 = vmatprep.subr.mxu0 %v313
  %1827 = vmatpush1.msra.mxu0 %v312
  %1828 = vmatprep.subr.mxu0 %v320
  %1829 = vmatpush1.msra.mxu0 %v319
  %1830 = vmatprep.subr.mxu0 %v327
  %1831 = vmatpush1.msra.mxu0 %v326
  %1832 = vmatprep.subr.mxu0 %v334
  %1833 = vmatpush1.msra.mxu0 %v333
  %1834 = vmatprep.subr.mxu0 %v341
  %1835 = vmatpush1.msra.mxu0 %v340
  %1836 = vmatprep.subr.mxu0 %v348
  %1837 = vmatpush1.msra.mxu0 %v347
  %1838 = vmatprep.subr.mxu0 %v355
  %1839 = vmatpush1.msra.mxu0 %v354
  %1840 = vmatprep.subr.mxu0 %v362
  %1841 = vmatpush1.msra.mxu0 %v361
  %1842 = vmatprep.mubr.f32.mxu0 %v15
  %1843 = vmatmul.mubr.f32.gmra.mrb[0].mxu0 %v14
  %v1844 = vpop.f32.mrb[0].mxu0
  %v1845 = vadd.f32 %v1057, %v1844
  %v1846 = vpop.f32.mrb[0].mxu0
  %v1847 = vadd.f32 %v1057, %v1846
  %1848 = vmatprep.mubr.f32.mxu0 %v23
  %1849 = vmatmul.mubr.f32.gmra.mrb[0].mxu0 %v22
  %v1850 = vpop.f32.mrb[0].mxu0
  %v1851 = vadd.f32 %v1062, %v1850
  %v1852 = vpop.f32.mrb[0].mxu0
  %v1853 = vadd.f32 %v1062, %v1852
  %1854 = vmatprep.mubr.f32.mxu0 %v31
  %1855 = vmatmul.mubr.f32.gmra.mrb[0].mxu0 %v30
  %v1856 = vpop.f32.mrb[0].mxu0
  %v1857 = vadd.f32 %v1067, %v1856
  %v1858 = vpop.f32.mrb[0].mxu0
  %v1859 = vadd.f32 %v1067, %v1858
  %1860 = vmatprep.mubr.f32.mxu0 %v39
  %1861 = vmatmul.mubr.f32.gmra.mrb[0].mxu0 %v38
  %v1862 = vpop.f32.mrb[0].mxu0
  %v1863 = vadd.f32 %v1072, %v1862
  %v1864 = vpop.f32.mrb[0].mxu0
  %v1865 = vadd.f32 %v1072, %v1864
  %1866 = vmatprep.mubr.f32.mxu0 %v47
  %1867 = vmatmul.mubr.f32.gmra.mrb[0].mxu0 %v46
  %v1868 = vpop.f32.mrb[0].mxu0
  %v1869 = vadd.f32 %v1077, %v1868
  %v1870 = vpop.f32.mrb[0].mxu0
  %v1871 = vadd.f32 %v1077, %v1870
  %1872 = vmatprep.mubr.f32.mxu0 %v55
  %1873 = vmatmul.mubr.f32.gmra.mrb[0].mxu0 %v54
  %v1874 = vpop.f32.mrb[0].mxu0
  %v1875 = vadd.f32 %v1082, %v1874
  %v1876 = vpop.f32.mrb[0].mxu0
  %v1877 = vadd.f32 %v1082, %v1876
  %1878 = vmatprep.mubr.f32.mxu0 %v63
  %1879 = vmatmul.mubr.f32.gmra.mrb[0].mxu0 %v62
  %v1880 = vpop.f32.mrb[0].mxu0
  %v1881 = vadd.f32 %v1087, %v1880
  %v1882 = vpop.f32.mrb[0].mxu0
  %v1883 = vadd.f32 %v1087, %v1882
  %1884 = vmatprep.mubr.f32.mxu0 %v71
  %1885 = vmatmul.mubr.f32.gmra.mrb[0].mxu0 %v70
  %v1886 = vpop.f32.mrb[0].mxu0
  %v1887 = vadd.f32 %v1092, %v1886
  %v1888 = vpop.f32.mrb[0].mxu0
  %v1889 = vadd.f32 %v1092, %v1888
  %1890 = vmatprep.mubr.f32.mxu0 %v79
  %1891 = vmatmul.mubr.f32.gmra.mrb[0].mxu0 %v78
  %v1892 = vpop.f32.mrb[0].mxu0
  %v1893 = vadd.f32 %v1097, %v1892
  %v1894 = vpop.f32.mrb[0].mxu0
  %v1895 = vadd.f32 %v1097, %v1894
  %1896 = vmatprep.mubr.f32.mxu0 %v87
  %1897 = vmatmul.mubr.f32.gmra.mrb[0].mxu0 %v86
  %v1898 = vpop.f32.mrb[0].mxu0
  %v1899 = vadd.f32 %v1102, %v1898
  %v1900 = vpop.f32.mrb[0].mxu0
  %v1901 = vadd.f32 %v1102, %v1900
  %1902 = vmatprep.mubr.f32.mxu0 %v95
  %1903 = vmatmul.mubr.f32.gmra.mrb[0].mxu0 %v94
  %v1904 = vpop.f32.mrb[0].mxu0
  %v1905 = vadd.f32 %v1107, %v1904
  %v1906 = vpop.f32.mrb[0].mxu0
  %v1907 = vadd.f32 %v1107, %v1906
  %1908 = vmatprep.mubr.f32.mxu0 %v103
  %1909 = vmatmul.mubr.f32.gmra.mrb[0].mxu0 %v102
  %v1910 = vpop.f32.mrb[0].mxu0
  %v1911 = vadd.f32 %v1112, %v1910
  %v1912 = vpop.f32.mrb[0].mxu0
  %v1913 = vadd.f32 %v1112, %v1912
  %1914 = vmatprep.mubr.f32.mxu0 %v111
  %1915 = vmatmul.mubr.f32.gmra.mrb[0].mxu0 %v110
  %v1916 = vpop.f32.mrb[0].mxu0
  %v1917 = vadd.f32 %v1117, %v1916
  %v1918 = vpop.f32.mrb[0].mxu0
  %v1919 = vadd.f32 %v1117, %v1918
  %1920 = vmatprep.mubr.f32.mxu0 %v119
  %1921 = vmatmul.mubr.f32.gmra.mrb[0].mxu0 %v118
  %v1922 = vpop.f32.mrb[0].mxu0
  %v1923 = vadd.f32 %v1122, %v1922
  %v1924 = vpop.f32.mrb[0].mxu0
  %v1925 = vadd.f32 %v1122, %v1924
  %1926 = vmatprep.mubr.f32.mxu0 %v127
  %1927 = vmatmul.mubr.f32.gmra.mrb[0].mxu0 %v126
  %v1928 = vpop.f32.mrb[0].mxu0
  %v1929 = vadd.f32 %v1127, %v1928
  %v1930 = vpop.f32.mrb[0].mxu0
  %v1931 = vadd.f32 %v1127, %v1930
  %1932 = vmatprep.mubr.f32.mxu0 %v135
  %1933 = vmatmul.mubr.f32.gmra.mrb[0].mxu0 %v134
  %v1934 = vpop.f32.mrb[0].mxu0
  %v1935 = vadd.f32 %v1132, %v1934
  %v1936 = vpop.f32.mrb[0].mxu0
  %v1937 = vadd.f32 %v1132, %v1936
  %1938 = vdwg.mxu0
  %1939 = vmatprep.subr.mxu0 %v369
  %1940 = vmatpush1.msra.mxu0 %v368
  %1941 = vmatprep.subr.mxu0 %v376
  %1942 = vmatpush1.msra.mxu0 %v375
  %1943 = vmatprep.subr.mxu0 %v383
  %1944 = vmatpush1.msra.mxu0 %v382
  %1945 = vmatprep.subr.mxu0 %v390
  %1946 = vmatpush1.msra.mxu0 %v389
  %1947 = vmatprep.subr.mxu0 %v397
  %1948 = vmatpush1.msra.mxu0 %v396
  %1949 = vmatprep.subr.mxu0 %v404
  %1950 = vmatpush1.msra.mxu0 %v403
  %1951 = vmatprep.subr.mxu0 %v411
  %1952 = vmatpush1.msra.mxu0 %v410
  %1953 = vmatprep.subr.mxu0 %v418
  %1954 = vmatpush1.msra.mxu0 %v417
  %1955 = vmatprep.subr.mxu0 %v425
  %1956 = vmatpush1.msra.mxu0 %v424
  %1957 = vmatprep.subr.mxu0 %v432
  %1958 = vmatpush1.msra.mxu0 %v431
  %1959 = vmatprep.subr.mxu0 %v439
  %1960 = vmatpush1.msra.mxu0 %v438
  %1961 = vmatprep.subr.mxu0 %v446
  %1962 = vmatpush1.msra.mxu0 %v445
  %1963 = vmatprep.subr.mxu0 %v453
  %1964 = vmatpush1.msra.mxu0 %v452
  %1965 = vmatprep.subr.mxu0 %v460
  %1966 = vmatpush1.msra.mxu0 %v459
  %1967 = vmatprep.subr.mxu0 %v467
  %1968 = vmatpush1.msra.mxu0 %v466
  %1969 = vmatprep.subr.mxu0 %v474
  %1970 = vmatpush1.msra.mxu0 %v473
  %1971 = vmatprep.subr.mxu0 %v481
  %1972 = vmatpush1.msra.mxu0 %v480
  %1973 = vmatprep.subr.mxu0 %v488
  %1974 = vmatpush1.msra.mxu0 %v487
  %1975 = vmatprep.subr.mxu0 %v495
  %1976 = vmatpush1.msra.mxu0 %v494
  %1977 = vmatprep.subr.mxu0 %v502
  %1978 = vmatpush1.msra.mxu0 %v501
  %1979 = vmatprep.subr.mxu0 %v509
  %1980 = vmatpush1.msra.mxu0 %v508
  %1981 = vmatprep.subr.mxu0 %v516
  %1982 = vmatpush1.msra.mxu0 %v515
  %1983 = vmatprep.subr.mxu0 %v523
  %1984 = vmatpush1.msra.mxu0 %v522
  %1985 = vmatprep.subr.mxu0 %v530
  %1986 = vmatpush1.msra.mxu0 %v529
  %1987 = vmatprep.subr.mxu0 %v537
  %1988 = vmatpush1.msra.mxu0 %v536
  %1989 = vmatprep.subr.mxu0 %v544
  %1990 = vmatpush1.msra.mxu0 %v543
  %1991 = vmatprep.subr.mxu0 %v551
  %1992 = vmatpush1.msra.mxu0 %v550
  %1993 = vmatprep.subr.mxu0 %v558
  %1994 = vmatpush1.msra.mxu0 %v557
  %1995 = vmatprep.subr.mxu0 %v565
  %1996 = vmatpush1.msra.mxu0 %v564
  %1997 = vmatprep.subr.mxu0 %v572
  %1998 = vmatpush1.msra.mxu0 %v571
  %1999 = vmatprep.subr.mxu0 %v579
  %2000 = vmatpush1.msra.mxu0 %v578
  %2001 = vmatprep.subr.mxu0 %v586
  %2002 = vmatpush1.msra.mxu0 %v585
  %2003 = vmatprep.mubr.f32.mxu0 %v17
  %2004 = vmatmul.mubr.f32.gmra.mrb[0].mxu0 %v16
  %v2005 = vpop.f32.mrb[0].mxu0
  %v2006 = vadd.f32 %v1845, %v2005
  %v2007 = vpop.f32.mrb[0].mxu0
  %v2008 = vadd.f32 %v1847, %v2007
  %2009 = vmatprep.mubr.f32.mxu0 %v25
  %2010 = vmatmul.mubr.f32.gmra.mrb[0].mxu0 %v24
  %v2011 = vpop.f32.mrb[0].mxu0
  %v2012 = vadd.f32 %v1851, %v2011
  %v2013 = vpop.f32.mrb[0].mxu0
  %v2014 = vadd.f32 %v1853, %v2013
  %2015 = vmatprep.mubr.f32.mxu0 %v33
  %2016 = vmatmul.mubr.f32.gmra.mrb[0].mxu0 %v32
  %v2017 = vpop.f32.mrb[0].mxu0
  %v2018 = vadd.f32 %v1857, %v2017
  %v2019 = vpop.f32.mrb[0].mxu0
  %v2020 = vadd.f32 %v1859, %v2019
  %2021 = vmatprep.mubr.f32.mxu0 %v41
  %2022 = vmatmul.mubr.f32.gmra.mrb[0].mxu0 %v40
  %v2023 = vpop.f32.mrb[0].mxu0
  %v2024 = vadd.f32 %v1863, %v2023
  %v2025 = vpop.f32.mrb[0].mxu0
  %v2026 = vadd.f32 %v1865, %v2025
  %2027 = vmatprep.mubr.f32.mxu0 %v49
  %2028 = vmatmul.mubr.f32.gmra.mrb[0].mxu0 %v48
  %v2029 = vpop.f32.mrb[0].mxu0
  %v2030 = vadd.f32 %v1869, %v2029
  %v2031 = vpop.f32.mrb[0].mxu0
  %v2032 = vadd.f32 %v1871, %v2031
  %2033 = vmatprep.mubr.f32.mxu0 %v57
  %2034 = vmatmul.mubr.f32.gmra.mrb[0].mxu0 %v56
  %v2035 = vpop.f32.mrb[0].mxu0
  %v2036 = vadd.f32 %v1875, %v2035
  %v2037 = vpop.f32.mrb[0].mxu0
  %v2038 = vadd.f32 %v1877, %v2037
  %2039 = vmatprep.mubr.f32.mxu0 %v65
  %2040 = vmatmul.mubr.f32.gmra.mrb[0].mxu0 %v64
  %v2041 = vpop.f32.mrb[0].mxu0
  %v2042 = vadd.f32 %v1881, %v2041
  %v2043 = vpop.f32.mrb[0].mxu0
  %v2044 = vadd.f32 %v1883, %v2043
  %2045 = vmatprep.mubr.f32.mxu0 %v73
  %2046 = vmatmul.mubr.f32.gmra.mrb[0].mxu0 %v72
  %v2047 = vpop.f32.mrb[0].mxu0
  %v2048 = vadd.f32 %v1887, %v2047
  %v2049 = vpop.f32.mrb[0].mxu0
  %v2050 = vadd.f32 %v1889, %v2049
  %2051 = vmatprep.mubr.f32.mxu0 %v81
  %2052 = vmatmul.mubr.f32.gmra.mrb[0].mxu0 %v80
  %v2053 = vpop.f32.mrb[0].mxu0
  %v2054 = vadd.f32 %v1893, %v2053
  %v2055 = vpop.f32.mrb[0].mxu0
  %v2056 = vadd.f32 %v1895, %v2055
  %2057 = vmatprep.mubr.f32.mxu0 %v89
  %2058 = vmatmul.mubr.f32.gmra.mrb[0].mxu0 %v88
  %v2059 = vpop.f32.mrb[0].mxu0
  %v2060 = vadd.f32 %v1899, %v2059
  %v2061 = vpop.f32.mrb[0].mxu0
  %v2062 = vadd.f32 %v1901, %v2061
  %2063 = vmatprep.mubr.f32.mxu0 %v97
  %2064 = vmatmul.mubr.f32.gmra.mrb[0].mxu0 %v96
  %v2065 = vpop.f32.mrb[0].mxu0
  %v2066 = vadd.f32 %v1905, %v2065
  %v2067 = vpop.f32.mrb[0].mxu0
  %v2068 = vadd.f32 %v1907, %v2067
  %2069 = vmatprep.mubr.f32.mxu0 %v105
  %2070 = vmatmul.mubr.f32.gmra.mrb[0].mxu0 %v104
  %v2071 = vpop.f32.mrb[0].mxu0
  %v2072 = vadd.f32 %v1911, %v2071
  %v2073 = vpop.f32.mrb[0].mxu0
  %v2074 = vadd.f32 %v1913, %v2073
  %2075 = vmatprep.mubr.f32.mxu0 %v113
  %2076 = vmatmul.mubr.f32.gmra.mrb[0].mxu0 %v112
  %v2077 = vpop.f32.mrb[0].mxu0
  %v2078 = vadd.f32 %v1917, %v2077
  %v2079 = vpop.f32.mrb[0].mxu0
  %v2080 = vadd.f32 %v1919, %v2079
  %2081 = vmatprep.mubr.f32.mxu0 %v121
  %2082 = vmatmul.mubr.f32.gmra.mrb[0].mxu0 %v120
  %v2083 = vpop.f32.mrb[0].mxu0
  %v2084 = vadd.f32 %v1923, %v2083
  %v2085 = vpop.f32.mrb[0].mxu0
  %v2086 = vadd.f32 %v1925, %v2085
  %2087 = vmatprep.mubr.f32.mxu0 %v129
  %2088 = vmatmul.mubr.f32.gmra.mrb[0].mxu0 %v128
  %v2089 = vpop.f32.mrb[0].mxu0
  %v2090 = vadd.f32 %v1929, %v2089
  %v2091 = vpop.f32.mrb[0].mxu0
  %v2092 = vadd.f32 %v1931, %v2091
  %2093 = vmatprep.mubr.f32.mxu0 %v137
  %2094 = vmatmul.mubr.f32.gmra.mrb[0].mxu0 %v136
  %v2095 = vpop.f32.mrb[0].mxu0
  %v2096 = vadd.f32 %v1935, %v2095
  %v2097 = vpop.f32.mrb[0].mxu0
  %v2098 = vadd.f32 %v1937, %v2097
  %2099 = vdwg.mxu0
  %2100 = vmatprep.subr.mxu0 %v593
  %2101 = vmatpush1.msra.mxu0 %v592
  %2102 = vmatprep.subr.mxu0 %v600
  %2103 = vmatpush1.msra.mxu0 %v599
  %2104 = vmatprep.subr.mxu0 %v607
  %2105 = vmatpush1.msra.mxu0 %v606
  %2106 = vmatprep.subr.mxu0 %v614
  %2107 = vmatpush1.msra.mxu0 %v613
  %2108 = vmatprep.subr.mxu0 %v621
  %2109 = vmatpush1.msra.mxu0 %v620
  %2110 = vmatprep.subr.mxu0 %v628
  %2111 = vmatpush1.msra.mxu0 %v627
  %2112 = vmatprep.subr.mxu0 %v635
  %2113 = vmatpush1.msra.mxu0 %v634
  %2114 = vmatprep.subr.mxu0 %v642
  %2115 = vmatpush1.msra.mxu0 %v641
  %2116 = vmatprep.subr.mxu0 %v649
  %2117 = vmatpush1.msra.mxu0 %v648
  %2118 = vmatprep.subr.mxu0 %v656
  %2119 = vmatpush1.msra.mxu0 %v655
  %2120 = vmatprep.subr.mxu0 %v663
  %2121 = vmatpush1.msra.mxu0 %v662
  %2122 = vmatprep.subr.mxu0 %v670
  %2123 = vmatpush1.msra.mxu0 %v669
  %2124 = vmatprep.subr.mxu0 %v677
  %2125 = vmatpush1.msra.mxu0 %v676
  %2126 = vmatprep.subr.mxu0 %v684
  %2127 = vmatpush1.msra.mxu0 %v683
  %2128 = vmatprep.subr.mxu0 %v691
  %2129 = vmatpush1.msra.mxu0 %v690
  %2130 = vmatprep.subr.mxu0 %v698
  %2131 = vmatpush1.msra.mxu0 %v697
  %2132 = vmatprep.subr.mxu0 %v705
  %2133 = vmatpush1.msra.mxu0 %v704
  %2134 = vmatprep.subr.mxu0 %v712
  %2135 = vmatpush1.msra.mxu0 %v711
  %2136 = vmatprep.subr.mxu0 %v719
  %2137 = vmatpush1.msra.mxu0 %v718
  %2138 = vmatprep.subr.mxu0 %v726
  %2139 = vmatpush1.msra.mxu0 %v725
  %2140 = vmatprep.subr.mxu0 %v733
  %2141 = vmatpush1.msra.mxu0 %v732
  %2142 = vmatprep.subr.mxu0 %v740
  %2143 = vmatpush1.msra.mxu0 %v739
  %2144 = vmatprep.subr.mxu0 %v747
  %2145 = vmatpush1.msra.mxu0 %v746
  %2146 = vmatprep.subr.mxu0 %v754
  %2147 = vmatpush1.msra.mxu0 %v753
  %2148 = vmatprep.subr.mxu0 %v761
  %2149 = vmatpush1.msra.mxu0 %v760
  %2150 = vmatprep.subr.mxu0 %v768
  %2151 = vmatpush1.msra.mxu0 %v767
  %2152 = vmatprep.subr.mxu0 %v775
  %2153 = vmatpush1.msra.mxu0 %v774
  %2154 = vmatprep.subr.mxu0 %v782
  %2155 = vmatpush1.msra.mxu0 %v781
  %2156 = vmatprep.subr.mxu0 %v789
  %2157 = vmatpush1.msra.mxu0 %v788
  %2158 = vmatprep.subr.mxu0 %v796
  %2159 = vmatpush1.msra.mxu0 %v795
  %2160 = vmatprep.subr.mxu0 %v803
  %2161 = vmatpush1.msra.mxu0 %v802
  %2162 = vmatprep.subr.mxu0 %v810
  %2163 = vmatpush1.msra.mxu0 %v809
  %2164 = vmatprep.mubr.f32.mxu0 %v19
  %2165 = vmatmul.mubr.f32.gmra.mrb[0].mxu0 %v18
  %v2166 = vpop.f32.mrb[0].mxu0
  %v2167 = vadd.f32 %v2006, %v2166
  %v2168 = vpop.f32.mrb[0].mxu0
  %v2169 = vadd.f32 %v2008, %v2168
  %2170 = vmatprep.mubr.f32.mxu0 %v27
  %2171 = vmatmul.mubr.f32.gmra.mrb[0].mxu0 %v26
  %v2172 = vpop.f32.mrb[0].mxu0
  %v2173 = vadd.f32 %v2012, %v2172
  %v2174 = vpop.f32.mrb[0].mxu0
  %v2175 = vadd.f32 %v2014, %v2174
  %2176 = vmatprep.mubr.f32.mxu0 %v35
  %2177 = vmatmul.mubr.f32.gmra.mrb[0].mxu0 %v34
  %v2178 = vpop.f32.mrb[0].mxu0
  %v2179 = vadd.f32 %v2018, %v2178
  %v2180 = vpop.f32.mrb[0].mxu0
  %v2181 = vadd.f32 %v2020, %v2180
  %2182 = vmatprep.mubr.f32.mxu0 %v43
  %2183 = vmatmul.mubr.f32.gmra.mrb[0].mxu0 %v42
  %v2184 = vpop.f32.mrb[0].mxu0
  %v2185 = vadd.f32 %v2024, %v2184
  %v2186 = vpop.f32.mrb[0].mxu0
  %v2187 = vadd.f32 %v2026, %v2186
  %2188 = vmatprep.mubr.f32.mxu0 %v51
  %2189 = vmatmul.mubr.f32.gmra.mrb[0].mxu0 %v50
  %v2190 = vpop.f32.mrb[0].mxu0
  %v2191 = vadd.f32 %v2030, %v2190
  %v2192 = vpop.f32.mrb[0].mxu0
  %v2193 = vadd.f32 %v2032, %v2192
  %2194 = vmatprep.mubr.f32.mxu0 %v59
  %2195 = vmatmul.mubr.f32.gmra.mrb[0].mxu0 %v58
  %v2196 = vpop.f32.mrb[0].mxu0
  %v2197 = vadd.f32 %v2036, %v2196
  %v2198 = vpop.f32.mrb[0].mxu0
  %v2199 = vadd.f32 %v2038, %v2198
  %2200 = vmatprep.mubr.f32.mxu0 %v67
  %2201 = vmatmul.mubr.f32.gmra.mrb[0].mxu0 %v66
  %v2202 = vpop.f32.mrb[0].mxu0
  %v2203 = vadd.f32 %v2042, %v2202
  %v2204 = vpop.f32.mrb[0].mxu0
  %v2205 = vadd.f32 %v2044, %v2204
  %2206 = vmatprep.mubr.f32.mxu0 %v75
  %2207 = vmatmul.mubr.f32.gmra.mrb[0].mxu0 %v74
  %v2208 = vpop.f32.mrb[0].mxu0
  %v2209 = vadd.f32 %v2048, %v2208
  %v2210 = vpop.f32.mrb[0].mxu0
  %v2211 = vadd.f32 %v2050, %v2210
  %2212 = vmatprep.mubr.f32.mxu0 %v83
  %2213 = vmatmul.mubr.f32.gmra.mrb[0].mxu0 %v82
  %v2214 = vpop.f32.mrb[0].mxu0
  %v2215 = vadd.f32 %v2054, %v2214
  %v2216 = vpop.f32.mrb[0].mxu0
  %v2217 = vadd.f32 %v2056, %v2216
  %2218 = vmatprep.mubr.f32.mxu0 %v91
  %2219 = vmatmul.mubr.f32.gmra.mrb[0].mxu0 %v90
  %v2220 = vpop.f32.mrb[0].mxu0
  %v2221 = vadd.f32 %v2060, %v2220
  %v2222 = vpop.f32.mrb[0].mxu0
  %v2223 = vadd.f32 %v2062, %v2222
  %2224 = vmatprep.mubr.f32.mxu0 %v99
  %2225 = vmatmul.mubr.f32.gmra.mrb[0].mxu0 %v98
  %v2226 = vpop.f32.mrb[0].mxu0
  %v2227 = vadd.f32 %v2066, %v2226
  %v2228 = vpop.f32.mrb[0].mxu0
  %v2229 = vadd.f32 %v2068, %v2228
  %2230 = vmatprep.mubr.f32.mxu0 %v107
  %2231 = vmatmul.mubr.f32.gmra.mrb[0].mxu0 %v106
  %v2232 = vpop.f32.mrb[0].mxu0
  %v2233 = vadd.f32 %v2072, %v2232
  %v2234 = vpop.f32.mrb[0].mxu0
  %v2235 = vadd.f32 %v2074, %v2234
  %2236 = vmatprep.mubr.f32.mxu0 %v115
  %2237 = vmatmul.mubr.f32.gmra.mrb[0].mxu0 %v114
  %v2238 = vpop.f32.mrb[0].mxu0
  %v2239 = vadd.f32 %v2078, %v2238
  %v2240 = vpop.f32.mrb[0].mxu0
  %v2241 = vadd.f32 %v2080, %v2240
  %2242 = vmatprep.mubr.f32.mxu0 %v123
  %2243 = vmatmul.mubr.f32.gmra.mrb[0].mxu0 %v122
  %v2244 = vpop.f32.mrb[0].mxu0
  %v2245 = vadd.f32 %v2084, %v2244
  %v2246 = vpop.f32.mrb[0].mxu0
  %v2247 = vadd.f32 %v2086, %v2246
  %2248 = vmatprep.mubr.f32.mxu0 %v131
  %2249 = vmatmul.mubr.f32.gmra.mrb[0].mxu0 %v130
  %v2250 = vpop.f32.mrb[0].mxu0
  %v2251 = vadd.f32 %v2090, %v2250
  %v2252 = vpop.f32.mrb[0].mxu0
  %v2253 = vadd.f32 %v2092, %v2252
  %2254 = vmatprep.mubr.f32.mxu0 %v139
  %2255 = vmatmul.mubr.f32.gmra.mrb[0].mxu0 %v138
  %v2256 = vpop.f32.mrb[0].mxu0
  %v2257 = vadd.f32 %v2096, %v2256
  %v2258 = vpop.f32.mrb[0].mxu0
  %v2259 = vadd.f32 %v2098, %v2258
  %2260 = vdwg.mxu0
  %2261 = vmatprep.subr.mxu0 %v817
  %2262 = vmatpush1.msra.mxu0 %v816
  %2263 = vmatprep.subr.mxu0 %v824
  %2264 = vmatpush1.msra.mxu0 %v823
  %2265 = vmatprep.subr.mxu0 %v831
  %2266 = vmatpush1.msra.mxu0 %v830
  %2267 = vmatprep.subr.mxu0 %v838
  %2268 = vmatpush1.msra.mxu0 %v837
  %2269 = vmatprep.subr.mxu0 %v845
  %2270 = vmatpush1.msra.mxu0 %v844
  %2271 = vmatprep.subr.mxu0 %v852
  %2272 = vmatpush1.msra.mxu0 %v851
  %2273 = vmatprep.subr.mxu0 %v859
  %2274 = vmatpush1.msra.mxu0 %v858
  %2275 = vmatprep.subr.mxu0 %v866
  %2276 = vmatpush1.msra.mxu0 %v865
  %2277 = vmatprep.subr.mxu0 %v873
  %2278 = vmatpush1.msra.mxu0 %v872
  %2279 = vmatprep.subr.mxu0 %v880
  %2280 = vmatpush1.msra.mxu0 %v879
  %2281 = vmatprep.subr.mxu0 %v887
  %2282 = vmatpush1.msra.mxu0 %v886
  %2283 = vmatprep.subr.mxu0 %v894
  %2284 = vmatpush1.msra.mxu0 %v893
  %2285 = vmatprep.subr.mxu0 %v901
  %2286 = vmatpush1.msra.mxu0 %v900
  %2287 = vmatprep.subr.mxu0 %v908
  %2288 = vmatpush1.msra.mxu0 %v907
  %2289 = vmatprep.subr.mxu0 %v915
  %2290 = vmatpush1.msra.mxu0 %v914
  %2291 = vmatprep.subr.mxu0 %v922
  %2292 = vmatpush1.msra.mxu0 %v921
  %2293 = vmatprep.subr.mxu0 %v929
  %2294 = vmatpush1.msra.mxu0 %v928
  %2295 = vmatprep.subr.mxu0 %v936
  %2296 = vmatpush1.msra.mxu0 %v935
  %2297 = vmatprep.subr.mxu0 %v943
  %2298 = vmatpush1.msra.mxu0 %v942
  %2299 = vmatprep.subr.mxu0 %v950
  %2300 = vmatpush1.msra.mxu0 %v949
  %2301 = vmatprep.subr.mxu0 %v957
  %2302 = vmatpush1.msra.mxu0 %v956
  %2303 = vmatprep.subr.mxu0 %v964
  %2304 = vmatpush1.msra.mxu0 %v963
  %2305 = vmatprep.subr.mxu0 %v971
  %2306 = vmatpush1.msra.mxu0 %v970
  %2307 = vmatprep.subr.mxu0 %v978
  %2308 = vmatpush1.msra.mxu0 %v977
  %2309 = vmatprep.subr.mxu0 %v985
  %2310 = vmatpush1.msra.mxu0 %v984
  %2311 = vmatprep.subr.mxu0 %v992
  %2312 = vmatpush1.msra.mxu0 %v991
  %2313 = vmatprep.subr.mxu0 %v999
  %2314 = vmatpush1.msra.mxu0 %v998
  %2315 = vmatprep.subr.mxu0 %v1006
  %2316 = vmatpush1.msra.mxu0 %v1005
  %2317 = vmatprep.subr.mxu0 %v1013
  %2318 = vmatpush1.msra.mxu0 %v1012
  %2319 = vmatprep.subr.mxu0 %v1020
  %2320 = vmatpush1.msra.mxu0 %v1019
  %2321 = vmatprep.subr.mxu0 %v1027
  %2322 = vmatpush1.msra.mxu0 %v1026
  %2323 = vmatprep.subr.mxu0 %v1034
  %2324 = vmatpush1.msra.mxu0 %v1033
  %2325 = vmatprep.mubr.f32.mxu0 %v21
  %2326 = vmatmul.mubr.f32.gmra.mrb[0].mxu0 %v20
  %v2327 = vpop.f32.mrb[0].mxu0
  %v2328 = vadd.f32 %v2167, %v2327
  %v2329 = vpop.f32.mrb[0].mxu0
  %v2330 = vadd.f32 %v2169, %v2329
  %2331 = vmatprep.mubr.f32.mxu0 %v29
  %2332 = vmatmul.mubr.f32.gmra.mrb[0].mxu0 %v28
  %v2333 = vpop.f32.mrb[0].mxu0
  %v2334 = vadd.f32 %v2173, %v2333
  %v2335 = vpop.f32.mrb[0].mxu0
  %v2336 = vadd.f32 %v2175, %v2335
  %2337 = vmatprep.mubr.f32.mxu0 %v37
  %2338 = vmatmul.mubr.f32.gmra.mrb[0].mxu0 %v36
  %v2339 = vpop.f32.mrb[0].mxu0
  %v2340 = vadd.f32 %v2179, %v2339
  %v2341 = vpop.f32.mrb[0].mxu0
  %v2342 = vadd.f32 %v2181, %v2341
  %2343 = vmatprep.mubr.f32.mxu0 %v45
  %2344 = vmatmul.mubr.f32.gmra.mrb[0].mxu0 %v44
  %v2345 = vpop.f32.mrb[0].mxu0
  %v2346 = vadd.f32 %v2185, %v2345
  %v2347 = vpop.f32.mrb[0].mxu0
  %v2348 = vadd.f32 %v2187, %v2347
  %2349 = vmatprep.mubr.f32.mxu0 %v53
  %2350 = vmatmul.mubr.f32.gmra.mrb[0].mxu0 %v52
  %v2351 = vpop.f32.mrb[0].mxu0
  %v2352 = vadd.f32 %v2191, %v2351
  %v2353 = vpop.f32.mrb[0].mxu0
  %v2354 = vadd.f32 %v2193, %v2353
  %2355 = vmatprep.mubr.f32.mxu0 %v61
  %2356 = vmatmul.mubr.f32.gmra.mrb[0].mxu0 %v60
  %v2357 = vpop.f32.mrb[0].mxu0
  %v2358 = vadd.f32 %v2197, %v2357
  %v2359 = vpop.f32.mrb[0].mxu0
  %v2360 = vadd.f32 %v2199, %v2359
  %2361 = vmatprep.mubr.f32.mxu0 %v69
  %2362 = vmatmul.mubr.f32.gmra.mrb[0].mxu0 %v68
  %v2363 = vpop.f32.mrb[0].mxu0
  %v2364 = vadd.f32 %v2203, %v2363
  %v2365 = vpop.f32.mrb[0].mxu0
  %v2366 = vadd.f32 %v2205, %v2365
  %2367 = vmatprep.mubr.f32.mxu0 %v77
  %2368 = vmatmul.mubr.f32.gmra.mrb[0].mxu0 %v76
  %v2369 = vpop.f32.mrb[0].mxu0
  %v2370 = vadd.f32 %v2209, %v2369
  %v2371 = vpop.f32.mrb[0].mxu0
  %v2372 = vadd.f32 %v2211, %v2371
  %2373 = vmatprep.mubr.f32.mxu0 %v85
  %2374 = vmatmul.mubr.f32.gmra.mrb[0].mxu0 %v84
  %v2375 = vpop.f32.mrb[0].mxu0
  %v2376 = vadd.f32 %v2215, %v2375
  %v2377 = vpop.f32.mrb[0].mxu0
  %v2378 = vadd.f32 %v2217, %v2377
  %2379 = vmatprep.mubr.f32.mxu0 %v93
  %2380 = vmatmul.mubr.f32.gmra.mrb[0].mxu0 %v92
  %v2381 = vpop.f32.mrb[0].mxu0
  %v2382 = vadd.f32 %v2221, %v2381
  %v2383 = vpop.f32.mrb[0].mxu0
  %v2384 = vadd.f32 %v2223, %v2383
  %2385 = vmatprep.mubr.f32.mxu0 %v101
  %2386 = vmatmul.mubr.f32.gmra.mrb[0].mxu0 %v100
  %v2387 = vpop.f32.mrb[0].mxu0
  %v2388 = vadd.f32 %v2227, %v2387
  %v2389 = vpop.f32.mrb[0].mxu0
  %v2390 = vadd.f32 %v2229, %v2389
  %2391 = vmatprep.mubr.f32.mxu0 %v109
  %2392 = vmatmul.mubr.f32.gmra.mrb[0].mxu0 %v108
  %v2393 = vpop.f32.mrb[0].mxu0
  %v2394 = vadd.f32 %v2233, %v2393
  %v2395 = vpop.f32.mrb[0].mxu0
  %v2396 = vadd.f32 %v2235, %v2395
  %2397 = vmatprep.mubr.f32.mxu0 %v117
  %2398 = vmatmul.mubr.f32.gmra.mrb[0].mxu0 %v116
  %v2399 = vpop.f32.mrb[0].mxu0
  %v2400 = vadd.f32 %v2239, %v2399
  %v2401 = vpop.f32.mrb[0].mxu0
  %v2402 = vadd.f32 %v2241, %v2401
  %2403 = vmatprep.mubr.f32.mxu0 %v125
  %2404 = vmatmul.mubr.f32.gmra.mrb[0].mxu0 %v124
  %v2405 = vpop.f32.mrb[0].mxu0
  %v2406 = vadd.f32 %v2245, %v2405
  %v2407 = vpop.f32.mrb[0].mxu0
  %v2408 = vadd.f32 %v2247, %v2407
  %2409 = vmatprep.mubr.f32.mxu0 %v133
  %2410 = vmatmul.mubr.f32.gmra.mrb[0].mxu0 %v132
  %v2411 = vpop.f32.mrb[0].mxu0
  %v2412 = vadd.f32 %v2251, %v2411
  %v2413 = vpop.f32.mrb[0].mxu0
  %v2414 = vadd.f32 %v2253, %v2413
  %2415 = vmatprep.mubr.f32.mxu0 %v141
  %2416 = vmatmul.mubr.f32.gmra.mrb[0].mxu0 %v140
  %v2417 = vpop.f32.mrb[0].mxu0
  %v2418 = vadd.f32 %v2257, %v2417
  %v2419 = vpop.f32.mrb[0].mxu0
  %v2420 = vadd.f32 %v2259, %v2419
  %2421 = vdwg.mxu0
  %2422 = vmatprep.subr.mxu0 %v147
  %2423 = vmatpush1.msra.mxu0 %v146
  %2424 = vmatprep.subr.mxu0 %v154
  %2425 = vmatpush1.msra.mxu0 %v153
  %2426 = vmatprep.subr.mxu0 %v161
  %2427 = vmatpush1.msra.mxu0 %v160
  %2428 = vmatprep.subr.mxu0 %v168
  %2429 = vmatpush1.msra.mxu0 %v167
  %2430 = vmatprep.subr.mxu0 %v175
  %2431 = vmatpush1.msra.mxu0 %v174
  %2432 = vmatprep.subr.mxu0 %v182
  %2433 = vmatpush1.msra.mxu0 %v181
  %2434 = vmatprep.subr.mxu0 %v189
  %2435 = vmatpush1.msra.mxu0 %v188
  %2436 = vmatprep.subr.mxu0 %v196
  %2437 = vmatpush1.msra.mxu0 %v195
  %2438 = vmatprep.subr.mxu0 %v203
  %2439 = vmatpush1.msra.mxu0 %v202
  %2440 = vmatprep.subr.mxu0 %v210
  %2441 = vmatpush1.msra.mxu0 %v209
  %2442 = vmatprep.subr.mxu0 %v217
  %2443 = vmatpush1.msra.mxu0 %v216
  %2444 = vmatprep.subr.mxu0 %v224
  %2445 = vmatpush1.msra.mxu0 %v223
  %2446 = vmatprep.subr.mxu0 %v231
  %2447 = vmatpush1.msra.mxu0 %v230
  %2448 = vmatprep.subr.mxu0 %v238
  %2449 = vmatpush1.msra.mxu0 %v237
  %2450 = vmatprep.subr.mxu0 %v245
  %2451 = vmatpush1.msra.mxu0 %v244
  %2452 = vmatprep.subr.mxu0 %v252
  %2453 = vmatpush1.msra.mxu0 %v251
  %2454 = vmatprep.subr.mxu0 %v259
  %2455 = vmatpush1.msra.mxu0 %v258
  %2456 = vmatprep.subr.mxu0 %v266
  %2457 = vmatpush1.msra.mxu0 %v265
  %2458 = vmatprep.subr.mxu0 %v273
  %2459 = vmatpush1.msra.mxu0 %v272
  %2460 = vmatprep.subr.mxu0 %v280
  %2461 = vmatpush1.msra.mxu0 %v279
  %2462 = vmatprep.subr.mxu0 %v287
  %2463 = vmatpush1.msra.mxu0 %v286
  %2464 = vmatprep.subr.mxu0 %v294
  %2465 = vmatpush1.msra.mxu0 %v293
  %2466 = vmatprep.subr.mxu0 %v301
  %2467 = vmatpush1.msra.mxu0 %v300
  %2468 = vmatprep.subr.mxu0 %v308
  %2469 = vmatpush1.msra.mxu0 %v307
  %2470 = vmatprep.subr.mxu0 %v315
  %2471 = vmatpush1.msra.mxu0 %v314
  %2472 = vmatprep.subr.mxu0 %v322
  %2473 = vmatpush1.msra.mxu0 %v321
  %2474 = vmatprep.subr.mxu0 %v329
  %2475 = vmatpush1.msra.mxu0 %v328
  %2476 = vmatprep.subr.mxu0 %v336
  %2477 = vmatpush1.msra.mxu0 %v335
  %2478 = vmatprep.subr.mxu0 %v343
  %2479 = vmatpush1.msra.mxu0 %v342
  %2480 = vmatprep.subr.mxu0 %v350
  %2481 = vmatpush1.msra.mxu0 %v349
  %2482 = vmatprep.subr.mxu0 %v357
  %2483 = vmatpush1.msra.mxu0 %v356
  %2484 = vmatprep.subr.mxu0 %v364
  %2485 = vmatpush1.msra.mxu0 %v363
  %2486 = vmatprep.mubr.f32.mxu0 %v15
  %2487 = vmatmul.mubr.f32.gmra.mrb[0].mxu0 %v14
  %v2488 = vpop.f32.mrb[0].mxu0
  %v2489 = vadd.f32 %v1057, %v2488
  %v2490 = vpop.f32.mrb[0].mxu0
  %v2491 = vadd.f32 %v1057, %v2490
  %2492 = vmatprep.mubr.f32.mxu0 %v23
  %2493 = vmatmul.mubr.f32.gmra.mrb[0].mxu0 %v22
  %v2494 = vpop.f32.mrb[0].mxu0
  %v2495 = vadd.f32 %v1062, %v2494
  %v2496 = vpop.f32.mrb[0].mxu0
  %v2497 = vadd.f32 %v1062, %v2496
  %2498 = vmatprep.mubr.f32.mxu0 %v31
  %2499 = vmatmul.mubr.f32.gmra.mrb[0].mxu0 %v30
  %v2500 = vpop.f32.mrb[0].mxu0
  %v2501 = vadd.f32 %v1067, %v2500
  %v2502 = vpop.f32.mrb[0].mxu0
  %v2503 = vadd.f32 %v1067, %v2502
  %2504 = vmatprep.mubr.f32.mxu0 %v39
  %2505 = vmatmul.mubr.f32.gmra.mrb[0].mxu0 %v38
  %v2506 = vpop.f32.mrb[0].mxu0
  %v2507 = vadd.f32 %v1072, %v2506
  %v2508 = vpop.f32.mrb[0].mxu0
  %v2509 = vadd.f32 %v1072, %v2508
  %2510 = vmatprep.mubr.f32.mxu0 %v47
  %2511 = vmatmul.mubr.f32.gmra.mrb[0].mxu0 %v46
  %v2512 = vpop.f32.mrb[0].mxu0
  %v2513 = vadd.f32 %v1077, %v2512
  %v2514 = vpop.f32.mrb[0].mxu0
  %v2515 = vadd.f32 %v1077, %v2514
  %2516 = vmatprep.mubr.f32.mxu0 %v55
  %2517 = vmatmul.mubr.f32.gmra.mrb[0].mxu0 %v54
  %v2518 = vpop.f32.mrb[0].mxu0
  %v2519 = vadd.f32 %v1082, %v2518
  %v2520 = vpop.f32.mrb[0].mxu0
  %v2521 = vadd.f32 %v1082, %v2520
  %2522 = vmatprep.mubr.f32.mxu0 %v63
  %2523 = vmatmul.mubr.f32.gmra.mrb[0].mxu0 %v62
  %v2524 = vpop.f32.mrb[0].mxu0
  %v2525 = vadd.f32 %v1087, %v2524
  %v2526 = vpop.f32.mrb[0].mxu0
  %v2527 = vadd.f32 %v1087, %v2526
  %2528 = vmatprep.mubr.f32.mxu0 %v71
  %2529 = vmatmul.mubr.f32.gmra.mrb[0].mxu0 %v70
  %v2530 = vpop.f32.mrb[0].mxu0
  %v2531 = vadd.f32 %v1092, %v2530
  %v2532 = vpop.f32.mrb[0].mxu0
  %v2533 = vadd.f32 %v1092, %v2532
  %2534 = vmatprep.mubr.f32.mxu0 %v79
  %2535 = vmatmul.mubr.f32.gmra.mrb[0].mxu0 %v78
  %v2536 = vpop.f32.mrb[0].mxu0
  %v2537 = vadd.f32 %v1097, %v2536
  %v2538 = vpop.f32.mrb[0].mxu0
  %v2539 = vadd.f32 %v1097, %v2538
  %2540 = vmatprep.mubr.f32.mxu0 %v87
  %2541 = vmatmul.mubr.f32.gmra.mrb[0].mxu0 %v86
  %v2542 = vpop.f32.mrb[0].mxu0
  %v2543 = vadd.f32 %v1102, %v2542
  %v2544 = vpop.f32.mrb[0].mxu0
  %v2545 = vadd.f32 %v1102, %v2544
  %2546 = vmatprep.mubr.f32.mxu0 %v95
  %2547 = vmatmul.mubr.f32.gmra.mrb[0].mxu0 %v94
  %v2548 = vpop.f32.mrb[0].mxu0
  %v2549 = vadd.f32 %v1107, %v2548
  %v2550 = vpop.f32.mrb[0].mxu0
  %v2551 = vadd.f32 %v1107, %v2550
  %2552 = vmatprep.mubr.f32.mxu0 %v103
  %2553 = vmatmul.mubr.f32.gmra.mrb[0].mxu0 %v102
  %v2554 = vpop.f32.mrb[0].mxu0
  %v2555 = vadd.f32 %v1112, %v2554
  %v2556 = vpop.f32.mrb[0].mxu0
  %v2557 = vadd.f32 %v1112, %v2556
  %2558 = vmatprep.mubr.f32.mxu0 %v111
  %2559 = vmatmul.mubr.f32.gmra.mrb[0].mxu0 %v110
  %v2560 = vpop.f32.mrb[0].mxu0
  %v2561 = vadd.f32 %v1117, %v2560
  %v2562 = vpop.f32.mrb[0].mxu0
  %v2563 = vadd.f32 %v1117, %v2562
  %2564 = vmatprep.mubr.f32.mxu0 %v119
  %2565 = vmatmul.mubr.f32.gmra.mrb[0].mxu0 %v118
  %v2566 = vpop.f32.mrb[0].mxu0
  %v2567 = vadd.f32 %v1122, %v2566
  %v2568 = vpop.f32.mrb[0].mxu0
  %v2569 = vadd.f32 %v1122, %v2568
  %2570 = vmatprep.mubr.f32.mxu0 %v127
  %2571 = vmatmul.mubr.f32.gmra.mrb[0].mxu0 %v126
  %v2572 = vpop.f32.mrb[0].mxu0
  %v2573 = vadd.f32 %v1127, %v2572
  %v2574 = vpop.f32.mrb[0].mxu0
  %v2575 = vadd.f32 %v1127, %v2574
  %2576 = vmatprep.mubr.f32.mxu0 %v135
  %2577 = vmatmul.mubr.f32.gmra.mrb[0].mxu0 %v134
  %v2578 = vpop.f32.mrb[0].mxu0
  %v2579 = vadd.f32 %v1132, %v2578
  %v2580 = vpop.f32.mrb[0].mxu0
  %v2581 = vadd.f32 %v1132, %v2580
  %2582 = vdwg.mxu0
  %2583 = vmatprep.subr.mxu0 %v371
  %2584 = vmatpush1.msra.mxu0 %v370
  %2585 = vmatprep.subr.mxu0 %v378
  %2586 = vmatpush1.msra.mxu0 %v377
  %2587 = vmatprep.subr.mxu0 %v385
  %2588 = vmatpush1.msra.mxu0 %v384
  %2589 = vmatprep.subr.mxu0 %v392
  %2590 = vmatpush1.msra.mxu0 %v391
  %2591 = vmatprep.subr.mxu0 %v399
  %2592 = vmatpush1.msra.mxu0 %v398
  %2593 = vmatprep.subr.mxu0 %v406
  %2594 = vmatpush1.msra.mxu0 %v405
  %2595 = vmatprep.subr.mxu0 %v413
  %2596 = vmatpush1.msra.mxu0 %v412
  %2597 = vmatprep.subr.mxu0 %v420
  %2598 = vmatpush1.msra.mxu0 %v419
  %2599 = vmatprep.subr.mxu0 %v427
  %2600 = vmatpush1.msra.mxu0 %v426
  %2601 = vmatprep.subr.mxu0 %v434
  %2602 = vmatpush1.msra.mxu0 %v433
  %2603 = vmatprep.subr.mxu0 %v441
  %2604 = vmatpush1.msra.mxu0 %v440
  %2605 = vmatprep.subr.mxu0 %v448
  %2606 = vmatpush1.msra.mxu0 %v447
  %2607 = vmatprep.subr.mxu0 %v455
  %2608 = vmatpush1.msra.mxu0 %v454
  %2609 = vmatprep.subr.mxu0 %v462
  %2610 = vmatpush1.msra.mxu0 %v461
  %2611 = vmatprep.subr.mxu0 %v469
  %2612 = vmatpush1.msra.mxu0 %v468
  %2613 = vmatprep.subr.mxu0 %v476
  %2614 = vmatpush1.msra.mxu0 %v475
  %2615 = vmatprep.subr.mxu0 %v483
  %2616 = vmatpush1.msra.mxu0 %v482
  %2617 = vmatprep.subr.mxu0 %v490
  %2618 = vmatpush1.msra.mxu0 %v489
  %2619 = vmatprep.subr.mxu0 %v497
  %2620 = vmatpush1.msra.mxu0 %v496
  %2621 = vmatprep.subr.mxu0 %v504
  %2622 = vmatpush1.msra.mxu0 %v503
  %2623 = vmatprep.subr.mxu0 %v511
  %2624 = vmatpush1.msra.mxu0 %v510
  %2625 = vmatprep.subr.mxu0 %v518
  %2626 = vmatpush1.msra.mxu0 %v517
  %2627 = vmatprep.subr.mxu0 %v525
  %2628 = vmatpush1.msra.mxu0 %v524
  %2629 = vmatprep.subr.mxu0 %v532
  %2630 = vmatpush1.msra.mxu0 %v531
  %2631 = vmatprep.subr.mxu0 %v539
  %2632 = vmatpush1.msra.mxu0 %v538
  %2633 = vmatprep.subr.mxu0 %v546
  %2634 = vmatpush1.msra.mxu0 %v545
  %2635 = vmatprep.subr.mxu0 %v553
  %2636 = vmatpush1.msra.mxu0 %v552
  %2637 = vmatprep.subr.mxu0 %v560
  %2638 = vmatpush1.msra.mxu0 %v559
  %2639 = vmatprep.subr.mxu0 %v567
  %2640 = vmatpush1.msra.mxu0 %v566
  %2641 = vmatprep.subr.mxu0 %v574
  %2642 = vmatpush1.msra.mxu0 %v573
  %2643 = vmatprep.subr.mxu0 %v581
  %2644 = vmatpush1.msra.mxu0 %v580
  %2645 = vmatprep.subr.mxu0 %v588
  %2646 = vmatpush1.msra.mxu0 %v587
  %2647 = vmatprep.mubr.f32.mxu0 %v17
  %2648 = vmatmul.mubr.f32.gmra.mrb[0].mxu0 %v16
  %v2649 = vpop.f32.mrb[0].mxu0
  %v2650 = vadd.f32 %v2489, %v2649
  %v2651 = vpop.f32.mrb[0].mxu0
  %v2652 = vadd.f32 %v2491, %v2651
  %2653 = vmatprep.mubr.f32.mxu0 %v25
  %2654 = vmatmul.mubr.f32.gmra.mrb[0].mxu0 %v24
  %v2655 = vpop.f32.mrb[0].mxu0
  %v2656 = vadd.f32 %v2495, %v2655
  %v2657 = vpop.f32.mrb[0].mxu0
  %v2658 = vadd.f32 %v2497, %v2657
  %2659 = vmatprep.mubr.f32.mxu0 %v33
  %2660 = vmatmul.mubr.f32.gmra.mrb[0].mxu0 %v32
  %v2661 = vpop.f32.mrb[0].mxu0
  %v2662 = vadd.f32 %v2501, %v2661
  %v2663 = vpop.f32.mrb[0].mxu0
  %v2664 = vadd.f32 %v2503, %v2663
  %2665 = vmatprep.mubr.f32.mxu0 %v41
  %2666 = vmatmul.mubr.f32.gmra.mrb[0].mxu0 %v40
  %v2667 = vpop.f32.mrb[0].mxu0
  %v2668 = vadd.f32 %v2507, %v2667
  %v2669 = vpop.f32.mrb[0].mxu0
  %v2670 = vadd.f32 %v2509, %v2669
  %2671 = vmatprep.mubr.f32.mxu0 %v49
  %2672 = vmatmul.mubr.f32.gmra.mrb[0].mxu0 %v48
  %v2673 = vpop.f32.mrb[0].mxu0
  %v2674 = vadd.f32 %v2513, %v2673
  %v2675 = vpop.f32.mrb[0].mxu0
  %v2676 = vadd.f32 %v2515, %v2675
  %2677 = vmatprep.mubr.f32.mxu0 %v57
  %2678 = vmatmul.mubr.f32.gmra.mrb[0].mxu0 %v56
  %v2679 = vpop.f32.mrb[0].mxu0
  %v2680 = vadd.f32 %v2519, %v2679
  %v2681 = vpop.f32.mrb[0].mxu0
  %v2682 = vadd.f32 %v2521, %v2681
  %2683 = vmatprep.mubr.f32.mxu0 %v65
  %2684 = vmatmul.mubr.f32.gmra.mrb[0].mxu0 %v64
  %v2685 = vpop.f32.mrb[0].mxu0
  %v2686 = vadd.f32 %v2525, %v2685
  %v2687 = vpop.f32.mrb[0].mxu0
  %v2688 = vadd.f32 %v2527, %v2687
  %2689 = vmatprep.mubr.f32.mxu0 %v73
  %2690 = vmatmul.mubr.f32.gmra.mrb[0].mxu0 %v72
  %v2691 = vpop.f32.mrb[0].mxu0
  %v2692 = vadd.f32 %v2531, %v2691
  %v2693 = vpop.f32.mrb[0].mxu0
  %v2694 = vadd.f32 %v2533, %v2693
  %2695 = vmatprep.mubr.f32.mxu0 %v81
  %2696 = vmatmul.mubr.f32.gmra.mrb[0].mxu0 %v80
  %v2697 = vpop.f32.mrb[0].mxu0
  %v2698 = vadd.f32 %v2537, %v2697
  %v2699 = vpop.f32.mrb[0].mxu0
  %v2700 = vadd.f32 %v2539, %v2699
  %2701 = vmatprep.mubr.f32.mxu0 %v89
  %2702 = vmatmul.mubr.f32.gmra.mrb[0].mxu0 %v88
  %v2703 = vpop.f32.mrb[0].mxu0
  %v2704 = vadd.f32 %v2543, %v2703
  %v2705 = vpop.f32.mrb[0].mxu0
  %v2706 = vadd.f32 %v2545, %v2705
  %2707 = vmatprep.mubr.f32.mxu0 %v97
  %2708 = vmatmul.mubr.f32.gmra.mrb[0].mxu0 %v96
  %v2709 = vpop.f32.mrb[0].mxu0
  %v2710 = vadd.f32 %v2549, %v2709
  %v2711 = vpop.f32.mrb[0].mxu0
  %v2712 = vadd.f32 %v2551, %v2711
  %2713 = vmatprep.mubr.f32.mxu0 %v105
  %2714 = vmatmul.mubr.f32.gmra.mrb[0].mxu0 %v104
  %v2715 = vpop.f32.mrb[0].mxu0
  %v2716 = vadd.f32 %v2555, %v2715
  %v2717 = vpop.f32.mrb[0].mxu0
  %v2718 = vadd.f32 %v2557, %v2717
  %2719 = vmatprep.mubr.f32.mxu0 %v113
  %2720 = vmatmul.mubr.f32.gmra.mrb[0].mxu0 %v112
  %v2721 = vpop.f32.mrb[0].mxu0
  %v2722 = vadd.f32 %v2561, %v2721
  %v2723 = vpop.f32.mrb[0].mxu0
  %v2724 = vadd.f32 %v2563, %v2723
  %2725 = vmatprep.mubr.f32.mxu0 %v121
  %2726 = vmatmul.mubr.f32.gmra.mrb[0].mxu0 %v120
  %v2727 = vpop.f32.mrb[0].mxu0
  %v2728 = vadd.f32 %v2567, %v2727
  %v2729 = vpop.f32.mrb[0].mxu0
  %v2730 = vadd.f32 %v2569, %v2729
  %2731 = vmatprep.mubr.f32.mxu0 %v129
  %2732 = vmatmul.mubr.f32.gmra.mrb[0].mxu0 %v128
  %v2733 = vpop.f32.mrb[0].mxu0
  %v2734 = vadd.f32 %v2573, %v2733
  %v2735 = vpop.f32.mrb[0].mxu0
  %v2736 = vadd.f32 %v2575, %v2735
  %2737 = vmatprep.mubr.f32.mxu0 %v137
  %2738 = vmatmul.mubr.f32.gmra.mrb[0].mxu0 %v136
  %v2739 = vpop.f32.mrb[0].mxu0
  %v2740 = vadd.f32 %v2579, %v2739
  %v2741 = vpop.f32.mrb[0].mxu0
  %v2742 = vadd.f32 %v2581, %v2741
  %2743 = vdwg.mxu0
  %2744 = vmatprep.subr.mxu0 %v595
  %2745 = vmatpush1.msra.mxu0 %v594
  %2746 = vmatprep.subr.mxu0 %v602
  %2747 = vmatpush1.msra.mxu0 %v601
  %2748 = vmatprep.subr.mxu0 %v609
  %2749 = vmatpush1.msra.mxu0 %v608
  %2750 = vmatprep.subr.mxu0 %v616
  %2751 = vmatpush1.msra.mxu0 %v615
  %2752 = vmatprep.subr.mxu0 %v623
  %2753 = vmatpush1.msra.mxu0 %v622
  %2754 = vmatprep.subr.mxu0 %v630
  %2755 = vmatpush1.msra.mxu0 %v629
  %2756 = vmatprep.subr.mxu0 %v637
  %2757 = vmatpush1.msra.mxu0 %v636
  %2758 = vmatprep.subr.mxu0 %v644
  %2759 = vmatpush1.msra.mxu0 %v643
  %2760 = vmatprep.subr.mxu0 %v651
  %2761 = vmatpush1.msra.mxu0 %v650
  %2762 = vmatprep.subr.mxu0 %v658
  %2763 = vmatpush1.msra.mxu0 %v657
  %2764 = vmatprep.subr.mxu0 %v665
  %2765 = vmatpush1.msra.mxu0 %v664
  %2766 = vmatprep.subr.mxu0 %v672
  %2767 = vmatpush1.msra.mxu0 %v671
  %2768 = vmatprep.subr.mxu0 %v679
  %2769 = vmatpush1.msra.mxu0 %v678
  %2770 = vmatprep.subr.mxu0 %v686
  %2771 = vmatpush1.msra.mxu0 %v685
  %2772 = vmatprep.subr.mxu0 %v693
  %2773 = vmatpush1.msra.mxu0 %v692
  %2774 = vmatprep.subr.mxu0 %v700
  %2775 = vmatpush1.msra.mxu0 %v699
  %2776 = vmatprep.subr.mxu0 %v707
  %2777 = vmatpush1.msra.mxu0 %v706
  %2778 = vmatprep.subr.mxu0 %v714
  %2779 = vmatpush1.msra.mxu0 %v713
  %2780 = vmatprep.subr.mxu0 %v721
  %2781 = vmatpush1.msra.mxu0 %v720
  %2782 = vmatprep.subr.mxu0 %v728
  %2783 = vmatpush1.msra.mxu0 %v727
  %2784 = vmatprep.subr.mxu0 %v735
  %2785 = vmatpush1.msra.mxu0 %v734
  %2786 = vmatprep.subr.mxu0 %v742
  %2787 = vmatpush1.msra.mxu0 %v741
  %2788 = vmatprep.subr.mxu0 %v749
  %2789 = vmatpush1.msra.mxu0 %v748
  %2790 = vmatprep.subr.mxu0 %v756
  %2791 = vmatpush1.msra.mxu0 %v755
  %2792 = vmatprep.subr.mxu0 %v763
  %2793 = vmatpush1.msra.mxu0 %v762
  %2794 = vmatprep.subr.mxu0 %v770
  %2795 = vmatpush1.msra.mxu0 %v769
  %2796 = vmatprep.subr.mxu0 %v777
  %2797 = vmatpush1.msra.mxu0 %v776
  %2798 = vmatprep.subr.mxu0 %v784
  %2799 = vmatpush1.msra.mxu0 %v783
  %2800 = vmatprep.subr.mxu0 %v791
  %2801 = vmatpush1.msra.mxu0 %v790
  %2802 = vmatprep.subr.mxu0 %v798
  %2803 = vmatpush1.msra.mxu0 %v797
  %2804 = vmatprep.subr.mxu0 %v805
  %2805 = vmatpush1.msra.mxu0 %v804
  %2806 = vmatprep.subr.mxu0 %v812
  %2807 = vmatpush1.msra.mxu0 %v811
  %2808 = vmatprep.mubr.f32.mxu0 %v19
  %2809 = vmatmul.mubr.f32.gmra.mrb[0].mxu0 %v18
  %v2810 = vpop.f32.mrb[0].mxu0
  %v2811 = vadd.f32 %v2650, %v2810
  %v2812 = vpop.f32.mrb[0].mxu0
  %v2813 = vadd.f32 %v2652, %v2812
  %2814 = vmatprep.mubr.f32.mxu0 %v27
  %2815 = vmatmul.mubr.f32.gmra.mrb[0].mxu0 %v26
  %v2816 = vpop.f32.mrb[0].mxu0
  %v2817 = vadd.f32 %v2656, %v2816
  %v2818 = vpop.f32.mrb[0].mxu0
  %v2819 = vadd.f32 %v2658, %v2818
  %2820 = vmatprep.mubr.f32.mxu0 %v35
  %2821 = vmatmul.mubr.f32.gmra.mrb[0].mxu0 %v34
  %v2822 = vpop.f32.mrb[0].mxu0
  %v2823 = vadd.f32 %v2662, %v2822
  %v2824 = vpop.f32.mrb[0].mxu0
  %v2825 = vadd.f32 %v2664, %v2824
  %2826 = vmatprep.mubr.f32.mxu0 %v43
  %2827 = vmatmul.mubr.f32.gmra.mrb[0].mxu0 %v42
  %v2828 = vpop.f32.mrb[0].mxu0
  %v2829 = vadd.f32 %v2668, %v2828
  %v2830 = vpop.f32.mrb[0].mxu0
  %v2831 = vadd.f32 %v2670, %v2830
  %2832 = vmatprep.mubr.f32.mxu0 %v51
  %2833 = vmatmul.mubr.f32.gmra.mrb[0].mxu0 %v50
  %v2834 = vpop.f32.mrb[0].mxu0
  %v2835 = vadd.f32 %v2674, %v2834
  %v2836 = vpop.f32.mrb[0].mxu0
  %v2837 = vadd.f32 %v2676, %v2836
  %2838 = vmatprep.mubr.f32.mxu0 %v59
  %2839 = vmatmul.mubr.f32.gmra.mrb[0].mxu0 %v58
  %v2840 = vpop.f32.mrb[0].mxu0
  %v2841 = vadd.f32 %v2680, %v2840
  %v2842 = vpop.f32.mrb[0].mxu0
  %v2843 = vadd.f32 %v2682, %v2842
  %2844 = vmatprep.mubr.f32.mxu0 %v67
  %2845 = vmatmul.mubr.f32.gmra.mrb[0].mxu0 %v66
  %v2846 = vpop.f32.mrb[0].mxu0
  %v2847 = vadd.f32 %v2686, %v2846
  %v2848 = vpop.f32.mrb[0].mxu0
  %v2849 = vadd.f32 %v2688, %v2848
  %2850 = vmatprep.mubr.f32.mxu0 %v75
  %2851 = vmatmul.mubr.f32.gmra.mrb[0].mxu0 %v74
  %v2852 = vpop.f32.mrb[0].mxu0
  %v2853 = vadd.f32 %v2692, %v2852
  %v2854 = vpop.f32.mrb[0].mxu0
  %v2855 = vadd.f32 %v2694, %v2854
  %2856 = vmatprep.mubr.f32.mxu0 %v83
  %2857 = vmatmul.mubr.f32.gmra.mrb[0].mxu0 %v82
  %v2858 = vpop.f32.mrb[0].mxu0
  %v2859 = vadd.f32 %v2698, %v2858
  %v2860 = vpop.f32.mrb[0].mxu0
  %v2861 = vadd.f32 %v2700, %v2860
  %2862 = vmatprep.mubr.f32.mxu0 %v91
  %2863 = vmatmul.mubr.f32.gmra.mrb[0].mxu0 %v90
  %v2864 = vpop.f32.mrb[0].mxu0
  %v2865 = vadd.f32 %v2704, %v2864
  %v2866 = vpop.f32.mrb[0].mxu0
  %v2867 = vadd.f32 %v2706, %v2866
  %2868 = vmatprep.mubr.f32.mxu0 %v99
  %2869 = vmatmul.mubr.f32.gmra.mrb[0].mxu0 %v98
  %v2870 = vpop.f32.mrb[0].mxu0
  %v2871 = vadd.f32 %v2710, %v2870
  %v2872 = vpop.f32.mrb[0].mxu0
  %v2873 = vadd.f32 %v2712, %v2872
  %2874 = vmatprep.mubr.f32.mxu0 %v107
  %2875 = vmatmul.mubr.f32.gmra.mrb[0].mxu0 %v106
  %v2876 = vpop.f32.mrb[0].mxu0
  %v2877 = vadd.f32 %v2716, %v2876
  %v2878 = vpop.f32.mrb[0].mxu0
  %v2879 = vadd.f32 %v2718, %v2878
  %2880 = vmatprep.mubr.f32.mxu0 %v115
  %2881 = vmatmul.mubr.f32.gmra.mrb[0].mxu0 %v114
  %v2882 = vpop.f32.mrb[0].mxu0
  %v2883 = vadd.f32 %v2722, %v2882
  %v2884 = vpop.f32.mrb[0].mxu0
  %v2885 = vadd.f32 %v2724, %v2884
  %2886 = vmatprep.mubr.f32.mxu0 %v123
  %2887 = vmatmul.mubr.f32.gmra.mrb[0].mxu0 %v122
  %v2888 = vpop.f32.mrb[0].mxu0
  %v2889 = vadd.f32 %v2728, %v2888
  %v2890 = vpop.f32.mrb[0].mxu0
  %v2891 = vadd.f32 %v2730, %v2890
  %2892 = vmatprep.mubr.f32.mxu0 %v131
  %2893 = vmatmul.mubr.f32.gmra.mrb[0].mxu0 %v130
  %v2894 = vpop.f32.mrb[0].mxu0
  %v2895 = vadd.f32 %v2734, %v2894
  %v2896 = vpop.f32.mrb[0].mxu0
  %v2897 = vadd.f32 %v2736, %v2896
  %2898 = vmatprep.mubr.f32.mxu0 %v139
  %2899 = vmatmul.mubr.f32.gmra.mrb[0].mxu0 %v138
  %v2900 = vpop.f32.mrb[0].mxu0
  %v2901 = vadd.f32 %v2740, %v2900
  %v2902 = vpop.f32.mrb[0].mxu0
  %v2903 = vadd.f32 %v2742, %v2902
  %2904 = vdwg.mxu0
  %2905 = vmatprep.subr.mxu0 %v819
  %2906 = vmatpush1.msra.mxu0 %v818
  %2907 = vmatprep.subr.mxu0 %v826
  %2908 = vmatpush1.msra.mxu0 %v825
  %2909 = vmatprep.subr.mxu0 %v833
  %2910 = vmatpush1.msra.mxu0 %v832
  %2911 = vmatprep.subr.mxu0 %v840
  %2912 = vmatpush1.msra.mxu0 %v839
  %2913 = vmatprep.subr.mxu0 %v847
  %2914 = vmatpush1.msra.mxu0 %v846
  %2915 = vmatprep.subr.mxu0 %v854
  %2916 = vmatpush1.msra.mxu0 %v853
  %2917 = vmatprep.subr.mxu0 %v861
  %2918 = vmatpush1.msra.mxu0 %v860
  %2919 = vmatprep.subr.mxu0 %v868
  %2920 = vmatpush1.msra.mxu0 %v867
  %2921 = vmatprep.subr.mxu0 %v875
  %2922 = vmatpush1.msra.mxu0 %v874
  %2923 = vmatprep.subr.mxu0 %v882
  %2924 = vmatpush1.msra.mxu0 %v881
  %2925 = vmatprep.subr.mxu0 %v889
  %2926 = vmatpush1.msra.mxu0 %v888
  %2927 = vmatprep.subr.mxu0 %v896
  %2928 = vmatpush1.msra.mxu0 %v895
  %2929 = vmatprep.subr.mxu0 %v903
  %2930 = vmatpush1.msra.mxu0 %v902
  %2931 = vmatprep.subr.mxu0 %v910
  %2932 = vmatpush1.msra.mxu0 %v909
  %2933 = vmatprep.subr.mxu0 %v917
  %2934 = vmatpush1.msra.mxu0 %v916
  %2935 = vmatprep.subr.mxu0 %v924
  %2936 = vmatpush1.msra.mxu0 %v923
  %2937 = vmatprep.subr.mxu0 %v931
  %2938 = vmatpush1.msra.mxu0 %v930
  %2939 = vmatprep.subr.mxu0 %v938
  %2940 = vmatpush1.msra.mxu0 %v937
  %2941 = vmatprep.subr.mxu0 %v945
  %2942 = vmatpush1.msra.mxu0 %v944
  %2943 = vmatprep.subr.mxu0 %v952
  %2944 = vmatpush1.msra.mxu0 %v951
  %2945 = vmatprep.subr.mxu0 %v959
  %2946 = vmatpush1.msra.mxu0 %v958
  %2947 = vmatprep.subr.mxu0 %v966
  %2948 = vmatpush1.msra.mxu0 %v965
  %2949 = vmatprep.subr.mxu0 %v973
  %2950 = vmatpush1.msra.mxu0 %v972
  %2951 = vmatprep.subr.mxu0 %v980
  %2952 = vmatpush1.msra.mxu0 %v979
  %2953 = vmatprep.subr.mxu0 %v987
  %2954 = vmatpush1.msra.mxu0 %v986
  %2955 = vmatprep.subr.mxu0 %v994
  %2956 = vmatpush1.msra.mxu0 %v993
  %2957 = vmatprep.subr.mxu0 %v1001
  %2958 = vmatpush1.msra.mxu0 %v1000
  %2959 = vmatprep.subr.mxu0 %v1008
  %2960 = vmatpush1.msra.mxu0 %v1007
  %2961 = vmatprep.subr.mxu0 %v1015
  %2962 = vmatpush1.msra.mxu0 %v1014
  %2963 = vmatprep.subr.mxu0 %v1022
  %2964 = vmatpush1.msra.mxu0 %v1021
  %2965 = vmatprep.subr.mxu0 %v1029
  %2966 = vmatpush1.msra.mxu0 %v1028
  %2967 = vmatprep.subr.mxu0 %v1036
  %2968 = vmatpush1.msra.mxu0 %v1035
  %2969 = vmatprep.mubr.f32.mxu0 %v21
  %2970 = vmatmul.mubr.f32.gmra.mrb[0].mxu0 %v20
  %v2971 = vpop.f32.mrb[0].mxu0
  %v2972 = vadd.f32 %v2811, %v2971
  %v2973 = vpop.f32.mrb[0].mxu0
  %v2974 = vadd.f32 %v2813, %v2973
  %2975 = vmatprep.mubr.f32.mxu0 %v29
  %2976 = vmatmul.mubr.f32.gmra.mrb[0].mxu0 %v28
  %v2977 = vpop.f32.mrb[0].mxu0
  %v2978 = vadd.f32 %v2817, %v2977
  %v2979 = vpop.f32.mrb[0].mxu0
  %v2980 = vadd.f32 %v2819, %v2979
  %2981 = vmatprep.mubr.f32.mxu0 %v37
  %2982 = vmatmul.mubr.f32.gmra.mrb[0].mxu0 %v36
  %v2983 = vpop.f32.mrb[0].mxu0
  %v2984 = vadd.f32 %v2823, %v2983
  %v2985 = vpop.f32.mrb[0].mxu0
  %v2986 = vadd.f32 %v2825, %v2985
  %2987 = vmatprep.mubr.f32.mxu0 %v45
  %2988 = vmatmul.mubr.f32.gmra.mrb[0].mxu0 %v44
  %v2989 = vpop.f32.mrb[0].mxu0
  %v2990 = vadd.f32 %v2829, %v2989
  %v2991 = vpop.f32.mrb[0].mxu0
  %v2992 = vadd.f32 %v2831, %v2991
  %2993 = vmatprep.mubr.f32.mxu0 %v53
  %2994 = vmatmul.mubr.f32.gmra.mrb[0].mxu0 %v52
  %v2995 = vpop.f32.mrb[0].mxu0
  %v2996 = vadd.f32 %v2835, %v2995
  %v2997 = vpop.f32.mrb[0].mxu0
  %v2998 = vadd.f32 %v2837, %v2997
  %2999 = vmatprep.mubr.f32.mxu0 %v61
  %3000 = vmatmul.mubr.f32.gmra.mrb[0].mxu0 %v60
  %v3001 = vpop.f32.mrb[0].mxu0
  %v3002 = vadd.f32 %v2841, %v3001
  %v3003 = vpop.f32.mrb[0].mxu0
  %v3004 = vadd.f32 %v2843, %v3003
  %3005 = vmatprep.mubr.f32.mxu0 %v69
  %3006 = vmatmul.mubr.f32.gmra.mrb[0].mxu0 %v68
  %v3007 = vpop.f32.mrb[0].mxu0
  %v3008 = vadd.f32 %v2847, %v3007
  %v3009 = vpop.f32.mrb[0].mxu0
  %v3010 = vadd.f32 %v2849, %v3009
  %3011 = vmatprep.mubr.f32.mxu0 %v77
  %3012 = vmatmul.mubr.f32.gmra.mrb[0].mxu0 %v76
  %v3013 = vpop.f32.mrb[0].mxu0
  %v3014 = vadd.f32 %v2853, %v3013
  %v3015 = vpop.f32.mrb[0].mxu0
  %v3016 = vadd.f32 %v2855, %v3015
  %3017 = vmatprep.mubr.f32.mxu0 %v85
  %3018 = vmatmul.mubr.f32.gmra.mrb[0].mxu0 %v84
  %v3019 = vpop.f32.mrb[0].mxu0
  %v3020 = vadd.f32 %v2859, %v3019
  %v3021 = vpop.f32.mrb[0].mxu0
  %v3022 = vadd.f32 %v2861, %v3021
  %3023 = vmatprep.mubr.f32.mxu0 %v93
  %3024 = vmatmul.mubr.f32.gmra.mrb[0].mxu0 %v92
  %v3025 = vpop.f32.mrb[0].mxu0
  %v3026 = vadd.f32 %v2865, %v3025
  %v3027 = vpop.f32.mrb[0].mxu0
  %v3028 = vadd.f32 %v2867, %v3027
  %3029 = vmatprep.mubr.f32.mxu0 %v101
  %3030 = vmatmul.mubr.f32.gmra.mrb[0].mxu0 %v100
  %v3031 = vpop.f32.mrb[0].mxu0
  %v3032 = vadd.f32 %v2871, %v3031
  %v3033 = vpop.f32.mrb[0].mxu0
  %v3034 = vadd.f32 %v2873, %v3033
  %3035 = vmatprep.mubr.f32.mxu0 %v109
  %3036 = vmatmul.mubr.f32.gmra.mrb[0].mxu0 %v108
  %v3037 = vpop.f32.mrb[0].mxu0
  %v3038 = vadd.f32 %v2877, %v3037
  %v3039 = vpop.f32.mrb[0].mxu0
  %v3040 = vadd.f32 %v2879, %v3039
  %3041 = vmatprep.mubr.f32.mxu0 %v117
  %3042 = vmatmul.mubr.f32.gmra.mrb[0].mxu0 %v116
  %v3043 = vpop.f32.mrb[0].mxu0
  %v3044 = vadd.f32 %v2883, %v3043
  %v3045 = vpop.f32.mrb[0].mxu0
  %v3046 = vadd.f32 %v2885, %v3045
  %3047 = vmatprep.mubr.f32.mxu0 %v125
  %3048 = vmatmul.mubr.f32.gmra.mrb[0].mxu0 %v124
  %v3049 = vpop.f32.mrb[0].mxu0
  %v3050 = vadd.f32 %v2889, %v3049
  %v3051 = vpop.f32.mrb[0].mxu0
  %v3052 = vadd.f32 %v2891, %v3051
  %3053 = vmatprep.mubr.f32.mxu0 %v133
  %3054 = vmatmul.mubr.f32.gmra.mrb[0].mxu0 %v132
  %v3055 = vpop.f32.mrb[0].mxu0
  %v3056 = vadd.f32 %v2895, %v3055
  %v3057 = vpop.f32.mrb[0].mxu0
  %v3058 = vadd.f32 %v2897, %v3057
  %3059 = vmatprep.mubr.f32.mxu0 %v141
  %3060 = vmatmul.mubr.f32.gmra.mrb[0].mxu0 %v140
  %v3061 = vpop.f32.mrb[0].mxu0
  %v3062 = vadd.f32 %v2901, %v3061
  %v3063 = vpop.f32.mrb[0].mxu0
  %v3064 = vadd.f32 %v2903, %v3063
  %3065 = vdwg.mxu0
  %3066 = vmatprep.subr.mxu0 0.0
  %3067 = vmatpush1.msra.mxu0 %v148
  %3068 = vmatprep.subr.mxu0 0.0
  %3069 = vmatpush1.msra.mxu0 %v155
  %3070 = vmatprep.subr.mxu0 0.0
  %3071 = vmatpush1.msra.mxu0 %v162
  %3072 = vmatprep.subr.mxu0 0.0
  %3073 = vmatpush1.msra.mxu0 %v169
  %3074 = vmatprep.subr.mxu0 0.0
  %3075 = vmatpush1.msra.mxu0 %v176
  %3076 = vmatprep.subr.mxu0 0.0
  %3077 = vmatpush1.msra.mxu0 %v183
  %3078 = vmatprep.subr.mxu0 0.0
  %3079 = vmatpush1.msra.mxu0 %v190
  %3080 = vmatprep.subr.mxu0 0.0
  %3081 = vmatpush1.msra.mxu0 %v197
  %3082 = vmatprep.subr.mxu0 0.0
  %3083 = vmatpush1.msra.mxu0 %v204
  %3084 = vmatprep.subr.mxu0 0.0
  %3085 = vmatpush1.msra.mxu0 %v211
  %3086 = vmatprep.subr.mxu0 0.0
  %3087 = vmatpush1.msra.mxu0 %v218
  %3088 = vmatprep.subr.mxu0 0.0
  %3089 = vmatpush1.msra.mxu0 %v225
  %3090 = vmatprep.subr.mxu0 0.0
  %3091 = vmatpush1.msra.mxu0 %v232
  %3092 = vmatprep.subr.mxu0 0.0
  %3093 = vmatpush1.msra.mxu0 %v239
  %3094 = vmatprep.subr.mxu0 0.0
  %3095 = vmatpush1.msra.mxu0 %v246
  %3096 = vmatprep.subr.mxu0 0.0
  %3097 = vmatpush1.msra.mxu0 %v253
  %3098 = vmatprep.subr.mxu0 0.0
  %3099 = vmatpush1.msra.mxu0 %v260
  %3100 = vmatprep.subr.mxu0 0.0
  %3101 = vmatpush1.msra.mxu0 %v267
  %3102 = vmatprep.subr.mxu0 0.0
  %3103 = vmatpush1.msra.mxu0 %v274
  %3104 = vmatprep.subr.mxu0 0.0
  %3105 = vmatpush1.msra.mxu0 %v281
  %3106 = vmatprep.subr.mxu0 0.0
  %3107 = vmatpush1.msra.mxu0 %v288
  %3108 = vmatprep.subr.mxu0 0.0
  %3109 = vmatpush1.msra.mxu0 %v295
  %3110 = vmatprep.subr.mxu0 0.0
  %3111 = vmatpush1.msra.mxu0 %v302
  %3112 = vmatprep.subr.mxu0 0.0
  %3113 = vmatpush1.msra.mxu0 %v309
  %3114 = vmatprep.subr.mxu0 0.0
  %3115 = vmatpush1.msra.mxu0 %v316
  %3116 = vmatprep.subr.mxu0 0.0
  %3117 = vmatpush1.msra.mxu0 %v323
  %3118 = vmatprep.subr.mxu0 0.0
  %3119 = vmatpush1.msra.mxu0 %v330
  %3120 = vmatprep.subr.mxu0 0.0
  %3121 = vmatpush1.msra.mxu0 %v337
  %3122 = vmatprep.subr.mxu0 0.0
  %3123 = vmatpush1.msra.mxu0 %v344
  %3124 = vmatprep.subr.mxu0 0.0
  %3125 = vmatpush1.msra.mxu0 %v351
  %3126 = vmatprep.subr.mxu0 0.0
  %3127 = vmatpush1.msra.mxu0 %v358
  %3128 = vmatprep.subr.mxu0 0.0
  %3129 = vmatpush1.msra.mxu0 %v365
  %3130 = vmatprep.mubr.f32.mxu0 %v15
  %3131 = vmatmul.mubr.f32.gmra.mrb[0].mxu0 %v14
  %v3132 = vpop.f32.mrb[0].mxu0
  %v3133 = vadd.f32 %v1057, %v3132
  %v3134 = vpop.f32.mrb[0].mxu0
  %3135 = vmatprep.mubr.f32.mxu0 %v23
  %3136 = vmatmul.mubr.f32.gmra.mrb[0].mxu0 %v22
  %v3137 = vpop.f32.mrb[0].mxu0
  %v3138 = vadd.f32 %v1062, %v3137
  %v3139 = vpop.f32.mrb[0].mxu0
  %3140 = vmatprep.mubr.f32.mxu0 %v31
  %3141 = vmatmul.mubr.f32.gmra.mrb[0].mxu0 %v30
  %v3142 = vpop.f32.mrb[0].mxu0
  %v3143 = vadd.f32 %v1067, %v3142
  %v3144 = vpop.f32.mrb[0].mxu0
  %3145 = vmatprep.mubr.f32.mxu0 %v39
  %3146 = vmatmul.mubr.f32.gmra.mrb[0].mxu0 %v38
  %v3147 = vpop.f32.mrb[0].mxu0
  %v3148 = vadd.f32 %v1072, %v3147
  %v3149 = vpop.f32.mrb[0].mxu0
  %3150 = vmatprep.mubr.f32.mxu0 %v47
  %3151 = vmatmul.mubr.f32.gmra.mrb[0].mxu0 %v46
  %v3152 = vpop.f32.mrb[0].mxu0
  %v3153 = vadd.f32 %v1077, %v3152
  %v3154 = vpop.f32.mrb[0].mxu0
  %3155 = vmatprep.mubr.f32.mxu0 %v55
  %3156 = vmatmul.mubr.f32.gmra.mrb[0].mxu0 %v54
  %v3157 = vpop.f32.mrb[0].mxu0
  %v3158 = vadd.f32 %v1082, %v3157
  %v3159 = vpop.f32.mrb[0].mxu0
  %3160 = vmatprep.mubr.f32.mxu0 %v63
  %3161 = vmatmul.mubr.f32.gmra.mrb[0].mxu0 %v62
  %v3162 = vpop.f32.mrb[0].mxu0
  %v3163 = vadd.f32 %v1087, %v3162
  %v3164 = vpop.f32.mrb[0].mxu0
  %3165 = vmatprep.mubr.f32.mxu0 %v71
  %3166 = vmatmul.mubr.f32.gmra.mrb[0].mxu0 %v70
  %v3167 = vpop.f32.mrb[0].mxu0
  %v3168 = vadd.f32 %v1092, %v3167
  %v3169 = vpop.f32.mrb[0].mxu0
  %3170 = vmatprep.mubr.f32.mxu0 %v79
  %3171 = vmatmul.mubr.f32.gmra.mrb[0].mxu0 %v78
  %v3172 = vpop.f32.mrb[0].mxu0
  %v3173 = vadd.f32 %v1097, %v3172
  %v3174 = vpop.f32.mrb[0].mxu0
  %3175 = vmatprep.mubr.f32.mxu0 %v87
  %3176 = vmatmul.mubr.f32.gmra.mrb[0].mxu0 %v86
  %v3177 = vpop.f32.mrb[0].mxu0
  %v3178 = vadd.f32 %v1102, %v3177
  %v3179 = vpop.f32.mrb[0].mxu0
  %3180 = vmatprep.mubr.f32.mxu0 %v95
  %3181 = vmatmul.mubr.f32.gmra.mrb[0].mxu0 %v94
  %v3182 = vpop.f32.mrb[0].mxu0
  %v3183 = vadd.f32 %v1107, %v3182
  %v3184 = vpop.f32.mrb[0].mxu0
  %3185 = vmatprep.mubr.f32.mxu0 %v103
  %3186 = vmatmul.mubr.f32.gmra.mrb[0].mxu0 %v102
  %v3187 = vpop.f32.mrb[0].mxu0
  %v3188 = vadd.f32 %v1112, %v3187
  %v3189 = vpop.f32.mrb[0].mxu0
  %3190 = vmatprep.mubr.f32.mxu0 %v111
  %3191 = vmatmul.mubr.f32.gmra.mrb[0].mxu0 %v110
  %v3192 = vpop.f32.mrb[0].mxu0
  %v3193 = vadd.f32 %v1117, %v3192
  %v3194 = vpop.f32.mrb[0].mxu0
  %3195 = vmatprep.mubr.f32.mxu0 %v119
  %3196 = vmatmul.mubr.f32.gmra.mrb[0].mxu0 %v118
  %v3197 = vpop.f32.mrb[0].mxu0
  %v3198 = vadd.f32 %v1122, %v3197
  %v3199 = vpop.f32.mrb[0].mxu0
  %3200 = vmatprep.mubr.f32.mxu0 %v127
  %3201 = vmatmul.mubr.f32.gmra.mrb[0].mxu0 %v126
  %v3202 = vpop.f32.mrb[0].mxu0
  %v3203 = vadd.f32 %v1127, %v3202
  %v3204 = vpop.f32.mrb[0].mxu0
  %3205 = vmatprep.mubr.f32.mxu0 %v135
  %3206 = vmatmul.mubr.f32.gmra.mrb[0].mxu0 %v134
  %v3207 = vpop.f32.mrb[0].mxu0
  %v3208 = vadd.f32 %v1132, %v3207
  %v3209 = vpop.f32.mrb[0].mxu0
  %3210 = vdwg.mxu0
  %3211 = vmatprep.subr.mxu0 0.0
  %3212 = vmatpush1.msra.mxu0 %v372
  %3213 = vmatprep.subr.mxu0 0.0
  %3214 = vmatpush1.msra.mxu0 %v379
  %3215 = vmatprep.subr.mxu0 0.0
  %3216 = vmatpush1.msra.mxu0 %v386
  %3217 = vmatprep.subr.mxu0 0.0
  %3218 = vmatpush1.msra.mxu0 %v393
  %3219 = vmatprep.subr.mxu0 0.0
  %3220 = vmatpush1.msra.mxu0 %v400
  %3221 = vmatprep.subr.mxu0 0.0
  %3222 = vmatpush1.msra.mxu0 %v407
  %3223 = vmatprep.subr.mxu0 0.0
  %3224 = vmatpush1.msra.mxu0 %v414
  %3225 = vmatprep.subr.mxu0 0.0
  %3226 = vmatpush1.msra.mxu0 %v421
  %3227 = vmatprep.subr.mxu0 0.0
  %3228 = vmatpush1.msra.mxu0 %v428
  %3229 = vmatprep.subr.mxu0 0.0
  %3230 = vmatpush1.msra.mxu0 %v435
  %3231 = vmatprep.subr.mxu0 0.0
  %3232 = vmatpush1.msra.mxu0 %v442
  %3233 = vmatprep.subr.mxu0 0.0
  %3234 = vmatpush1.msra.mxu0 %v449
  %3235 = vmatprep.subr.mxu0 0.0
  %3236 = vmatpush1.msra.mxu0 %v456
  %3237 = vmatprep.subr.mxu0 0.0
  %3238 = vmatpush1.msra.mxu0 %v463
  %3239 = vmatprep.subr.mxu0 0.0
  %3240 = vmatpush1.msra.mxu0 %v470
  %3241 = vmatprep.subr.mxu0 0.0
  %3242 = vmatpush1.msra.mxu0 %v477
  %3243 = vmatprep.subr.mxu0 0.0
  %3244 = vmatpush1.msra.mxu0 %v484
  %3245 = vmatprep.subr.mxu0 0.0
  %3246 = vmatpush1.msra.mxu0 %v491
  %3247 = vmatprep.subr.mxu0 0.0
  %3248 = vmatpush1.msra.mxu0 %v498
  %3249 = vmatprep.subr.mxu0 0.0
  %3250 = vmatpush1.msra.mxu0 %v505
  %3251 = vmatprep.subr.mxu0 0.0
  %3252 = vmatpush1.msra.mxu0 %v512
  %3253 = vmatprep.subr.mxu0 0.0
  %3254 = vmatpush1.msra.mxu0 %v519
  %3255 = vmatprep.subr.mxu0 0.0
  %3256 = vmatpush1.msra.mxu0 %v526
  %3257 = vmatprep.subr.mxu0 0.0
  %3258 = vmatpush1.msra.mxu0 %v533
  %3259 = vmatprep.subr.mxu0 0.0
  %3260 = vmatpush1.msra.mxu0 %v540
  %3261 = vmatprep.subr.mxu0 0.0
  %3262 = vmatpush1.msra.mxu0 %v547
  %3263 = vmatprep.subr.mxu0 0.0
  %3264 = vmatpush1.msra.mxu0 %v554
  %3265 = vmatprep.subr.mxu0 0.0
  %3266 = vmatpush1.msra.mxu0 %v561
  %3267 = vmatprep.subr.mxu0 0.0
  %3268 = vmatpush1.msra.mxu0 %v568
  %3269 = vmatprep.subr.mxu0 0.0
  %3270 = vmatpush1.msra.mxu0 %v575
  %3271 = vmatprep.subr.mxu0 0.0
  %3272 = vmatpush1.msra.mxu0 %v582
  %3273 = vmatprep.subr.mxu0 0.0
  %3274 = vmatpush1.msra.mxu0 %v589
  %3275 = vmatprep.mubr.f32.mxu0 %v17
  %3276 = vmatmul.mubr.f32.gmra.mrb[0].mxu0 %v16
  %v3277 = vpop.f32.mrb[0].mxu0
  %v3278 = vadd.f32 %v3133, %v3277
  %v3279 = vpop.f32.mrb[0].mxu0
  %3280 = vmatprep.mubr.f32.mxu0 %v25
  %3281 = vmatmul.mubr.f32.gmra.mrb[0].mxu0 %v24
  %v3282 = vpop.f32.mrb[0].mxu0
  %v3283 = vadd.f32 %v3138, %v3282
  %v3284 = vpop.f32.mrb[0].mxu0
  %3285 = vmatprep.mubr.f32.mxu0 %v33
  %3286 = vmatmul.mubr.f32.gmra.mrb[0].mxu0 %v32
  %v3287 = vpop.f32.mrb[0].mxu0
  %v3288 = vadd.f32 %v3143, %v3287
  %v3289 = vpop.f32.mrb[0].mxu0
  %3290 = vmatprep.mubr.f32.mxu0 %v41
  %3291 = vmatmul.mubr.f32.gmra.mrb[0].mxu0 %v40
  %v3292 = vpop.f32.mrb[0].mxu0
  %v3293 = vadd.f32 %v3148, %v3292
  %v3294 = vpop.f32.mrb[0].mxu0
  %3295 = vmatprep.mubr.f32.mxu0 %v49
  %3296 = vmatmul.mubr.f32.gmra.mrb[0].mxu0 %v48
  %v3297 = vpop.f32.mrb[0].mxu0
  %v3298 = vadd.f32 %v3153, %v3297
  %v3299 = vpop.f32.mrb[0].mxu0
  %3300 = vmatprep.mubr.f32.mxu0 %v57
  %3301 = vmatmul.mubr.f32.gmra.mrb[0].mxu0 %v56
  %v3302 = vpop.f32.mrb[0].mxu0
  %v3303 = vadd.f32 %v3158, %v3302
  %v3304 = vpop.f32.mrb[0].mxu0
  %3305 = vmatprep.mubr.f32.mxu0 %v65
  %3306 = vmatmul.mubr.f32.gmra.mrb[0].mxu0 %v64
  %v3307 = vpop.f32.mrb[0].mxu0
  %v3308 = vadd.f32 %v3163, %v3307
  %v3309 = vpop.f32.mrb[0].mxu0
  %3310 = vmatprep.mubr.f32.mxu0 %v73
  %3311 = vmatmul.mubr.f32.gmra.mrb[0].mxu0 %v72
  %v3312 = vpop.f32.mrb[0].mxu0
  %v3313 = vadd.f32 %v3168, %v3312
  %v3314 = vpop.f32.mrb[0].mxu0
  %3315 = vmatprep.mubr.f32.mxu0 %v81
  %3316 = vmatmul.mubr.f32.gmra.mrb[0].mxu0 %v80
  %v3317 = vpop.f32.mrb[0].mxu0
  %v3318 = vadd.f32 %v3173, %v3317
  %v3319 = vpop.f32.mrb[0].mxu0
  %3320 = vmatprep.mubr.f32.mxu0 %v89
  %3321 = vmatmul.mubr.f32.gmra.mrb[0].mxu0 %v88
  %v3322 = vpop.f32.mrb[0].mxu0
  %v3323 = vadd.f32 %v3178, %v3322
  %v3324 = vpop.f32.mrb[0].mxu0
  %3325 = vmatprep.mubr.f32.mxu0 %v97
  %3326 = vmatmul.mubr.f32.gmra.mrb[0].mxu0 %v96
  %v3327 = vpop.f32.mrb[0].mxu0
  %v3328 = vadd.f32 %v3183, %v3327
  %v3329 = vpop.f32.mrb[0].mxu0
  %3330 = vmatprep.mubr.f32.mxu0 %v105
  %3331 = vmatmul.mubr.f32.gmra.mrb[0].mxu0 %v104
  %v3332 = vpop.f32.mrb[0].mxu0
  %v3333 = vadd.f32 %v3188, %v3332
  %v3334 = vpop.f32.mrb[0].mxu0
  %3335 = vmatprep.mubr.f32.mxu0 %v113
  %3336 = vmatmul.mubr.f32.gmra.mrb[0].mxu0 %v112
  %v3337 = vpop.f32.mrb[0].mxu0
  %v3338 = vadd.f32 %v3193, %v3337
  %v3339 = vpop.f32.mrb[0].mxu0
  %3340 = vmatprep.mubr.f32.mxu0 %v121
  %3341 = vmatmul.mubr.f32.gmra.mrb[0].mxu0 %v120
  %v3342 = vpop.f32.mrb[0].mxu0
  %v3343 = vadd.f32 %v3198, %v3342
  %v3344 = vpop.f32.mrb[0].mxu0
  %3345 = vmatprep.mubr.f32.mxu0 %v129
  %3346 = vmatmul.mubr.f32.gmra.mrb[0].mxu0 %v128
  %v3347 = vpop.f32.mrb[0].mxu0
  %v3348 = vadd.f32 %v3203, %v3347
  %v3349 = vpop.f32.mrb[0].mxu0
  %3350 = vmatprep.mubr.f32.mxu0 %v137
  %3351 = vmatmul.mubr.f32.gmra.mrb[0].mxu0 %v136
  %v3352 = vpop.f32.mrb[0].mxu0
  %v3353 = vadd.f32 %v3208, %v3352
  %v3354 = vpop.f32.mrb[0].mxu0
  %3355 = vdwg.mxu0
  %3356 = vmatprep.subr.mxu0 0.0
  %3357 = vmatpush1.msra.mxu0 %v596
  %3358 = vmatprep.subr.mxu0 0.0
  %3359 = vmatpush1.msra.mxu0 %v603
  %3360 = vmatprep.subr.mxu0 0.0
  %3361 = vmatpush1.msra.mxu0 %v610
  %3362 = vmatprep.subr.mxu0 0.0
  %3363 = vmatpush1.msra.mxu0 %v617
  %3364 = vmatprep.subr.mxu0 0.0
  %3365 = vmatpush1.msra.mxu0 %v624
  %3366 = vmatprep.subr.mxu0 0.0
  %3367 = vmatpush1.msra.mxu0 %v631
  %3368 = vmatprep.subr.mxu0 0.0
  %3369 = vmatpush1.msra.mxu0 %v638
  %3370 = vmatprep.subr.mxu0 0.0
  %3371 = vmatpush1.msra.mxu0 %v645
  %3372 = vmatprep.subr.mxu0 0.0
  %3373 = vmatpush1.msra.mxu0 %v652
  %3374 = vmatprep.subr.mxu0 0.0
  %3375 = vmatpush1.msra.mxu0 %v659
  %3376 = vmatprep.subr.mxu0 0.0
  %3377 = vmatpush1.msra.mxu0 %v666
  %3378 = vmatprep.subr.mxu0 0.0
  %3379 = vmatpush1.msra.mxu0 %v673
  %3380 = vmatprep.subr.mxu0 0.0
  %3381 = vmatpush1.msra.mxu0 %v680
  %3382 = vmatprep.subr.mxu0 0.0
  %3383 = vmatpush1.msra.mxu0 %v687
  %3384 = vmatprep.subr.mxu0 0.0
  %3385 = vmatpush1.msra.mxu0 %v694
  %3386 = vmatprep.subr.mxu0 0.0
  %3387 = vmatpush1.msra.mxu0 %v701
  %3388 = vmatprep.subr.mxu0 0.0
  %3389 = vmatpush1.msra.mxu0 %v708
  %3390 = vmatprep.subr.mxu0 0.0
  %3391 = vmatpush1.msra.mxu0 %v715
  %3392 = vmatprep.subr.mxu0 0.0
  %3393 = vmatpush1.msra.mxu0 %v722
  %3394 = vmatprep.subr.mxu0 0.0
  %3395 = vmatpush1.msra.mxu0 %v729
  %3396 = vmatprep.subr.mxu0 0.0
  %3397 = vmatpush1.msra.mxu0 %v736
  %3398 = vmatprep.subr.mxu0 0.0
  %3399 = vmatpush1.msra.mxu0 %v743
  %3400 = vmatprep.subr.mxu0 0.0
  %3401 = vmatpush1.msra.mxu0 %v750
  %3402 = vmatprep.subr.mxu0 0.0
  %3403 = vmatpush1.msra.mxu0 %v757
  %3404 = vmatprep.subr.mxu0 0.0
  %3405 = vmatpush1.msra.mxu0 %v764
  %3406 = vmatprep.subr.mxu0 0.0
  %3407 = vmatpush1.msra.mxu0 %v771
  %3408 = vmatprep.subr.mxu0 0.0
  %3409 = vmatpush1.msra.mxu0 %v778
  %3410 = vmatprep.subr.mxu0 0.0
  %3411 = vmatpush1.msra.mxu0 %v785
  %3412 = vmatprep.subr.mxu0 0.0
  %3413 = vmatpush1.msra.mxu0 %v792
  %3414 = vmatprep.subr.mxu0 0.0
  %3415 = vmatpush1.msra.mxu0 %v799
  %3416 = vmatprep.subr.mxu0 0.0
  %3417 = vmatpush1.msra.mxu0 %v806
  %3418 = vmatprep.subr.mxu0 0.0
  %3419 = vmatpush1.msra.mxu0 %v813
  %3420 = vmatprep.mubr.f32.mxu0 %v19
  %3421 = vmatmul.mubr.f32.gmra.mrb[0].mxu0 %v18
  %v3422 = vpop.f32.mrb[0].mxu0
  %v3423 = vadd.f32 %v3278, %v3422
  %v3424 = vpop.f32.mrb[0].mxu0
  %3425 = vmatprep.mubr.f32.mxu0 %v27
  %3426 = vmatmul.mubr.f32.gmra.mrb[0].mxu0 %v26
  %v3427 = vpop.f32.mrb[0].mxu0
  %v3428 = vadd.f32 %v3283, %v3427
  %v3429 = vpop.f32.mrb[0].mxu0
  %3430 = vmatprep.mubr.f32.mxu0 %v35
  %3431 = vmatmul.mubr.f32.gmra.mrb[0].mxu0 %v34
  %v3432 = vpop.f32.mrb[0].mxu0
  %v3433 = vadd.f32 %v3288, %v3432
  %v3434 = vpop.f32.mrb[0].mxu0
  %3435 = vmatprep.mubr.f32.mxu0 %v43
  %3436 = vmatmul.mubr.f32.gmra.mrb[0].mxu0 %v42
  %v3437 = vpop.f32.mrb[0].mxu0
  %v3438 = vadd.f32 %v3293, %v3437
  %v3439 = vpop.f32.mrb[0].mxu0
  %3440 = vmatprep.mubr.f32.mxu0 %v51
  %3441 = vmatmul.mubr.f32.gmra.mrb[0].mxu0 %v50
  %v3442 = vpop.f32.mrb[0].mxu0
  %v3443 = vadd.f32 %v3298, %v3442
  %v3444 = vpop.f32.mrb[0].mxu0
  %3445 = vmatprep.mubr.f32.mxu0 %v59
  %3446 = vmatmul.mubr.f32.gmra.mrb[0].mxu0 %v58
  %v3447 = vpop.f32.mrb[0].mxu0
  %v3448 = vadd.f32 %v3303, %v3447
  %v3449 = vpop.f32.mrb[0].mxu0
  %3450 = vmatprep.mubr.f32.mxu0 %v67
  %3451 = vmatmul.mubr.f32.gmra.mrb[0].mxu0 %v66
  %v3452 = vpop.f32.mrb[0].mxu0
  %v3453 = vadd.f32 %v3308, %v3452
  %v3454 = vpop.f32.mrb[0].mxu0
  %3455 = vmatprep.mubr.f32.mxu0 %v75
  %3456 = vmatmul.mubr.f32.gmra.mrb[0].mxu0 %v74
  %v3457 = vpop.f32.mrb[0].mxu0
  %v3458 = vadd.f32 %v3313, %v3457
  %v3459 = vpop.f32.mrb[0].mxu0
  %3460 = vmatprep.mubr.f32.mxu0 %v83
  %3461 = vmatmul.mubr.f32.gmra.mrb[0].mxu0 %v82
  %v3462 = vpop.f32.mrb[0].mxu0
  %v3463 = vadd.f32 %v3318, %v3462
  %v3464 = vpop.f32.mrb[0].mxu0
  %3465 = vmatprep.mubr.f32.mxu0 %v91
  %3466 = vmatmul.mubr.f32.gmra.mrb[0].mxu0 %v90
  %v3467 = vpop.f32.mrb[0].mxu0
  %v3468 = vadd.f32 %v3323, %v3467
  %v3469 = vpop.f32.mrb[0].mxu0
  %3470 = vmatprep.mubr.f32.mxu0 %v99
  %3471 = vmatmul.mubr.f32.gmra.mrb[0].mxu0 %v98
  %v3472 = vpop.f32.mrb[0].mxu0
  %v3473 = vadd.f32 %v3328, %v3472
  %v3474 = vpop.f32.mrb[0].mxu0
  %3475 = vmatprep.mubr.f32.mxu0 %v107
  %3476 = vmatmul.mubr.f32.gmra.mrb[0].mxu0 %v106
  %v3477 = vpop.f32.mrb[0].mxu0
  %v3478 = vadd.f32 %v3333, %v3477
  %v3479 = vpop.f32.mrb[0].mxu0
  %3480 = vmatprep.mubr.f32.mxu0 %v115
  %3481 = vmatmul.mubr.f32.gmra.mrb[0].mxu0 %v114
  %v3482 = vpop.f32.mrb[0].mxu0
  %v3483 = vadd.f32 %v3338, %v3482
  %v3484 = vpop.f32.mrb[0].mxu0
  %3485 = vmatprep.mubr.f32.mxu0 %v123
  %3486 = vmatmul.mubr.f32.gmra.mrb[0].mxu0 %v122
  %v3487 = vpop.f32.mrb[0].mxu0
  %v3488 = vadd.f32 %v3343, %v3487
  %v3489 = vpop.f32.mrb[0].mxu0
  %3490 = vmatprep.mubr.f32.mxu0 %v131
  %3491 = vmatmul.mubr.f32.gmra.mrb[0].mxu0 %v130
  %v3492 = vpop.f32.mrb[0].mxu0
  %v3493 = vadd.f32 %v3348, %v3492
  %v3494 = vpop.f32.mrb[0].mxu0
  %3495 = vmatprep.mubr.f32.mxu0 %v139
  %3496 = vmatmul.mubr.f32.gmra.mrb[0].mxu0 %v138
  %v3497 = vpop.f32.mrb[0].mxu0
  %v3498 = vadd.f32 %v3353, %v3497
  %v3499 = vpop.f32.mrb[0].mxu0
  %3500 = vdwg.mxu0
  %3501 = vmatprep.subr.mxu0 0.0
  %3502 = vmatpush1.msra.mxu0 %v820
  %3503 = vmatprep.subr.mxu0 0.0
  %3504 = vmatpush1.msra.mxu0 %v827
  %3505 = vmatprep.subr.mxu0 0.0
  %3506 = vmatpush1.msra.mxu0 %v834
  %3507 = vmatprep.subr.mxu0 0.0
  %3508 = vmatpush1.msra.mxu0 %v841
  %3509 = vmatprep.subr.mxu0 0.0
  %3510 = vmatpush1.msra.mxu0 %v848
  %3511 = vmatprep.subr.mxu0 0.0
  %3512 = vmatpush1.msra.mxu0 %v855
  %3513 = vmatprep.subr.mxu0 0.0
  %3514 = vmatpush1.msra.mxu0 %v862
  %3515 = vmatprep.subr.mxu0 0.0
  %3516 = vmatpush1.msra.mxu0 %v869
  %3517 = vmatprep.subr.mxu0 0.0
  %3518 = vmatpush1.msra.mxu0 %v876
  %3519 = vmatprep.subr.mxu0 0.0
  %3520 = vmatpush1.msra.mxu0 %v883
  %3521 = vmatprep.subr.mxu0 0.0
  %3522 = vmatpush1.msra.mxu0 %v890
  %3523 = vmatprep.subr.mxu0 0.0
  %3524 = vmatpush1.msra.mxu0 %v897
  %3525 = vmatprep.subr.mxu0 0.0
  %3526 = vmatpush1.msra.mxu0 %v904
  %3527 = vmatprep.subr.mxu0 0.0
  %3528 = vmatpush1.msra.mxu0 %v911
  %3529 = vmatprep.subr.mxu0 0.0
  %3530 = vmatpush1.msra.mxu0 %v918
  %3531 = vmatprep.subr.mxu0 0.0
  %3532 = vmatpush1.msra.mxu0 %v925
  %3533 = vmatprep.subr.mxu0 0.0
  %3534 = vmatpush1.msra.mxu0 %v932
  %3535 = vmatprep.subr.mxu0 0.0
  %3536 = vmatpush1.msra.mxu0 %v939
  %3537 = vmatprep.subr.mxu0 0.0
  %3538 = vmatpush1.msra.mxu0 %v946
  %3539 = vmatprep.subr.mxu0 0.0
  %3540 = vmatpush1.msra.mxu0 %v953
  %3541 = vmatprep.subr.mxu0 0.0
  %3542 = vmatpush1.msra.mxu0 %v960
  %3543 = vmatprep.subr.mxu0 0.0
  %3544 = vmatpush1.msra.mxu0 %v967
  %3545 = vmatprep.subr.mxu0 0.0
  %3546 = vmatpush1.msra.mxu0 %v974
  %3547 = vmatprep.subr.mxu0 0.0
  %3548 = vmatpush1.msra.mxu0 %v981
  %3549 = vmatprep.subr.mxu0 0.0
  %3550 = vmatpush1.msra.mxu0 %v988
  %3551 = vmatprep.subr.mxu0 0.0
  %3552 = vmatpush1.msra.mxu0 %v995
  %3553 = vmatprep.subr.mxu0 0.0
  %3554 = vmatpush1.msra.mxu0 %v1002
  %3555 = vmatprep.subr.mxu0 0.0
  %3556 = vmatpush1.msra.mxu0 %v1009
  %3557 = vmatprep.subr.mxu0 0.0
  %3558 = vmatpush1.msra.mxu0 %v1016
  %3559 = vmatprep.subr.mxu0 0.0
  %3560 = vmatpush1.msra.mxu0 %v1023
  %3561 = vmatprep.subr.mxu0 0.0
  %3562 = vmatpush1.msra.mxu0 %v1030
  %3563 = vmatprep.subr.mxu0 0.0
  %3564 = vmatpush1.msra.mxu0 %v1037
  %3565 = vmatprep.mubr.f32.mxu0 %v21
  %3566 = vmatmul.mubr.f32.gmra.mrb[0].mxu0 %v20
  %v3567 = vpop.f32.mrb[0].mxu0
  %v3568 = vadd.f32 %v3423, %v3567
  %v3569 = vpop.f32.mrb[0].mxu0
  %3570 = vmatprep.mubr.f32.mxu0 %v29
  %3571 = vmatmul.mubr.f32.gmra.mrb[0].mxu0 %v28
  %v3572 = vpop.f32.mrb[0].mxu0
  %v3573 = vadd.f32 %v3428, %v3572
  %v3574 = vpop.f32.mrb[0].mxu0
  %3575 = vmatprep.mubr.f32.mxu0 %v37
  %3576 = vmatmul.mubr.f32.gmra.mrb[0].mxu0 %v36
  %v3577 = vpop.f32.mrb[0].mxu0
  %v3578 = vadd.f32 %v3433, %v3577
  %v3579 = vpop.f32.mrb[0].mxu0
  %3580 = vmatprep.mubr.f32.mxu0 %v45
  %3581 = vmatmul.mubr.f32.gmra.mrb[0].mxu0 %v44
  %v3582 = vpop.f32.mrb[0].mxu0
  %v3583 = vadd.f32 %v3438, %v3582
  %v3584 = vpop.f32.mrb[0].mxu0
  %3585 = vmatprep.mubr.f32.mxu0 %v53
  %3586 = vmatmul.mubr.f32.gmra.mrb[0].mxu0 %v52
  %v3587 = vpop.f32.mrb[0].mxu0
  %v3588 = vadd.f32 %v3443, %v3587
  %v3589 = vpop.f32.mrb[0].mxu0
  %3590 = vmatprep.mubr.f32.mxu0 %v61
  %3591 = vmatmul.mubr.f32.gmra.mrb[0].mxu0 %v60
  %v3592 = vpop.f32.mrb[0].mxu0
  %v3593 = vadd.f32 %v3448, %v3592
  %v3594 = vpop.f32.mrb[0].mxu0
  %3595 = vmatprep.mubr.f32.mxu0 %v69
  %3596 = vmatmul.mubr.f32.gmra.mrb[0].mxu0 %v68
  %v3597 = vpop.f32.mrb[0].mxu0
  %v3598 = vadd.f32 %v3453, %v3597
  %v3599 = vpop.f32.mrb[0].mxu0
  %3600 = vmatprep.mubr.f32.mxu0 %v77
  %3601 = vmatmul.mubr.f32.gmra.mrb[0].mxu0 %v76
  %v3602 = vpop.f32.mrb[0].mxu0
  %v3603 = vadd.f32 %v3458, %v3602
  %v3604 = vpop.f32.mrb[0].mxu0
  %3605 = vmatprep.mubr.f32.mxu0 %v85
  %3606 = vmatmul.mubr.f32.gmra.mrb[0].mxu0 %v84
  %v3607 = vpop.f32.mrb[0].mxu0
  %v3608 = vadd.f32 %v3463, %v3607
  %v3609 = vpop.f32.mrb[0].mxu0
  %3610 = vmatprep.mubr.f32.mxu0 %v93
  %3611 = vmatmul.mubr.f32.gmra.mrb[0].mxu0 %v92
  %v3612 = vpop.f32.mrb[0].mxu0
  %v3613 = vadd.f32 %v3468, %v3612
  %v3614 = vpop.f32.mrb[0].mxu0
  %3615 = vmatprep.mubr.f32.mxu0 %v101
  %3616 = vmatmul.mubr.f32.gmra.mrb[0].mxu0 %v100
  %v3617 = vpop.f32.mrb[0].mxu0
  %v3618 = vadd.f32 %v3473, %v3617
  %v3619 = vpop.f32.mrb[0].mxu0
  %3620 = vmatprep.mubr.f32.mxu0 %v109
  %3621 = vmatmul.mubr.f32.gmra.mrb[0].mxu0 %v108
  %v3622 = vpop.f32.mrb[0].mxu0
  %v3623 = vadd.f32 %v3478, %v3622
  %v3624 = vpop.f32.mrb[0].mxu0
  %3625 = vmatprep.mubr.f32.mxu0 %v117
  %3626 = vmatmul.mubr.f32.gmra.mrb[0].mxu0 %v116
  %v3627 = vpop.f32.mrb[0].mxu0
  %v3628 = vadd.f32 %v3483, %v3627
  %v3629 = vpop.f32.mrb[0].mxu0
  %3630 = vmatprep.mubr.f32.mxu0 %v125
  %3631 = vmatmul.mubr.f32.gmra.mrb[0].mxu0 %v124
  %v3632 = vpop.f32.mrb[0].mxu0
  %v3633 = vadd.f32 %v3488, %v3632
  %v3634 = vpop.f32.mrb[0].mxu0
  %3635 = vmatprep.mubr.f32.mxu0 %v133
  %3636 = vmatmul.mubr.f32.gmra.mrb[0].mxu0 %v132
  %v3637 = vpop.f32.mrb[0].mxu0
  %v3638 = vadd.f32 %v3493, %v3637
  %v3639 = vpop.f32.mrb[0].mxu0
  %3640 = vmatprep.mubr.f32.mxu0 %v141
  %3641 = vmatmul.mubr.f32.gmra.mrb[0].mxu0 %v140
  %v3642 = vpop.f32.mrb[0].mxu0
  %v3643 = vadd.f32 %v3498, %v3642
  %v3644 = vpop.f32.mrb[0].mxu0
  %3645 = vdwg.mxu0
  %3646 = vst [vmem:[%s3] sm:$0xff] %v1684
  %3647 = vst [vmem:[%s3 + $0x8] sm:$0xff] %v1686
  %3648 = vst [vmem:[%s3 + $0x10] sm:$0xff] %v2328
  %3649 = vst [vmem:[%s3 + $0x18] sm:$0xff] %v2330
  %3650 = vst [vmem:[%s3 + $0x20] sm:$0xff] %v2972
  %3651 = vst [vmem:[%s3 + $0x28] sm:$0xff] %v2974
  %vm3652 = vcmask 130048
  %3653 = vst.msk [vmem:[%s3 + $0x30] sm:$0xff] %vm3652, %v3568
  %3654 = vst [vmem:[%s3 + $0x38] sm:$0xff] %v1690
  %3655 = vst [vmem:[%s3 + $0x40] sm:$0xff] %v1692
  %3656 = vst [vmem:[%s3 + $0x48] sm:$0xff] %v2334
  %3657 = vst [vmem:[%s3 + $0x50] sm:$0xff] %v2336
  %3658 = vst [vmem:[%s3 + $0x58] sm:$0xff] %v2978
  %3659 = vst [vmem:[%s3 + $0x60] sm:$0xff] %v2980
  %3660 = vst.msk [vmem:[%s3 + $0x68] sm:$0xff] %vm3652, %v3573
  %3661 = vst [vmem:[%s3 + $0x70] sm:$0xff] %v1696
  %3662 = vst [vmem:[%s3 + $0x78] sm:$0xff] %v1698
  %3663 = vst [vmem:[%s3 + $0x80] sm:$0xff] %v2340
  %3664 = vst [vmem:[%s3 + $0x88] sm:$0xff] %v2342
  %3665 = vst [vmem:[%s3 + $0x90] sm:$0xff] %v2984
  %3666 = vst [vmem:[%s3 + $0x98] sm:$0xff] %v2986
  %3667 = vst.msk [vmem:[%s3 + $0xa0] sm:$0xff] %vm3652, %v3578
  %3668 = vst [vmem:[%s3 + $0xa8] sm:$0xff] %v1702
  %3669 = vst [vmem:[%s3 + $0xb0] sm:$0xff] %v1704
  %3670 = vst [vmem:[%s3 + $0xb8] sm:$0xff] %v2346
  %3671 = vst [vmem:[%s3 + $0xc0] sm:$0xff] %v2348
  %3672 = vst [vmem:[%s3 + $0xc8] sm:$0xff] %v2990
  %3673 = vst [vmem:[%s3 + $0xd0] sm:$0xff] %v2992
  %3674 = vst.msk [vmem:[%s3 + $0xd8] sm:$0xff] %vm3652, %v3583
  %3675 = vst [vmem:[%s3 + $0xe0] sm:$0xff] %v1708
  %3676 = vst [vmem:[%s3 + $0xe8] sm:$0xff] %v1710
  %3677 = vst [vmem:[%s3 + $0xf0] sm:$0xff] %v2352
  %3678 = vst [vmem:[%s3 + $0xf8] sm:$0xff] %v2354
  %3679 = vst [vmem:[%s3 + $0x100] sm:$0xff] %v2996
  %3680 = vst [vmem:[%s3 + $0x108] sm:$0xff] %v2998
  %3681 = vst.msk [vmem:[%s3 + $0x110] sm:$0xff] %vm3652, %v3588
  %3682 = vst [vmem:[%s3 + $0x118] sm:$0xff] %v1714
  %3683 = vst [vmem:[%s3 + $0x120] sm:$0xff] %v1716
  %3684 = vst [vmem:[%s3 + $0x128] sm:$0xff] %v2358
  %3685 = vst [vmem:[%s3 + $0x130] sm:$0xff] %v2360
  %3686 = vst [vmem:[%s3 + $0x138] sm:$0xff] %v3002
  %3687 = vst [vmem:[%s3 + $0x140] sm:$0xff] %v3004
  %3688 = vst.msk [vmem:[%s3 + $0x148] sm:$0xff] %vm3652, %v3593
  %3689 = vst [vmem:[%s3 + $0x150] sm:$0xff] %v1720
  %3690 = vst [vmem:[%s3 + $0x158] sm:$0xff] %v1722
  %3691 = vst [vmem:[%s3 + $0x160] sm:$0xff] %v2364
  %3692 = vst [vmem:[%s3 + $0x168] sm:$0xff] %v2366
  %3693 = vst [vmem:[%s3 + $0x170] sm:$0xff] %v3008
  %3694 = vst [vmem:[%s3 + $0x178] sm:$0xff] %v3010
  %3695 = vst.msk [vmem:[%s3 + $0x180] sm:$0xff] %vm3652, %v3598
  %3696 = vst [vmem:[%s3 + $0x188] sm:$0xff] %v1726
  %3697 = vst [vmem:[%s3 + $0x190] sm:$0xff] %v1728
  %3698 = vst [vmem:[%s3 + $0x198] sm:$0xff] %v2370
  %3699 = vst [vmem:[%s3 + $0x1a0] sm:$0xff] %v2372
  %3700 = vst [vmem:[%s3 + $0x1a8] sm:$0xff] %v3014
  %3701 = vst [vmem:[%s3 + $0x1b0] sm:$0xff] %v3016
  %3702 = vst.msk [vmem:[%s3 + $0x1b8] sm:$0xff] %vm3652, %v3603
  %3703 = vst [vmem:[%s3 + $0x1c0] sm:$0xff] %v1732
  %3704 = vst [vmem:[%s3 + $0x1c8] sm:$0xff] %v1734
  %3705 = vst [vmem:[%s3 + $0x1d0] sm:$0xff] %v2376
  %3706 = vst [vmem:[%s3 + $0x1d8] sm:$0xff] %v2378
  %3707 = vst [vmem:[%s3 + $0x1e0] sm:$0xff] %v3020
  %3708 = vst [vmem:[%s3 + $0x1e8] sm:$0xff] %v3022
  %3709 = vst.msk [vmem:[%s3 + $0x1f0] sm:$0xff] %vm3652, %v3608
  %3710 = vst [vmem:[%s3 + $0x1f8] sm:$0xff] %v1738
  %3711 = vst [vmem:[%s3 + $0x200] sm:$0xff] %v1740
  %3712 = vst [vmem:[%s3 + $0x208] sm:$0xff] %v2382
  %3713 = vst [vmem:[%s3 + $0x210] sm:$0xff] %v2384
  %3714 = vst [vmem:[%s3 + $0x218] sm:$0xff] %v3026
  %3715 = vst [vmem:[%s3 + $0x220] sm:$0xff] %v3028
  %3716 = vst.msk [vmem:[%s3 + $0x228] sm:$0xff] %vm3652, %v3613
  %3717 = vst [vmem:[%s3 + $0x230] sm:$0xff] %v1744
  %3718 = vst [vmem:[%s3 + $0x238] sm:$0xff] %v1746
  %3719 = vst [vmem:[%s3 + $0x240] sm:$0xff] %v2388
  %3720 = vst [vmem:[%s3 + $0x248] sm:$0xff] %v2390
  %3721 = vst [vmem:[%s3 + $0x250] sm:$0xff] %v3032
  %3722 = vst [vmem:[%s3 + $0x258] sm:$0xff] %v3034
  %3723 = vst.msk [vmem:[%s3 + $0x260] sm:$0xff] %vm3652, %v3618
  %3724 = vst [vmem:[%s3 + $0x268] sm:$0xff] %v1750
  %3725 = vst [vmem:[%s3 + $0x270] sm:$0xff] %v1752
  %3726 = vst [vmem:[%s3 + $0x278] sm:$0xff] %v2394
  %3727 = vst [vmem:[%s3 + $0x280] sm:$0xff] %v2396
  %3728 = vst [vmem:[%s3 + $0x288] sm:$0xff] %v3038
  %3729 = vst [vmem:[%s3 + $0x290] sm:$0xff] %v3040
  %3730 = vst.msk [vmem:[%s3 + $0x298] sm:$0xff] %vm3652, %v3623
  %3731 = vst [vmem:[%s3 + $0x2a0] sm:$0xff] %v1756
  %3732 = vst [vmem:[%s3 + $0x2a8] sm:$0xff] %v1758
  %3733 = vst [vmem:[%s3 + $0x2b0] sm:$0xff] %v2400
  %3734 = vst [vmem:[%s3 + $0x2b8] sm:$0xff] %v2402
  %3735 = vst [vmem:[%s3 + $0x2c0] sm:$0xff] %v3044
  %3736 = vst [vmem:[%s3 + $0x2c8] sm:$0xff] %v3046
  %3737 = vst.msk [vmem:[%s3 + $0x2d0] sm:$0xff] %vm3652, %v3628
  %3738 = vst [vmem:[%s3 + $0x2d8] sm:$0xff] %v1762
  %3739 = vst [vmem:[%s3 + $0x2e0] sm:$0xff] %v1764
  %3740 = vst [vmem:[%s3 + $0x2e8] sm:$0xff] %v2406
  %3741 = vst [vmem:[%s3 + $0x2f0] sm:$0xff] %v2408
  %3742 = vst [vmem:[%s3 + $0x2f8] sm:$0xff] %v3050
  %3743 = vst [vmem:[%s3 + $0x300] sm:$0xff] %v3052
  %3744 = vst.msk [vmem:[%s3 + $0x308] sm:$0xff] %vm3652, %v3633
  %3745 = vst [vmem:[%s3 + $0x310] sm:$0xff] %v1768
  %3746 = vst [vmem:[%s3 + $0x318] sm:$0xff] %v1770
  %3747 = vst [vmem:[%s3 + $0x320] sm:$0xff] %v2412
  %3748 = vst [vmem:[%s3 + $0x328] sm:$0xff] %v2414
  %3749 = vst [vmem:[%s3 + $0x330] sm:$0xff] %v3056
  %3750 = vst [vmem:[%s3 + $0x338] sm:$0xff] %v3058
  %3751 = vst.msk [vmem:[%s3 + $0x340] sm:$0xff] %vm3652, %v3638
  %3752 = vst [vmem:[%s3 + $0x348] sm:$0xff] %v1774
  %3753 = vst [vmem:[%s3 + $0x350] sm:$0xff] %v1776
  %3754 = vst [vmem:[%s3 + $0x358] sm:$0xff] %v2418
  %3755 = vst [vmem:[%s3 + $0x360] sm:$0xff] %v2420
  %3756 = vst [vmem:[%s3 + $0x368] sm:$0xff] %v3062
  %3757 = vst [vmem:[%s3 + $0x370] sm:$0xff] %v3064
  %3758 = vst.msk [vmem:[%s3 + $0x378] sm:$0xff] %vm3652, %v3643
  // Predicated region
  $region14: #{deeplab_forward.2} parent=0 // pred_check
    _
  $region15: #{deeplab_forward.2} parent=0 // pred_check_branch
    %3760 = sbr.rel (0) target = $region17
  $region16: #{deeplab_forward.2} parent=0 // pred_region
    _
  $region17: #{deeplab_forward.2} parent=0 // pred_fallthru
    _
  // Predicated region
  $region18: #{deeplab_forward.2} parent=0 // pred_check
    _
  $region19: #{deeplab_forward.2} parent=0 // pred_check_branch
    %3762 = sbr.rel (0) target = $region21
  $region20: #{deeplab_forward.2} parent=0 // pred_region
    _
  $region21: #{deeplab_forward.2} parent=0 // pred_fallthru
    _

// kernel: deeplab_forward.3
$region0: #{deeplab_forward.3}
  #allocation0 [shape = 'u32[]', space=smem, size = 0x4, offset = 0x4, fixed_abs, tag = 'smem constant byte address 0x4 - core index']
  #allocation1 [shape = 'u32[144,128]{1,0:T(1,128)}', space=vmem, size = 0x12000, scoped, tag = 'internal scratch']
  %s0 = inlined_call_operand.vmem [shape: f32[40,8], index: 0, kind: input, shape index: {}]
  %s1 = inlined_call_operand.vmem [shape: f32[1,8,784], index: 1, kind: input, shape index: {}]
  %s2 = inlined_call_operand.vmem [shape: f32[40,1], index: 2, kind: input, shape index: {}]
  %s3 = inlined_call_operand.vmem [shape: f32[1,40,784], index: 3, kind: output, shape index: {}]
  %s4 = sld [smem:[#allocation0]]
  $region22: #{deeplab_forward.3} parent=0
    _
  %s6 = ssub.s32 1, %s4
  %s7 = scalar_select 0, %s6, %s4
  // Predicated region
  $region2: #{deeplab_forward.3} parent=0 // pred_check
    _
  $region3: #{deeplab_forward.3} parent=0 // pred_check_branch
    %9 = sbr.rel (0) target = $region5
  $region4: #{deeplab_forward.3} parent=0 // pred_region
    _
  $region5: #{deeplab_forward.3} parent=0 // pred_fallthru
    _
  // Predicated region
  $region6: #{deeplab_forward.3} parent=0 // pred_check
    _
  $region7: #{deeplab_forward.3} parent=0 // pred_check_branch
    %11 = sbr.rel (0) target = $region9
  $region8: #{deeplab_forward.3} parent=0 // pred_region
    _
  $region9: #{deeplab_forward.3} parent=0 // pred_fallthru
    _
  // Predicated region
  $region10: #{deeplab_forward.3} parent=0 // pred_check
    _
  $region11: #{deeplab_forward.3} parent=0 // pred_check_branch
    %13 = sbr.rel (0) target = $region13
  $region12: #{deeplab_forward.3} parent=0 // pred_region
    _
  $region13: #{deeplab_forward.3} parent=0 // pred_fallthru
    _
  %v14 = vld [vmem:[%s0] sm:$0xff]
  %v15 = vld [vmem:[%s0 + $0x8] sm:$0xff]
  %v16 = vld [vmem:[%s0 + $0x10] sm:$0xff]
  %v17 = vld [vmem:[%s0 + $0x18] sm:$0xff]
  %v18 = vld [vmem:[%s0 + $0x20] sm:$0xff]
  %v19 = vld [vmem:[%s1] sm:$0xff]
  %v20 = vld [vmem:[%s1 + $0x8] sm:$0xff]
  %v21 = vld [vmem:[%s1 + $0x10] sm:$0xff]
  %v22 = vld [vmem:[%s1 + $0x18] sm:$0xff]
  %v23 = vld [vmem:[%s1 + $0x20] sm:$0xff]
  %v24 = vld [vmem:[%s1 + $0x28] sm:$0xff]
  %v25 = vld [vmem:[%s1 + $0x30] sm:$0xff]
  %v26 = vld [vmem:[%s2] sm:$0xff]
  %v27 = vld [vmem:[%s2 + $0x8] sm:$0xff]
  %v28 = vld [vmem:[%s2 + $0x10] sm:$0xff]
  %v29 = vld [vmem:[%s2 + $0x18] sm:$0xff]
  %v30 = vld [vmem:[%s2 + $0x20] sm:$0xff]
  %32 = vset.pattern.permute.xlu0 0
  %33 = vperm.xlu0 %32, %v26
  %v34 = vpop.permute.xlu0 %33
  %37 = vset.pattern.permute.xlu0 0
  %38 = vperm.xlu0 %37, %v27
  %v39 = vpop.permute.xlu0 %38
  %42 = vset.pattern.permute.xlu0 0
  %43 = vperm.xlu0 %42, %v28
  %v44 = vpop.permute.xlu0 %43
  %47 = vset.pattern.permute.xlu0 0
  %48 = vperm.xlu0 %47, %v29
  %v49 = vpop.permute.xlu0 %48
  %52 = vset.pattern.permute.xlu0 0
  %53 = vperm.xlu0 %52, %v30
  %v54 = vpop.permute.xlu0 %53
  %vm56 = vcmask 64512
  %v58 = vsel %vm56, %v14, 0
  %v61 = vsel %vm56, %v15, 0
  %v64 = vsel %vm56, %v16, 0
  %v67 = vsel %vm56, %v17, 0
  %v70 = vsel %vm56, %v18, 0
  %72 = vmatprep.subr.mxu0 %v20
  %73 = vmatpush1.msra.mxu0 %v19
  %74 = vmatprep.subr.mxu0 0.0
  %75 = vmatpush1.msra.mxu0 0.0
  %76 = vmatprep.subr.mxu0 0.0
  %77 = vmatpush1.msra.mxu0 0.0
  %78 = vmatprep.subr.mxu0 0.0
  %79 = vmatpush1.msra.mxu0 0.0
  %80 = vmatprep.subr.mxu0 0.0
  %81 = vmatpush1.msra.mxu0 0.0
  %82 = vmatprep.subr.mxu0 0.0
  %83 = vmatpush1.msra.mxu0 0.0
  %84 = vmatprep.subr.mxu0 0.0
  %85 = vmatpush1.msra.mxu0 0.0
  %86 = vmatprep.subr.mxu0 0.0
  %87 = vmatpush1.msra.mxu0 0.0
  %88 = vmatprep.subr.mxu0 0.0
  %89 = vmatpush1.msra.mxu0 0.0
  %90 = vmatprep.subr.mxu0 0.0
  %91 = vmatpush1.msra.mxu0 0.0
  %92 = vmatprep.subr.mxu0 0.0
  %93 = vmatpush1.msra.mxu0 0.0
  %94 = vmatprep.subr.mxu0 0.0
  %95 = vmatpush1.msra.mxu0 0.0
  %96 = vmatprep.subr.mxu0 0.0
  %97 = vmatpush1.msra.mxu0 0.0
  %98 = vmatprep.subr.mxu0 0.0
  %99 = vmatpush1.msra.mxu0 0.0
  %100 = vmatprep.subr.mxu0 0.0
  %101 = vmatpush1.msra.mxu0 0.0
  %102 = vmatprep.subr.mxu0 0.0
  %103 = vmatpush1.msra.mxu0 0.0
  %104 = vmatprep.subr.mxu0 0.0
  %105 = vmatpush1.msra.mxu0 0.0
  %106 = vmatprep.subr.mxu0 0.0
  %107 = vmatpush1.msra.mxu0 0.0
  %108 = vmatprep.subr.mxu0 0.0
  %109 = vmatpush1.msra.mxu0 0.0
  %110 = vmatprep.subr.mxu0 0.0
  %111 = vmatpush1.msra.mxu0 0.0
  %112 = vmatprep.subr.mxu0 0.0
  %113 = vmatpush1.msra.mxu0 0.0
  %114 = vmatprep.subr.mxu0 0.0
  %115 = vmatpush1.msra.mxu0 0.0
  %116 = vmatprep.subr.mxu0 0.0
  %117 = vmatpush1.msra.mxu0 0.0
  %118 = vmatprep.subr.mxu0 0.0
  %119 = vmatpush1.msra.mxu0 0.0
  %120 = vmatprep.subr.mxu0 0.0
  %121 = vmatpush1.msra.mxu0 0.0
  %122 = vmatprep.subr.mxu0 0.0
  %123 = vmatpush1.msra.mxu0 0.0
  %124 = vmatprep.subr.mxu0 0.0
  %125 = vmatpush1.msra.mxu0 0.0
  %126 = vmatprep.subr.mxu0 0.0
  %127 = vmatpush1.msra.mxu0 0.0
  %128 = vmatprep.subr.mxu0 0.0
  %129 = vmatpush1.msra.mxu0 0.0
  %130 = vmatprep.subr.mxu0 0.0
  %131 = vmatpush1.msra.mxu0 0.0
  %132 = vmatprep.subr.mxu0 0.0
  %133 = vmatpush1.msra.mxu0 0.0
  %134 = vmatprep.subr.mxu0 0.0
  %135 = vmatpush1.msra.mxu0 0.0
  %136 = vmatprep.mubr.f32.mxu0 0.0
  %137 = vmatmul.mubr.f32.gmra.mrb[0].mxu0 %v58
  %v138 = vpop.f32.mrb[0].mxu0
  %v139 = vadd.f32 %v34, %v138
  %v140 = vpop.f32.mrb[0].mxu0
  %v141 = vadd.f32 %v34, %v140
  %142 = vmatprep.mubr.f32.mxu0 0.0
  %143 = vmatmul.mubr.f32.gmra.mrb[0].mxu0 %v61
  %v144 = vpop.f32.mrb[0].mxu0
  %v145 = vadd.f32 %v39, %v144
  %v146 = vpop.f32.mrb[0].mxu0
  %v147 = vadd.f32 %v39, %v146
  %148 = vmatprep.mubr.f32.mxu0 0.0
  %149 = vmatmul.mubr.f32.gmra.mrb[0].mxu0 %v64
  %v150 = vpop.f32.mrb[0].mxu0
  %v151 = vadd.f32 %v44, %v150
  %v152 = vpop.f32.mrb[0].mxu0
  %v153 = vadd.f32 %v44, %v152
  %154 = vmatprep.mubr.f32.mxu0 0.0
  %155 = vmatmul.mubr.f32.gmra.mrb[0].mxu0 %v67
  %v156 = vpop.f32.mrb[0].mxu0
  %v157 = vadd.f32 %v49, %v156
  %v158 = vpop.f32.mrb[0].mxu0
  %v159 = vadd.f32 %v49, %v158
  %160 = vmatprep.mubr.f32.mxu0 0.0
  %161 = vmatmul.mubr.f32.gmra.mrb[0].mxu0 %v70
  %v162 = vpop.f32.mrb[0].mxu0
  %v163 = vadd.f32 %v54, %v162
  %v164 = vpop.f32.mrb[0].mxu0
  %v165 = vadd.f32 %v54, %v164
  %166 = vdwg.mxu0
  %167 = vmatprep.subr.mxu0 %v22
  %168 = vmatpush1.msra.mxu0 %v21
  %169 = vmatprep.subr.mxu0 0.0
  %170 = vmatpush1.msra.mxu0 0.0
  %171 = vmatprep.subr.mxu0 0.0
  %172 = vmatpush1.msra.mxu0 0.0
  %173 = vmatprep.subr.mxu0 0.0
  %174 = vmatpush1.msra.mxu0 0.0
  %175 = vmatprep.subr.mxu0 0.0
  %176 = vmatpush1.msra.mxu0 0.0
  %177 = vmatprep.subr.mxu0 0.0
  %178 = vmatpush1.msra.mxu0 0.0
  %179 = vmatprep.subr.mxu0 0.0
  %180 = vmatpush1.msra.mxu0 0.0
  %181 = vmatprep.subr.mxu0 0.0
  %182 = vmatpush1.msra.mxu0 0.0
  %183 = vmatprep.subr.mxu0 0.0
  %184 = vmatpush1.msra.mxu0 0.0
  %185 = vmatprep.subr.mxu0 0.0
  %186 = vmatpush1.msra.mxu0 0.0
  %187 = vmatprep.subr.mxu0 0.0
  %188 = vmatpush1.msra.mxu0 0.0
  %189 = vmatprep.subr.mxu0 0.0
  %190 = vmatpush1.msra.mxu0 0.0
  %191 = vmatprep.subr.mxu0 0.0
  %192 = vmatpush1.msra.mxu0 0.0
  %193 = vmatprep.subr.mxu0 0.0
  %194 = vmatpush1.msra.mxu0 0.0
  %195 = vmatprep.subr.mxu0 0.0
  %196 = vmatpush1.msra.mxu0 0.0
  %197 = vmatprep.subr.mxu0 0.0
  %198 = vmatpush1.msra.mxu0 0.0
  %199 = vmatprep.subr.mxu0 0.0
  %200 = vmatpush1.msra.mxu0 0.0
  %201 = vmatprep.subr.mxu0 0.0
  %202 = vmatpush1.msra.mxu0 0.0
  %203 = vmatprep.subr.mxu0 0.0
  %204 = vmatpush1.msra.mxu0 0.0
  %205 = vmatprep.subr.mxu0 0.0
  %206 = vmatpush1.msra.mxu0 0.0
  %207 = vmatprep.subr.mxu0 0.0
  %208 = vmatpush1.msra.mxu0 0.0
  %209 = vmatprep.subr.mxu0 0.0
  %210 = vmatpush1.msra.mxu0 0.0
  %211 = vmatprep.subr.mxu0 0.0
  %212 = vmatpush1.msra.mxu0 0.0
  %213 = vmatprep.subr.mxu0 0.0
  %214 = vmatpush1.msra.mxu0 0.0
  %215 = vmatprep.subr.mxu0 0.0
  %216 = vmatpush1.msra.mxu0 0.0
  %217 = vmatprep.subr.mxu0 0.0
  %218 = vmatpush1.msra.mxu0 0.0
  %219 = vmatprep.subr.mxu0 0.0
  %220 = vmatpush1.msra.mxu0 0.0
  %221 = vmatprep.subr.mxu0 0.0
  %222 = vmatpush1.msra.mxu0 0.0
  %223 = vmatprep.subr.mxu0 0.0
  %224 = vmatpush1.msra.mxu0 0.0
  %225 = vmatprep.subr.mxu0 0.0
  %226 = vmatpush1.msra.mxu0 0.0
  %227 = vmatprep.subr.mxu0 0.0
  %228 = vmatpush1.msra.mxu0 0.0
  %229 = vmatprep.subr.mxu0 0.0
  %230 = vmatpush1.msra.mxu0 0.0
  %231 = vmatprep.mubr.f32.mxu0 0.0
  %232 = vmatmul.mubr.f32.gmra.mrb[0].mxu0 %v58
  %v233 = vpop.f32.mrb[0].mxu0
  %v234 = vadd.f32 %v34, %v233
  %v235 = vpop.f32.mrb[0].mxu0
  %v236 = vadd.f32 %v34, %v235
  %237 = vmatprep.mubr.f32.mxu0 0.0
  %238 = vmatmul.mubr.f32.gmra.mrb[0].mxu0 %v61
  %v239 = vpop.f32.mrb[0].mxu0
  %v240 = vadd.f32 %v39, %v239
  %v241 = vpop.f32.mrb[0].mxu0
  %v242 = vadd.f32 %v39, %v241
  %243 = vmatprep.mubr.f32.mxu0 0.0
  %244 = vmatmul.mubr.f32.gmra.mrb[0].mxu0 %v64
  %v245 = vpop.f32.mrb[0].mxu0
  %v246 = vadd.f32 %v44, %v245
  %v247 = vpop.f32.mrb[0].mxu0
  %v248 = vadd.f32 %v44, %v247
  %249 = vmatprep.mubr.f32.mxu0 0.0
  %250 = vmatmul.mubr.f32.gmra.mrb[0].mxu0 %v67
  %v251 = vpop.f32.mrb[0].mxu0
  %v252 = vadd.f32 %v49, %v251
  %v253 = vpop.f32.mrb[0].mxu0
  %v254 = vadd.f32 %v49, %v253
  %255 = vmatprep.mubr.f32.mxu0 0.0
  %256 = vmatmul.mubr.f32.gmra.mrb[0].mxu0 %v70
  %v257 = vpop.f32.mrb[0].mxu0
  %v258 = vadd.f32 %v54, %v257
  %v259 = vpop.f32.mrb[0].mxu0
  %v260 = vadd.f32 %v54, %v259
  %261 = vdwg.mxu0
  %262 = vmatprep.subr.mxu0 %v24
  %263 = vmatpush1.msra.mxu0 %v23
  %264 = vmatprep.subr.mxu0 0.0
  %265 = vmatpush1.msra.mxu0 0.0
  %266 = vmatprep.subr.mxu0 0.0
  %267 = vmatpush1.msra.mxu0 0.0
  %268 = vmatprep.subr.mxu0 0.0
  %269 = vmatpush1.msra.mxu0 0.0
  %270 = vmatprep.subr.mxu0 0.0
  %271 = vmatpush1.msra.mxu0 0.0
  %272 = vmatprep.subr.mxu0 0.0
  %273 = vmatpush1.msra.mxu0 0.0
  %274 = vmatprep.subr.mxu0 0.0
  %275 = vmatpush1.msra.mxu0 0.0
  %276 = vmatprep.subr.mxu0 0.0
  %277 = vmatpush1.msra.mxu0 0.0
  %278 = vmatprep.subr.mxu0 0.0
  %279 = vmatpush1.msra.mxu0 0.0
  %280 = vmatprep.subr.mxu0 0.0
  %281 = vmatpush1.msra.mxu0 0.0
  %282 = vmatprep.subr.mxu0 0.0
  %283 = vmatpush1.msra.mxu0 0.0
  %284 = vmatprep.subr.mxu0 0.0
  %285 = vmatpush1.msra.mxu0 0.0
  %286 = vmatprep.subr.mxu0 0.0
  %287 = vmatpush1.msra.mxu0 0.0
  %288 = vmatprep.subr.mxu0 0.0
  %289 = vmatpush1.msra.mxu0 0.0
  %290 = vmatprep.subr.mxu0 0.0
  %291 = vmatpush1.msra.mxu0 0.0
  %292 = vmatprep.subr.mxu0 0.0
  %293 = vmatpush1.msra.mxu0 0.0
  %294 = vmatprep.subr.mxu0 0.0
  %295 = vmatpush1.msra.mxu0 0.0
  %296 = vmatprep.subr.mxu0 0.0
  %297 = vmatpush1.msra.mxu0 0.0
  %298 = vmatprep.subr.mxu0 0.0
  %299 = vmatpush1.msra.mxu0 0.0
  %300 = vmatprep.subr.mxu0 0.0
  %301 = vmatpush1.msra.mxu0 0.0
  %302 = vmatprep.subr.mxu0 0.0
  %303 = vmatpush1.msra.mxu0 0.0
  %304 = vmatprep.subr.mxu0 0.0
  %305 = vmatpush1.msra.mxu0 0.0
  %306 = vmatprep.subr.mxu0 0.0
  %307 = vmatpush1.msra.mxu0 0.0
  %308 = vmatprep.subr.mxu0 0.0
  %309 = vmatpush1.msra.mxu0 0.0
  %310 = vmatprep.subr.mxu0 0.0
  %311 = vmatpush1.msra.mxu0 0.0
  %312 = vmatprep.subr.mxu0 0.0
  %313 = vmatpush1.msra.mxu0 0.0
  %314 = vmatprep.subr.mxu0 0.0
  %315 = vmatpush1.msra.mxu0 0.0
  %316 = vmatprep.subr.mxu0 0.0
  %317 = vmatpush1.msra.mxu0 0.0
  %318 = vmatprep.subr.mxu0 0.0
  %319 = vmatpush1.msra.mxu0 0.0
  %320 = vmatprep.subr.mxu0 0.0
  %321 = vmatpush1.msra.mxu0 0.0
  %322 = vmatprep.subr.mxu0 0.0
  %323 = vmatpush1.msra.mxu0 0.0
  %324 = vmatprep.subr.mxu0 0.0
  %325 = vmatpush1.msra.mxu0 0.0
  %326 = vmatprep.mubr.f32.mxu0 0.0
  %327 = vmatmul.mubr.f32.gmra.mrb[0].mxu0 %v58
  %v328 = vpop.f32.mrb[0].mxu0
  %v329 = vadd.f32 %v34, %v328
  %v330 = vpop.f32.mrb[0].mxu0
  %v331 = vadd.f32 %v34, %v330
  %332 = vmatprep.mubr.f32.mxu0 0.0
  %333 = vmatmul.mubr.f32.gmra.mrb[0].mxu0 %v61
  %v334 = vpop.f32.mrb[0].mxu0
  %v335 = vadd.f32 %v39, %v334
  %v336 = vpop.f32.mrb[0].mxu0
  %v337 = vadd.f32 %v39, %v336
  %338 = vmatprep.mubr.f32.mxu0 0.0
  %339 = vmatmul.mubr.f32.gmra.mrb[0].mxu0 %v64
  %v340 = vpop.f32.mrb[0].mxu0
  %v341 = vadd.f32 %v44, %v340
  %v342 = vpop.f32.mrb[0].mxu0
  %v343 = vadd.f32 %v44, %v342
  %344 = vmatprep.mubr.f32.mxu0 0.0
  %345 = vmatmul.mubr.f32.gmra.mrb[0].mxu0 %v67
  %v346 = vpop.f32.mrb[0].mxu0
  %v347 = vadd.f32 %v49, %v346
  %v348 = vpop.f32.mrb[0].mxu0
  %v349 = vadd.f32 %v49, %v348
  %350 = vmatprep.mubr.f32.mxu0 0.0
  %351 = vmatmul.mubr.f32.gmra.mrb[0].mxu0 %v70
  %v352 = vpop.f32.mrb[0].mxu0
  %v353 = vadd.f32 %v54, %v352
  %v354 = vpop.f32.mrb[0].mxu0
  %v355 = vadd.f32 %v54, %v354
  %356 = vdwg.mxu0
  %357 = vmatprep.subr.mxu0 0.0
  %358 = vmatpush1.msra.mxu0 %v25
  %359 = vmatprep.subr.mxu0 0.0
  %360 = vmatpush1.msra.mxu0 0.0
  %361 = vmatprep.subr.mxu0 0.0
  %362 = vmatpush1.msra.mxu0 0.0
  %363 = vmatprep.subr.mxu0 0.0
  %364 = vmatpush1.msra.mxu0 0.0
  %365 = vmatprep.subr.mxu0 0.0
  %366 = vmatpush1.msra.mxu0 0.0
  %367 = vmatprep.subr.mxu0 0.0
  %368 = vmatpush1.msra.mxu0 0.0
  %369 = vmatprep.subr.mxu0 0.0
  %370 = vmatpush1.msra.mxu0 0.0
  %371 = vmatprep.subr.mxu0 0.0
  %372 = vmatpush1.msra.mxu0 0.0
  %373 = vmatprep.subr.mxu0 0.0
  %374 = vmatpush1.msra.mxu0 0.0
  %375 = vmatprep.subr.mxu0 0.0
  %376 = vmatpush1.msra.mxu0 0.0
  %377 = vmatprep.subr.mxu0 0.0
  %378 = vmatpush1.msra.mxu0 0.0
  %379 = vmatprep.subr.mxu0 0.0
  %380 = vmatpush1.msra.mxu0 0.0
  %381 = vmatprep.subr.mxu0 0.0
  %382 = vmatpush1.msra.mxu0 0.0
  %383 = vmatprep.subr.mxu0 0.0
  %384 = vmatpush1.msra.mxu0 0.0
  %385 = vmatprep.subr.mxu0 0.0
  %386 = vmatpush1.msra.mxu0 0.0
  %387 = vmatprep.subr.mxu0 0.0
  %388 = vmatpush1.msra.mxu0 0.0
  %389 = vmatprep.subr.mxu0 0.0
  %390 = vmatpush1.msra.mxu0 0.0
  %391 = vmatprep.subr.mxu0 0.0
  %392 = vmatpush1.msra.mxu0 0.0
  %393 = vmatprep.subr.mxu0 0.0
  %394 = vmatpush1.msra.mxu0 0.0
  %395 = vmatprep.subr.mxu0 0.0
  %396 = vmatpush1.msra.mxu0 0.0
  %397 = vmatprep.subr.mxu0 0.0
  %398 = vmatpush1.msra.mxu0 0.0
  %399 = vmatprep.subr.mxu0 0.0
  %400 = vmatpush1.msra.mxu0 0.0
  %401 = vmatprep.subr.mxu0 0.0
  %402 = vmatpush1.msra.mxu0 0.0
  %403 = vmatprep.subr.mxu0 0.0
  %404 = vmatpush1.msra.mxu0 0.0
  %405 = vmatprep.subr.mxu0 0.0
  %406 = vmatpush1.msra.mxu0 0.0
  %407 = vmatprep.subr.mxu0 0.0
  %408 = vmatpush1.msra.mxu0 0.0
  %409 = vmatprep.subr.mxu0 0.0
  %410 = vmatpush1.msra.mxu0 0.0
  %411 = vmatprep.subr.mxu0 0.0
  %412 = vmatpush1.msra.mxu0 0.0
  %413 = vmatprep.subr.mxu0 0.0
  %414 = vmatpush1.msra.mxu0 0.0
  %415 = vmatprep.subr.mxu0 0.0
  %416 = vmatpush1.msra.mxu0 0.0
  %417 = vmatprep.subr.mxu0 0.0
  %418 = vmatpush1.msra.mxu0 0.0
  %419 = vmatprep.subr.mxu0 0.0
  %420 = vmatpush1.msra.mxu0 0.0
  %421 = vmatprep.mubr.f32.mxu0 0.0
  %422 = vmatmul.mubr.f32.gmra.mrb[0].mxu0 %v58
  %v423 = vpop.f32.mrb[0].mxu0
  %v424 = vadd.f32 %v34, %v423
  %v425 = vpop.f32.mrb[0].mxu0
  %426 = vmatprep.mubr.f32.mxu0 0.0
  %427 = vmatmul.mubr.f32.gmra.mrb[0].mxu0 %v61
  %v428 = vpop.f32.mrb[0].mxu0
  %v429 = vadd.f32 %v39, %v428
  %v430 = vpop.f32.mrb[0].mxu0
  %431 = vmatprep.mubr.f32.mxu0 0.0
  %432 = vmatmul.mubr.f32.gmra.mrb[0].mxu0 %v64
  %v433 = vpop.f32.mrb[0].mxu0
  %v434 = vadd.f32 %v44, %v433
  %v435 = vpop.f32.mrb[0].mxu0
  %436 = vmatprep.mubr.f32.mxu0 0.0
  %437 = vmatmul.mubr.f32.gmra.mrb[0].mxu0 %v67
  %v438 = vpop.f32.mrb[0].mxu0
  %v439 = vadd.f32 %v49, %v438
  %v440 = vpop.f32.mrb[0].mxu0
  %441 = vmatprep.mubr.f32.mxu0 0.0
  %442 = vmatmul.mubr.f32.gmra.mrb[0].mxu0 %v70
  %v443 = vpop.f32.mrb[0].mxu0
  %v444 = vadd.f32 %v54, %v443
  %v445 = vpop.f32.mrb[0].mxu0
  %446 = vdwg.mxu0
  %447 = vst [vmem:[%s3] sm:$0xff] %v139
  %448 = vst [vmem:[%s3 + $0x8] sm:$0xff] %v141
  %449 = vst [vmem:[%s3 + $0x10] sm:$0xff] %v234
  %450 = vst [vmem:[%s3 + $0x18] sm:$0xff] %v236
  %451 = vst [vmem:[%s3 + $0x20] sm:$0xff] %v329
  %452 = vst [vmem:[%s3 + $0x28] sm:$0xff] %v331
  %vm453 = vcmask 130048
  %454 = vst.msk [vmem:[%s3 + $0x30] sm:$0xff] %vm453, %v424
  %455 = vst [vmem:[%s3 + $0x38] sm:$0xff] %v145
  %456 = vst [vmem:[%s3 + $0x40] sm:$0xff] %v147
  %457 = vst [vmem:[%s3 + $0x48] sm:$0xff] %v240
  %458 = vst [vmem:[%s3 + $0x50] sm:$0xff] %v242
  %459 = vst [vmem:[%s3 + $0x58] sm:$0xff] %v335
  %460 = vst [vmem:[%s3 + $0x60] sm:$0xff] %v337
  %461 = vst.msk [vmem:[%s3 + $0x68] sm:$0xff] %vm453, %v429
  %462 = vst [vmem:[%s3 + $0x70] sm:$0xff] %v151
  %463 = vst [vmem:[%s3 + $0x78] sm:$0xff] %v153
  %464 = vst [vmem:[%s3 + $0x80] sm:$0xff] %v246
  %465 = vst [vmem:[%s3 + $0x88] sm:$0xff] %v248
  %466 = vst [vmem:[%s3 + $0x90] sm:$0xff] %v341
  %467 = vst [vmem:[%s3 + $0x98] sm:$0xff] %v343
  %468 = vst.msk [vmem:[%s3 + $0xa0] sm:$0xff] %vm453, %v434
  %469 = vst [vmem:[%s3 + $0xa8] sm:$0xff] %v157
  %470 = vst [vmem:[%s3 + $0xb0] sm:$0xff] %v159
  %471 = vst [vmem:[%s3 + $0xb8] sm:$0xff] %v252
  %472 = vst [vmem:[%s3 + $0xc0] sm:$0xff] %v254
  %473 = vst [vmem:[%s3 + $0xc8] sm:$0xff] %v347
  %474 = vst [vmem:[%s3 + $0xd0] sm:$0xff] %v349
  %475 = vst.msk [vmem:[%s3 + $0xd8] sm:$0xff] %vm453, %v439
  %476 = vst [vmem:[%s3 + $0xe0] sm:$0xff] %v163
  %477 = vst [vmem:[%s3 + $0xe8] sm:$0xff] %v165
  %478 = vst [vmem:[%s3 + $0xf0] sm:$0xff] %v258
  %479 = vst [vmem:[%s3 + $0xf8] sm:$0xff] %v260
  %480 = vst [vmem:[%s3 + $0x100] sm:$0xff] %v353
  %481 = vst [vmem:[%s3 + $0x108] sm:$0xff] %v355
  %482 = vst.msk [vmem:[%s3 + $0x110] sm:$0xff] %vm453, %v444
  // Predicated region
  $region14: #{deeplab_forward.3} parent=0 // pred_check
    _
  $region15: #{deeplab_forward.3} parent=0 // pred_check_branch
    %484 = sbr.rel (0) target = $region17
  $region16: #{deeplab_forward.3} parent=0 // pred_region
    _
  $region17: #{deeplab_forward.3} parent=0 // pred_fallthru
    _
  // Predicated region
  $region18: #{deeplab_forward.3} parent=0 // pred_check
    _
  $region19: #{deeplab_forward.3} parent=0 // pred_check_branch
    %486 = sbr.rel (0) target = $region21
  $region20: #{deeplab_forward.3} parent=0 // pred_region
    _
  $region21: #{deeplab_forward.3} parent=0 // pred_fallthru
    _

</llo_original>
